<compile_context>
chip_gen: v6e
topology: v6e:2x2x1
jax: 0.10.0
libtpu: 0.0.40
codegen_flags: <defaults>
</compile_context>

<pallas_src>
import functools

import jax
import jax.numpy as jnp
from jax.experimental import pallas as pl
from jax.experimental.pallas import tpu as pltpu

KH = KW = 4
BN_EPS = 1e-5
LRELU_SLOPE = 0.2
LANES = 128        # pad K and OC to multiples of this (lane-dense, unmasked)
MAX_TILE_M = 1024  # layer-1 rows per grid step (>=2 tiles -> megacore can split)


def _round_up(x, m):
    return (x + m - 1) // m * m


# ---------------------------------------------------------------------------
# Pallas kernels
# ---------------------------------------------------------------------------
def _gemm_lrelu_kernel(p_ref, w_ref, o_ref):
    """One M-tile of P @ W followed by LeakyReLU(0.2); bf16 store."""
    y = jnp.dot(p_ref[...], w_ref[...], preferred_element_type=jnp.float32)
    o_ref[...] = jnp.maximum(y, LRELU_SLOPE * y).astype(o_ref.dtype)


def _gemm_bn_lrelu_kernel(p_ref, w_ref, g_ref, b_ref, o_ref, *, inv_m):
    """Whole-layer GEMM + training-mode BatchNorm + LeakyReLU in one pass.

    The full M = N*OH*OW row range is resident (single grid step), so the
    per-channel batch statistics are exact and never leave VMEM / vregs.
    Padded rows of P are all-zero so the sums are unaffected; `inv_m` uses
    the real (unpadded) row count.
    """
    y = jnp.dot(p_ref[...], w_ref[...], preferred_element_type=jnp.float32)
    mean = jnp.sum(y, axis=0, keepdims=True) * inv_m                    # [1, OCp]
    var = jnp.maximum(jnp.sum(y * y, axis=0, keepdims=True) * inv_m
                      - mean * mean, 0.0)                               # biased var
    scale = g_ref[...] * jax.lax.rsqrt(var + BN_EPS)
    shift = b_ref[...] - mean * scale
    z = y * scale + shift
    o_ref[...] = jnp.maximum(z, LRELU_SLOPE * z).astype(o_ref.dtype)


def _gemm_sigmoid_kernel(p_ref, w_ref, o_ref):
    """Final conv (1x1 output map) as GEMM + sigmoid; tiny, f32 output."""
    y = jnp.dot(p_ref[...], w_ref[...], preferred_element_type=jnp.float32)
    o_ref[...] = 1.0 / (1.0 + jnp.exp(-y))


# ---------------------------------------------------------------------------
# Glue: channel-last im2col + per-layer wrapper
# ---------------------------------------------------------------------------
def _im2col_nhwc(x, stride, pad):
    """x: [N, H, W, C] (bf16) -> patches [N*OH*OW, KH*KW*C] ((kh, kw, c) order)."""
    n, h, w, c = x.shape
    if pad:
        x = jnp.pad(x, ((0, 0), (pad, pad), (pad, pad), (0, 0)))
    oh = (h + 2 * pad - KH) // stride + 1
    ow = (w + 2 * pad - KW) // stride + 1
    cols = []
    for kh in range(KH):
        for kw in range(KW):
            cols.append(
                x[:, kh:kh + stride * oh:stride, kw:kw + stride * ow:stride, :])
    p = jnp.stack(cols, axis=3)              # [N, OH, OW, KH*KW, C]
    return p.reshape(n * oh * ow, KH * KW * c), oh, ow


def conv_layer(x, w, gamma=None, beta=None, *, stride, pad, mode):
    """Conv2d(bias=False) + fused epilogue. x: [N,H,W,C] bf16 NHWC, w: [OC,C,4,4]."""
    n = x.shape[0]
    oc = w.shape[0]
    patches, oh, ow = _im2col_nhwc(x, stride, pad)
    m, k = patches.shape

    kp = _round_up(k, LANES)                 # MXU-aligned contraction dim
    ocp = _round_up(oc, LANES)               # lane-dense output stores

    # bf16 GEMM inputs (f32 accumulation in-kernel); zero pads are exact no-ops.
    wt = w.transpose(2, 3, 1, 0).reshape(k, oc).astype(jnp.bfloat16)
    wt = jnp.pad(wt, ((0, kp - k), (0, ocp - oc)))

    if mode == "lrelu":
        # No BN -> tile over M; >=2 "parallel" tiles lets a dual-TC part split it.
        tile_m = min(MAX_TILE_M, _round_up(m, 16))
        m_pad = _round_up(m, tile_m)
        p = jnp.pad(patches, ((0, m_pad - m), (0, kp - k)))
        out = pl.pallas_call(
            _gemm_lrelu_kernel,
            grid=(m_pad // tile_m,),
            in_specs=[pl.BlockSpec((tile_m, kp), lambda i: (i, 0)),
                      pl.BlockSpec((kp, ocp), lambda i: (0, 0))],
            out_specs=pl.BlockSpec((tile_m, ocp), lambda i: (i, 0)),
            out_shape=jax.ShapeDtypeStruct((m_pad, ocp), jnp.bfloat16),
            compiler_params=pltpu.CompilerParams(
                dimension_semantics=("parallel",)),
        )(p, wt)

    elif mode == "bn_lrelu":
        # Single-pass exact BN needs the full M resident (M <= 512 here).
        m_pad = _round_up(m, 16)
        p = jnp.pad(patches, ((0, m_pad - m), (0, kp - k)))
        g = jnp.pad(gamma, (0, ocp - oc), constant_values=1.0).reshape(1, ocp)
        b = jnp.pad(beta, (0, ocp - oc)).reshape(1, ocp)
        out = pl.pallas_call(
            functools.partial(_gemm_bn_lrelu_kernel, inv_m=1.0 / m),
            grid=(1,),
            in_specs=[pl.BlockSpec((m_pad, kp), lambda i: (0, 0)),
                      pl.BlockSpec((kp, ocp), lambda i: (0, 0)),
                      pl.BlockSpec((1, ocp), lambda i: (0, 0)),
                      pl.BlockSpec((1, ocp), lambda i: (0, 0))],
            out_specs=pl.BlockSpec((m_pad, ocp), lambda i: (0, 0)),
            out_shape=jax.ShapeDtypeStruct((m_pad, ocp), jnp.bfloat16),
            compiler_params=pltpu.CompilerParams(
                dimension_semantics=("arbitrary",)),
        )(p, wt, g, b)

    elif mode == "sigmoid":
        m_pad = _round_up(m, 16)
        p = jnp.pad(patches, ((0, m_pad - m), (0, kp - k)))
        out = pl.pallas_call(
            _gemm_sigmoid_kernel,
            grid=(1,),
            in_specs=[pl.BlockSpec((m_pad, kp), lambda i: (0, 0)),
                      pl.BlockSpec((kp, ocp), lambda i: (0, 0))],
            out_specs=pl.BlockSpec((m_pad, ocp), lambda i: (0, 0)),
            out_shape=jax.ShapeDtypeStruct((m_pad, ocp), jnp.float32),
            compiler_params=pltpu.CompilerParams(
                dimension_semantics=("arbitrary",)),
        )(p, wt)
    else:
        raise ValueError(mode)

    return out[:m, :oc].reshape(n, oh, ow, oc)


# ---------------------------------------------------------------------------
# Parameters + full forward pass
# ---------------------------------------------------------------------------
def init_params(key, input_channel, ndf):
    shapes = [
        (ndf, input_channel, KH, KW),
        (ndf * 2, ndf, KH, KW),
        (ndf * 4, ndf * 2, KH, KW),
        (ndf * 8, ndf * 4, KH, KW),
        (1, ndf * 8, KH, KW),
    ]
    keys = jax.random.split(key, len(shapes))
    weights = [0.02 * jax.random.normal(kk, s, dtype=jnp.float32)
               for kk, s in zip(keys, shapes)]
    # BatchNorm affine params (PyTorch defaults: weight=1, bias=0), layers 2-4.
    gammas = [jnp.ones((s[0],), jnp.float32) for s in shapes[1:4]]
    betas = [jnp.zeros((s[0],), jnp.float32) for s in shapes[1:4]]
    return weights, gammas, betas


def discriminator_forward(x_nchw, weights, gammas, betas):
    # NCHW -> NHWC once; bf16 inter-layer activations (f32 accumulation in-kernel).
    x = jnp.transpose(x_nchw, (0, 2, 3, 1)).astype(jnp.bfloat16)
    h = conv_layer(x, weights[0], stride=2, pad=1, mode="lrelu")
    h = conv_layer(h, weights[1], gammas[0], betas[0], stride=2, pad=1, mode="bn_lrelu")
    h = conv_layer(h, weights[2], gammas[1], betas[1], stride=2, pad=1, mode="bn_lrelu")
    h = conv_layer(h, weights[3], gammas[2], betas[2], stride=2, pad=1, mode="bn_lrelu")
    h = conv_layer(h, weights[4], stride=1, pad=0, mode="sigmoid")
    return jnp.transpose(h, (0, 3, 1, 2))     # [N, 1, 1, 1] f32


# ---------------------------------------------------------------------------
# Pure-XLA reference with matching numerics (bf16 conv inputs, f32 accumulation)
# ---------------------------------------------------------------------------
def _reference_forward(x_nchw, weights, gammas, betas):
    dn = ("NHWC", "OIHW", "NHWC")
    x = jnp.transpose(x_nchw, (0, 2, 3, 1)).astype(jnp.bfloat16)

    def conv(h, w, stride, pad):
        return jax.lax.conv_general_dilated(
            h, w.astype(jnp.bfloat16), (stride, stride),
            [(pad, pad), (pad, pad)], dimension_numbers=dn,
            preferred_element_type=jnp.float32)

    def bn_lrelu(y, g, b):
        mean = jnp.mean(y, axis=(0, 1, 2))
        var = jnp.var(y, axis=(0, 1, 2))                 # biased, training-mode
        z = (y - mean) * jax.lax.rsqrt(var + BN_EPS) * g + b
        return jnp.maximum(z, LRELU_SLOPE * z).astype(jnp.bfloat16)

    h = conv(x, weights[0], 2, 1)
    h = jnp.maximum(h, LRELU_SLOPE * h).astype(jnp.bfloat16)
    h = bn_lrelu(conv(h, weights[1], 2, 1), gammas[0], betas[0])
    h = bn_lrelu(conv(h, weights[2], 2, 1), gammas[1], betas[1])
    h = bn_lrelu(conv(h, weights[3], 2, 1), gammas[2], betas[2])
    y = jax.nn.sigmoid(conv(h, weights[4], 1, 0))
    return jnp.transpose(y, (0, 3, 1, 2))


if __name__ == "__main__":
    input_channel = 3
    ndf = 8
    # Spatial size must be 64 so the final 4x4/stride-1/no-pad conv sees a 4x4 map.
    batch, H = 2, 64

    key = jax.random.PRNGKey(0)
    kx, kparam = jax.random.split(key)
    x = jax.random.normal(kx, (batch, input_channel, H, H), dtype=jnp.float32)
    weights, gammas, betas = init_params(kparam, input_channel, ndf)

    fwd = jax.jit(discriminator_forward)
    out = jax.block_until_ready(fwd(x, weights, gammas, betas))

    assert out.shape == (batch, 1, 1, 1), out.shape
    assert bool(jnp.all(jnp.isfinite(out)))
    assert bool(jnp.all((out >= 0.0) & (out <= 1.0)))   # sigmoid range sanity check

    ref = jax.block_until_ready(jax.jit(_reference_forward)(x, weights, gammas, betas))
    max_err = float(jnp.max(jnp.abs(out.astype(jnp.float32) - ref.astype(jnp.float32))))
    assert max_err < 3e-2, f"max abs error vs reference: {max_err}"

    print("KERNEL_OK")
</pallas_src>

<mosaic_0001>
module attributes {stable_mosaic.version = 11 : i64} {
  func.func @_gemm_lrelu_kernel(%arg0: i32, %arg1: memref<1024x128xbf16, #tpu.memory_space<vmem>>, %arg2: memref<128x128xbf16, #tpu.memory_space<vmem>>, %arg3: memref<1024x128xbf16, #tpu.memory_space<vmem>>) attributes {dimension_semantics = [#tpu.dimension_semantics<parallel>], iteration_bounds = array<i64: 2>, scalar_prefetch = 0 : i64, scratch_operands = 0 : i64, tpu.core_type = #tpu.core_type<tc>, window_params = [{transform_indices = @transform_0, window_bounds = array<i64: 1024, 128>}, {pipeline_mode = #tpu.pipeline_mode<synchronous>, transform_indices = @transform_1, window_bounds = array<i64: 128, 128>}, {transform_indices = @transform_2, window_bounds = array<i64: 1024, 128>}]} {
    %c0 = arith.constant 0 : index
    %c0_0 = arith.constant 0 : index
    %0 = vector.load %arg1[%c0, %c0_0] : memref<1024x128xbf16, #tpu.memory_space<vmem>>, vector<1024x128xbf16>
    %c0_1 = arith.constant 0 : index
    %c0_2 = arith.constant 0 : index
    %1 = vector.load %arg2[%c0_1, %c0_2] : memref<128x128xbf16, #tpu.memory_space<vmem>>, vector<128x128xbf16>
    %cst = arith.constant dense<0.000000e+00> : vector<1024x128xf32>
    %2 = tpu.matmul %0, %1, %cst {dimension_numbers = #tpu.dot_dimension_numbers<[1], [0], [0], [1], [0, 0, 1, 1], [], []>} : vector<1024x128xbf16>, vector<128x128xbf16>, vector<1024x128xf32> -> vector<1024x128xf32>
    %cst_3 = arith.constant 2.000000e-01 : f32
    %3 = vector.broadcast %cst_3 : f32 to vector<1024x128xf32>
    %4 = arith.mulf %3, %2 : vector<1024x128xf32>
    %5 = arith.maximumf %2, %4 : vector<1024x128xf32>
    %6 = arith.truncf %5 : vector<1024x128xf32> to vector<1024x128xbf16>
    %c0_4 = arith.constant 0 : index
    %c0_5 = arith.constant 0 : index
    %7 = vector.load %arg3[%c0_4, %c0_5] : memref<1024x128xbf16, #tpu.memory_space<vmem>>, vector<1024x128xbf16>
    tpu.vector_store %arg3[%c0_4, %c0_5], %6 {strides = array<i32>} : memref<1024x128xbf16, #tpu.memory_space<vmem>>, vector<1024x128xbf16>,
    return
  }
  func.func @transform_0(%arg0: i32) -> (i32, i32) {
    %c0_i32 = arith.constant 0 : i32
    %c0_i32_0 = arith.constant 0 : i32
    return %arg0, %c0_i32 : i32, i32
  }
  func.func @transform_1(%arg0: i32) -> (i32, i32) {
    %c0_i32 = arith.constant 0 : i32
    %c0_i32_0 = arith.constant 0 : i32
    %c0_i32_1 = arith.constant 0 : i32
    return %c0_i32, %c0_i32_0 : i32, i32
  }
  func.func @transform_2(%arg0: i32) -> (i32, i32) {
    %c0_i32 = arith.constant 0 : i32
    %c0_i32_0 = arith.constant 0 : i32
    return %arg0, %c0_i32 : i32, i32
  }
}

module attributes {stable_mosaic.version = 11 : i64} {
  func.func @_gemm_bn_lrelu_kernel(%arg0: i32, %arg1: memref<512x128xbf16, #tpu.memory_space<vmem>>, %arg2: memref<128x128xbf16, #tpu.memory_space<vmem>>, %arg3: memref<1x128xf32, #tpu.memory_space<vmem>>, %arg4: memref<1x128xf32, #tpu.memory_space<vmem>>, %arg5: memref<512x128xbf16, #tpu.memory_space<vmem>>) attributes {dimension_semantics = [#tpu.dimension_semantics<arbitrary>], iteration_bounds = array<i64: 1>, scalar_prefetch = 0 : i64, scratch_operands = 0 : i64, tpu.core_type = #tpu.core_type<tc>, window_params = [{pipeline_mode = #tpu.pipeline_mode<synchronous>, transform_indices = @transform_0, window_bounds = array<i64: 512, 128>}, {pipeline_mode = #tpu.pipeline_mode<synchronous>, transform_indices = @transform_1, window_bounds = array<i64: 128, 128>}, {pipeline_mode = #tpu.pipeline_mode<synchronous>, transform_indices = @transform_2, window_bounds = array<i64: 1, 128>}, {pipeline_mode = #tpu.pipeline_mode<synchronous>, transform_indices = @transform_3, window_bounds = array<i64: 1, 128>}, {pipeline_mode = #tpu.pipeline_mode<synchronous>, transform_indices = @transform_4, window_bounds = array<i64: 512, 128>}]} {
    %c0 = arith.constant 0 : index
    %c0_0 = arith.constant 0 : index
    %0 = vector.load %arg1[%c0, %c0_0] : memref<512x128xbf16, #tpu.memory_space<vmem>>, vector<512x128xbf16>
    %c0_1 = arith.constant 0 : index
    %c0_2 = arith.constant 0 : index
    %1 = vector.load %arg2[%c0_1, %c0_2] : memref<128x128xbf16, #tpu.memory_space<vmem>>, vector<128x128xbf16>
    %cst = arith.constant dense<0.000000e+00> : vector<512x128xf32>
    %2 = tpu.matmul %0, %1, %cst {dimension_numbers = #tpu.dot_dimension_numbers<[1], [0], [0], [1], [0, 0, 1, 1], [], []>} : vector<512x128xbf16>, vector<128x128xbf16>, vector<512x128xf32> -> vector<512x128xf32>
    %cst_3 = arith.constant dense<0.000000e+00> : vector<128xf32>
    %3 = vector.multi_reduction <add>, %2, %cst_3 [0] : vector<512x128xf32> to vector<128xf32>
    %4 = vector.shape_cast %3 : vector<128xf32> to vector<1x128xf32>
    %cst_4 = arith.constant 0.001953125 : f32
    %5 = vector.broadcast %cst_4 : f32 to vector<1x128xf32>
    %6 = arith.mulf %4, %5 : vector<1x128xf32>
    %7 = arith.mulf %2, %2 : vector<512x128xf32>
    %cst_5 = arith.constant dense<0.000000e+00> : vector<128xf32>
    %8 = vector.multi_reduction <add>, %7, %cst_5 [0] : vector<512x128xf32> to vector<128xf32>
    %9 = vector.shape_cast %8 : vector<128xf32> to vector<1x128xf32>
    %cst_6 = arith.constant 0.001953125 : f32
    %10 = vector.broadcast %cst_6 : f32 to vector<1x128xf32>
    %11 = arith.mulf %9, %10 : vector<1x128xf32>
    %12 = arith.mulf %6, %6 : vector<1x128xf32>
    %13 = arith.subf %11, %12 : vector<1x128xf32>
    %cst_7 = arith.constant 0.000000e+00 : f32
    %14 = vector.broadcast %cst_7 : f32 to vector<1x128xf32>
    %15 = arith.maximumf %13, %14 : vector<1x128xf32>
    %c0_8 = arith.constant 0 : index
    %c0_9 = arith.constant 0 : index
    %16 = vector.load %arg3[%c0_8, %c0_9] : memref<1x128xf32, #tpu.memory_space<vmem>>, vector<1x128xf32>
    %cst_10 = arith.constant 9.99999974E-6 : f32
    %17 = vector.broadcast %cst_10 : f32 to vector<1x128xf32>
    %18 = arith.addf %15, %17 : vector<1x128xf32>
    %19 = math.rsqrt %18 : vector<1x128xf32>
    %20 = arith.mulf %16, %19 : vector<1x128xf32>
    %c0_11 = arith.constant 0 : index
    %c0_12 = arith.constant 0 : index
    %21 = vector.load %arg4[%c0_11, %c0_12] : memref<1x128xf32, #tpu.memory_space<vmem>>, vector<1x128xf32>
    %22 = arith.mulf %6, %20 : vector<1x128xf32>
    %23 = arith.subf %21, %22 : vector<1x128xf32>
    %24 = vector.broadcast %20 : vector<1x128xf32> to vector<512x128xf32>
    %25 = arith.mulf %2, %24 : vector<512x128xf32>
    %26 = vector.broadcast %23 : vector<1x128xf32> to vector<512x128xf32>
    %27 = arith.addf %25, %26 : vector<512x128xf32>
    %cst_13 = arith.constant 2.000000e-01 : f32
    %28 = vector.broadcast %cst_13 : f32 to vector<512x128xf32>
    %29 = arith.mulf %28, %27 : vector<512x128xf32>
    %30 = arith.maximumf %27, %29 : vector<512x128xf32>
    %31 = arith.truncf %30 : vector<512x128xf32> to vector<512x128xbf16>
    %c0_14 = arith.constant 0 : index
    %c0_15 = arith.constant 0 : index
    %32 = vector.load %arg5[%c0_14, %c0_15] : memref<512x128xbf16, #tpu.memory_space<vmem>>, vector<512x128xbf16>
    tpu.vector_store %arg5[%c0_14, %c0_15], %31 {strides = array<i32>} : memref<512x128xbf16, #tpu.memory_space<vmem>>, vector<512x128xbf16>,
    return
  }
  func.func @transform_0(%arg0: i32) -> (i32, i32) {
    %c0_i32 = arith.constant 0 : i32
    %c0_i32_0 = arith.constant 0 : i32
    %c0_i32_1 = arith.constant 0 : i32
    return %c0_i32, %c0_i32_0 : i32, i32
  }
  func.func @transform_1(%arg0: i32) -> (i32, i32) {
    %c0_i32 = arith.constant 0 : i32
    %c0_i32_0 = arith.constant 0 : i32
    %c0_i32_1 = arith.constant 0 : i32
    return %c0_i32, %c0_i32_0 : i32, i32
  }
  func.func @transform_2(%arg0: i32) -> (i32, i32) {
    %c0_i32 = arith.constant 0 : i32
    %c0_i32_0 = arith.constant 0 : i32
    %c0_i32_1 = arith.constant 0 : i32
    return %c0_i32, %c0_i32_0 : i32, i32
  }
  func.func @transform_3(%arg0: i32) -> (i32, i32) {
    %c0_i32 = arith.constant 0 : i32
    %c0_i32_0 = arith.constant 0 : i32
    %c0_i32_1 = arith.constant 0 : i32
    return %c0_i32, %c0_i32_0 : i32, i32
  }
  func.func @transform_4(%arg0: i32) -> (i32, i32) {
    %c0_i32 = arith.constant 0 : i32
    %c0_i32_0 = arith.constant 0 : i32
    %c0_i32_1 = arith.constant 0 : i32
    return %c0_i32, %c0_i32_0 : i32, i32
  }
}

module attributes {stable_mosaic.version = 11 : i64} {
  func.func @_gemm_bn_lrelu_kernel(%arg0: i32, %arg1: memref<128x256xbf16, #tpu.memory_space<vmem>>, %arg2: memref<256x128xbf16, #tpu.memory_space<vmem>>, %arg3: memref<1x128xf32, #tpu.memory_space<vmem>>, %arg4: memref<1x128xf32, #tpu.memory_space<vmem>>, %arg5: memref<128x128xbf16, #tpu.memory_space<vmem>>) attributes {dimension_semantics = [#tpu.dimension_semantics<arbitrary>], iteration_bounds = array<i64: 1>, scalar_prefetch = 0 : i64, scratch_operands = 0 : i64, tpu.core_type = #tpu.core_type<tc>, window_params = [{pipeline_mode = #tpu.pipeline_mode<synchronous>, transform_indices = @transform_0, window_bounds = array<i64: 128, 256>}, {pipeline_mode = #tpu.pipeline_mode<synchronous>, transform_indices = @transform_1, window_bounds = array<i64: 256, 128>}, {pipeline_mode = #tpu.pipeline_mode<synchronous>, transform_indices = @transform_2, window_bounds = array<i64: 1, 128>}, {pipeline_mode = #tpu.pipeline_mode<synchronous>, transform_indices = @transform_3, window_bounds = array<i64: 1, 128>}, {pipeline_mode = #tpu.pipeline_mode<synchronous>, transform_indices = @transform_4, window_bounds = array<i64: 128, 128>}]} {
    %c0 = arith.constant 0 : index
    %c0_0 = arith.constant 0 : index
    %0 = vector.load %arg1[%c0, %c0_0] : memref<128x256xbf16, #tpu.memory_space<vmem>>, vector<128x256xbf16>
    %c0_1 = arith.constant 0 : index
    %c0_2 = arith.constant 0 : index
    %1 = vector.load %arg2[%c0_1, %c0_2] : memref<256x128xbf16, #tpu.memory_space<vmem>>, vector<256x128xbf16>
    %cst = arith.constant dense<0.000000e+00> : vector<128x128xf32>
    %2 = tpu.matmul %0, %1, %cst {dimension_numbers = #tpu.dot_dimension_numbers<[1], [0], [0], [1], [0, 0, 1, 1], [], []>} : vector<128x256xbf16>, vector<256x128xbf16>, vector<128x128xf32> -> vector<128x128xf32>
    %cst_3 = arith.constant dense<0.000000e+00> : vector<128xf32>
    %3 = vector.multi_reduction <add>, %2, %cst_3 [0] : vector<128x128xf32> to vector<128xf32>
    %4 = vector.shape_cast %3 : vector<128xf32> to vector<1x128xf32>
    %cst_4 = arith.constant 7.812500e-03 : f32
    %5 = vector.broadcast %cst_4 : f32 to vector<1x128xf32>
    %6 = arith.mulf %4, %5 : vector<1x128xf32>
    %7 = arith.mulf %2, %2 : vector<128x128xf32>
    %cst_5 = arith.constant dense<0.000000e+00> : vector<128xf32>
    %8 = vector.multi_reduction <add>, %7, %cst_5 [0] : vector<128x128xf32> to vector<128xf32>
    %9 = vector.shape_cast %8 : vector<128xf32> to vector<1x128xf32>
    %cst_6 = arith.constant 7.812500e-03 : f32
    %10 = vector.broadcast %cst_6 : f32 to vector<1x128xf32>
    %11 = arith.mulf %9, %10 : vector<1x128xf32>
    %12 = arith.mulf %6, %6 : vector<1x128xf32>
    %13 = arith.subf %11, %12 : vector<1x128xf32>
    %cst_7 = arith.constant 0.000000e+00 : f32
    %14 = vector.broadcast %cst_7 : f32 to vector<1x128xf32>
    %15 = arith.maximumf %13, %14 : vector<1x128xf32>
    %c0_8 = arith.constant 0 : index
    %c0_9 = arith.constant 0 : index
    %16 = vector.load %arg3[%c0_8, %c0_9] : memref<1x128xf32, #tpu.memory_space<vmem>>, vector<1x128xf32>
    %cst_10 = arith.constant 9.99999974E-6 : f32
    %17 = vector.broadcast %cst_10 : f32 to vector<1x128xf32>
    %18 = arith.addf %15, %17 : vector<1x128xf32>
    %19 = math.rsqrt %18 : vector<1x128xf32>
    %20 = arith.mulf %16, %19 : vector<1x128xf32>
    %c0_11 = arith.constant 0 : index
    %c0_12 = arith.constant 0 : index
    %21 = vector.load %arg4[%c0_11, %c0_12] : memref<1x128xf32, #tpu.memory_space<vmem>>, vector<1x128xf32>
    %22 = arith.mulf %6, %20 : vector<1x128xf32>
    %23 = arith.subf %21, %22 : vector<1x128xf32>
    %24 = vector.broadcast %20 : vector<1x128xf32> to vector<128x128xf32>
    %25 = arith.mulf %2, %24 : vector<128x128xf32>
    %26 = vector.broadcast %23 : vector<1x128xf32> to vector<128x128xf32>
    %27 = arith.addf %25, %26 : vector<128x128xf32>
    %cst_13 = arith.constant 2.000000e-01 : f32
    %28 = vector.broadcast %cst_13 : f32 to vector<128x128xf32>
    %29 = arith.mulf %28, %27 : vector<128x128xf32>
    %30 = arith.maximumf %27, %29 : vector<128x128xf32>
    %31 = arith.truncf %30 : vector<128x128xf32> to vector<128x128xbf16>
    %c0_14 = arith.constant 0 : index
    %c0_15 = arith.constant 0 : index
    %32 = vector.load %arg5[%c0_14, %c0_15] : memref<128x128xbf16, #tpu.memory_space<vmem>>, vector<128x128xbf16>
    tpu.vector_store %arg5[%c0_14, %c0_15], %31 {strides = array<i32>} : memref<128x128xbf16, #tpu.memory_space<vmem>>, vector<128x128xbf16>,
    return
  }
  func.func @transform_0(%arg0: i32) -> (i32, i32) {
    %c0_i32 = arith.constant 0 : i32
    %c0_i32_0 = arith.constant 0 : i32
    %c0_i32_1 = arith.constant 0 : i32
    return %c0_i32, %c0_i32_0 : i32, i32
  }
  func.func @transform_1(%arg0: i32) -> (i32, i32) {
    %c0_i32 = arith.constant 0 : i32
    %c0_i32_0 = arith.constant 0 : i32
    %c0_i32_1 = arith.constant 0 : i32
    return %c0_i32, %c0_i32_0 : i32, i32
  }
  func.func @transform_2(%arg0: i32) -> (i32, i32) {
    %c0_i32 = arith.constant 0 : i32
    %c0_i32_0 = arith.constant 0 : i32
    %c0_i32_1 = arith.constant 0 : i32
    return %c0_i32, %c0_i32_0 : i32, i32
  }
  func.func @transform_3(%arg0: i32) -> (i32, i32) {
    %c0_i32 = arith.constant 0 : i32
    %c0_i32_0 = arith.constant 0 : i32
    %c0_i32_1 = arith.constant 0 : i32
    return %c0_i32, %c0_i32_0 : i32, i32
  }
  func.func @transform_4(%arg0: i32) -> (i32, i32) {
    %c0_i32 = arith.constant 0 : i32
    %c0_i32_0 = arith.constant 0 : i32
    %c0_i32_1 = arith.constant 0 : i32
    return %c0_i32, %c0_i32_0 : i32, i32
  }
}

module attributes {stable_mosaic.version = 11 : i64} {
  func.func @_gemm_bn_lrelu_kernel(%arg0: i32, %arg1: memref<32x512xbf16, #tpu.memory_space<vmem>>, %arg2: memref<512x128xbf16, #tpu.memory_space<vmem>>, %arg3: memref<1x128xf32, #tpu.memory_space<vmem>>, %arg4: memref<1x128xf32, #tpu.memory_space<vmem>>, %arg5: memref<32x128xbf16, #tpu.memory_space<vmem>>) attributes {dimension_semantics = [#tpu.dimension_semantics<arbitrary>], iteration_bounds = array<i64: 1>, scalar_prefetch = 0 : i64, scratch_operands = 0 : i64, tpu.core_type = #tpu.core_type<tc>, window_params = [{pipeline_mode = #tpu.pipeline_mode<synchronous>, transform_indices = @transform_0, window_bounds = array<i64: 32, 512>}, {pipeline_mode = #tpu.pipeline_mode<synchronous>, transform_indices = @transform_1, window_bounds = array<i64: 512, 128>}, {pipeline_mode = #tpu.pipeline_mode<synchronous>, transform_indices = @transform_2, window_bounds = array<i64: 1, 128>}, {pipeline_mode = #tpu.pipeline_mode<synchronous>, transform_indices = @transform_3, window_bounds = array<i64: 1, 128>}, {pipeline_mode = #tpu.pipeline_mode<synchronous>, transform_indices = @transform_4, window_bounds = array<i64: 32, 128>}]} {
    %c0 = arith.constant 0 : index
    %c0_0 = arith.constant 0 : index
    %0 = vector.load %arg1[%c0, %c0_0] : memref<32x512xbf16, #tpu.memory_space<vmem>>, vector<32x512xbf16>
    %c0_1 = arith.constant 0 : index
    %c0_2 = arith.constant 0 : index
    %1 = vector.load %arg2[%c0_1, %c0_2] : memref<512x128xbf16, #tpu.memory_space<vmem>>, vector<512x128xbf16>
    %cst = arith.constant dense<0.000000e+00> : vector<32x128xf32>
    %2 = tpu.matmul %0, %1, %cst {dimension_numbers = #tpu.dot_dimension_numbers<[1], [0], [0], [1], [0, 0, 1, 1], [], []>} : vector<32x512xbf16>, vector<512x128xbf16>, vector<32x128xf32> -> vector<32x128xf32>
    %cst_3 = arith.constant dense<0.000000e+00> : vector<128xf32>
    %3 = vector.multi_reduction <add>, %2, %cst_3 [0] : vector<32x128xf32> to vector<128xf32>
    %4 = vector.shape_cast %3 : vector<128xf32> to vector<1x128xf32>
    %cst_4 = arith.constant 3.125000e-02 : f32
    %5 = vector.broadcast %cst_4 : f32 to vector<1x128xf32>
    %6 = arith.mulf %4, %5 : vector<1x128xf32>
    %7 = arith.mulf %2, %2 : vector<32x128xf32>
    %cst_5 = arith.constant dense<0.000000e+00> : vector<128xf32>
    %8 = vector.multi_reduction <add>, %7, %cst_5 [0] : vector<32x128xf32> to vector<128xf32>
    %9 = vector.shape_cast %8 : vector<128xf32> to vector<1x128xf32>
    %cst_6 = arith.constant 3.125000e-02 : f32
    %10 = vector.broadcast %cst_6 : f32 to vector<1x128xf32>
    %11 = arith.mulf %9, %10 : vector<1x128xf32>
    %12 = arith.mulf %6, %6 : vector<1x128xf32>
    %13 = arith.subf %11, %12 : vector<1x128xf32>
    %cst_7 = arith.constant 0.000000e+00 : f32
    %14 = vector.broadcast %cst_7 : f32 to vector<1x128xf32>
    %15 = arith.maximumf %13, %14 : vector<1x128xf32>
    %c0_8 = arith.constant 0 : index
    %c0_9 = arith.constant 0 : index
    %16 = vector.load %arg3[%c0_8, %c0_9] : memref<1x128xf32, #tpu.memory_space<vmem>>, vector<1x128xf32>
    %cst_10 = arith.constant 9.99999974E-6 : f32
    %17 = vector.broadcast %cst_10 : f32 to vector<1x128xf32>
    %18 = arith.addf %15, %17 : vector<1x128xf32>
    %19 = math.rsqrt %18 : vector<1x128xf32>
    %20 = arith.mulf %16, %19 : vector<1x128xf32>
    %c0_11 = arith.constant 0 : index
    %c0_12 = arith.constant 0 : index
    %21 = vector.load %arg4[%c0_11, %c0_12] : memref<1x128xf32, #tpu.memory_space<vmem>>, vector<1x128xf32>
    %22 = arith.mulf %6, %20 : vector<1x128xf32>
    %23 = arith.subf %21, %22 : vector<1x128xf32>
    %24 = vector.broadcast %20 : vector<1x128xf32> to vector<32x128xf32>
    %25 = arith.mulf %2, %24 : vector<32x128xf32>
    %26 = vector.broadcast %23 : vector<1x128xf32> to vector<32x128xf32>
    %27 = arith.addf %25, %26 : vector<32x128xf32>
    %cst_13 = arith.constant 2.000000e-01 : f32
    %28 = vector.broadcast %cst_13 : f32 to vector<32x128xf32>
    %29 = arith.mulf %28, %27 : vector<32x128xf32>
    %30 = arith.maximumf %27, %29 : vector<32x128xf32>
    %31 = arith.truncf %30 : vector<32x128xf32> to vector<32x128xbf16>
    %c0_14 = arith.constant 0 : index
    %c0_15 = arith.constant 0 : index
    %32 = vector.load %arg5[%c0_14, %c0_15] : memref<32x128xbf16, #tpu.memory_space<vmem>>, vector<32x128xbf16>
    tpu.vector_store %arg5[%c0_14, %c0_15], %31 {strides = array<i32>} : memref<32x128xbf16, #tpu.memory_space<vmem>>, vector<32x128xbf16>,
    return
  }
  func.func @transform_0(%arg0: i32) -> (i32, i32) {
    %c0_i32 = arith.constant 0 : i32
    %c0_i32_0 = arith.constant 0 : i32
    %c0_i32_1 = arith.constant 0 : i32
    return %c0_i32, %c0_i32_0 : i32, i32
  }
  func.func @transform_1(%arg0: i32) -> (i32, i32) {
    %c0_i32 = arith.constant 0 : i32
    %c0_i32_0 = arith.constant 0 : i32
    %c0_i32_1 = arith.constant 0 : i32
    return %c0_i32, %c0_i32_0 : i32, i32
  }
  func.func @transform_2(%arg0: i32) -> (i32, i32) {
    %c0_i32 = arith.constant 0 : i32
    %c0_i32_0 = arith.constant 0 : i32
    %c0_i32_1 = arith.constant 0 : i32
    return %c0_i32, %c0_i32_0 : i32, i32
  }
  func.func @transform_3(%arg0: i32) -> (i32, i32) {
    %c0_i32 = arith.constant 0 : i32
    %c0_i32_0 = arith.constant 0 : i32
    %c0_i32_1 = arith.constant 0 : i32
    return %c0_i32, %c0_i32_0 : i32, i32
  }
  func.func @transform_4(%arg0: i32) -> (i32, i32) {
    %c0_i32 = arith.constant 0 : i32
    %c0_i32_0 = arith.constant 0 : i32
    %c0_i32_1 = arith.constant 0 : i32
    return %c0_i32, %c0_i32_0 : i32, i32
  }
}

module attributes {stable_mosaic.version = 11 : i64} {
  func.func @_gemm_sigmoid_kernel(%arg0: i32, %arg1: memref<16x1024xbf16, #tpu.memory_space<vmem>>, %arg2: memref<1024x128xbf16, #tpu.memory_space<vmem>>, %arg3: memref<16x128xf32, #tpu.memory_space<vmem>>) attributes {dimension_semantics = [#tpu.dimension_semantics<arbitrary>], iteration_bounds = array<i64: 1>, scalar_prefetch = 0 : i64, scratch_operands = 0 : i64, tpu.core_type = #tpu.core_type<tc>, window_params = [{pipeline_mode = #tpu.pipeline_mode<synchronous>, transform_indices = @transform_0, window_bounds = array<i64: 16, 1024>}, {pipeline_mode = #tpu.pipeline_mode<synchronous>, transform_indices = @transform_1, window_bounds = array<i64: 1024, 128>}, {pipeline_mode = #tpu.pipeline_mode<synchronous>, transform_indices = @transform_2, window_bounds = array<i64: 16, 128>}]} {
    %c0 = arith.constant 0 : index
    %c0_0 = arith.constant 0 : index
    %0 = vector.load %arg1[%c0, %c0_0] : memref<16x1024xbf16, #tpu.memory_space<vmem>>, vector<16x1024xbf16>
    %c0_1 = arith.constant 0 : index
    %c0_2 = arith.constant 0 : index
    %1 = vector.load %arg2[%c0_1, %c0_2] : memref<1024x128xbf16, #tpu.memory_space<vmem>>, vector<1024x128xbf16>
    %cst = arith.constant dense<0.000000e+00> : vector<16x128xf32>
    %2 = tpu.matmul %0, %1, %cst {dimension_numbers = #tpu.dot_dimension_numbers<[1], [0], [0], [1], [0, 0, 1, 1], [], []>} : vector<16x1024xbf16>, vector<1024x128xbf16>, vector<16x128xf32> -> vector<16x128xf32>
    %cst_3 = arith.constant 0.000000e+00 : f32
    %3 = vector.broadcast %cst_3 : f32 to vector<16x128xf32>
    %4 = arith.subf %3, %2 : vector<16x128xf32>
    %5 = math.exp %4 : vector<16x128xf32>
    %cst_4 = arith.constant 1.000000e+00 : f32
    %6 = vector.broadcast %cst_4 : f32 to vector<16x128xf32>
    %7 = arith.addf %6, %5 : vector<16x128xf32>
    %cst_5 = arith.constant 1.000000e+00 : f32
    %8 = vector.broadcast %cst_5 : f32 to vector<16x128xf32>
    %9 = arith.divf %8, %7 : vector<16x128xf32>
    %c0_6 = arith.constant 0 : index
    %c0_7 = arith.constant 0 : index
    %10 = vector.load %arg3[%c0_6, %c0_7] : memref<16x128xf32, #tpu.memory_space<vmem>>, vector<16x128xf32>
    tpu.vector_store %arg3[%c0_6, %c0_7], %9 {strides = array<i32>} : memref<16x128xf32, #tpu.memory_space<vmem>>, vector<16x128xf32>,
    return
  }
  func.func @transform_0(%arg0: i32) -> (i32, i32) {
    %c0_i32 = arith.constant 0 : i32
    %c0_i32_0 = arith.constant 0 : i32
    %c0_i32_1 = arith.constant 0 : i32
    return %c0_i32, %c0_i32_0 : i32, i32
  }
  func.func @transform_1(%arg0: i32) -> (i32, i32) {
    %c0_i32 = arith.constant 0 : i32
    %c0_i32_0 = arith.constant 0 : i32
    %c0_i32_1 = arith.constant 0 : i32
    return %c0_i32, %c0_i32_0 : i32, i32
  }
  func.func @transform_2(%arg0: i32) -> (i32, i32) {
    %c0_i32 = arith.constant 0 : i32
    %c0_i32_0 = arith.constant 0 : i32
    %c0_i32_1 = arith.constant 0 : i32
    return %c0_i32, %c0_i32_0 : i32, i32
  }
}

</mosaic_0001>

<llo_original>
// kernel: discriminator_forward.5
$region0: #{discriminator_forward.5}
  #allocation0 [shape = 'u32[]', space=smem, size = 0x4, offset = 0x4, fixed_abs, tag = 'smem constant byte address 0x4 - core index']
  #allocation1 [shape = 'u32[144,128]{1,0:T(1,128)}', space=vmem, size = 0x12000, scoped, tag = 'internal scratch']
  %s0 = inlined_call_operand.vmem [shape: bf16[2048,128], index: 0, kind: input, shape index: {}]
  %s1 = inlined_call_operand.vmem [shape: bf16[128,128], index: 1, kind: input, shape index: {}]
  %s2 = inlined_call_operand.vmem [shape: bf16[2048,128], index: 2, kind: output, shape index: {}]
  %s3 = sld [smem:[#allocation0]]
  $region41: #{discriminator_forward.5} parent=0
    _
  %s5 = ssub.s32 1, %s3
  %s6 = scalar_select 0, %s5, %s3
  loop: start=0, step=1, limit=4
  $region2: #{discriminator_forward.5} parent=0 // loop_pre_header
    _
  $region3: #{discriminator_forward.5} parent=0 // loop_header
    %s8 = sphi 0, %s12
    %p9 = scmp.ge.s32.totalorder %s8, 4
    %s18 = sphi 0, %s20
    %s21 = sphi 0, %s18
    %s22 = sphi 0, %s21
    %s38 = sphi 0, %s22
    %s42 = sphi 0, %s42
    %s44 = sphi 0, %s42
    %s45 = sphi 0, %s44
    %s59 = sphi 0, %s45
    %s65 = sphi 0, %s67
    %s68 = sphi 0, %s65
    %s69 = sphi 0, %s68
    %s85 = sphi 0, %s69
  $region4: #{discriminator_forward.5} parent=0 // loop_header_branch
    %11 = sbr.rel (%p9) target = $region8
  $region5: #{discriminator_forward.5} parent=0 // loop_body
    %s13 = ssub.s32 %s8, 1
    %s14 = ssub.s32 %s8, 2
    %s15 = sadd.s32 %s8, 1
    %s16 = ssub.s32 %s8, %s15
    %p17 = scmp.eq.s32.totalorder %s16, 0
    %s19 = sadd.s32 %s18, 1
    %s20 = scalar_select %p17, %s18, %s19
    %p23 = pneg %p17
    %p24 = scmp.eq.s32.totalorder %s8, 1
    %p25 = por %p23, %p24
    %p26 = scmp.ne.s32.totalorder %s18, %s21
    %p27 = scmp.eq.s32.totalorder %s8, 0
    %p28 = por %p26, %p27
    %p29 = scmp.ne.s32.totalorder %s18, %s21
    %p30 = scmp.eq.s32.totalorder %s13, 1
    %p31 = por %p29, %p30
    %p32 = scmp.ne.s32.totalorder %s21, %s22
    %p33 = scmp.eq.s32.totalorder %s13, 0
    %p34 = por %p32, %p33
    %p35 = scmp.ne.s32.totalorder %s21, %s22
    %p36 = scmp.eq.s32.totalorder %s14, 1
    %p37 = por %p35, %p36
    %p39 = scmp.ne.s32.totalorder %s22, %s38
    %p40 = scmp.eq.s32.totalorder %s14, 0
    %p41 = por %p39, %p40
    %s43 = sadd.s32 %s42, 1
    %p46 = scmp.eq.s32.totalorder %s8, 1
    %p47 = scmp.ne.s32.totalorder %s42, %s44
    %p48 = scmp.eq.s32.totalorder %s8, 0
    %p49 = por %p47, %p48
    %p50 = scmp.ne.s32.totalorder %s42, %s44
    %p51 = scmp.eq.s32.totalorder %s13, 1
    %p52 = por %p50, %p51
    %p53 = scmp.ne.s32.totalorder %s44, %s45
    %p54 = scmp.eq.s32.totalorder %s13, 0
    %p55 = por %p53, %p54
    %p56 = scmp.ne.s32.totalorder %s44, %s45
    %p57 = scmp.eq.s32.totalorder %s14, 1
    %p58 = por %p56, %p57
    %p60 = scmp.ne.s32.totalorder %s45, %s59
    %p61 = scmp.eq.s32.totalorder %s14, 0
    %p62 = por %p60, %p61
    %s63 = ssub.s32 %s8, %s15
    %p64 = scmp.eq.s32.totalorder %s63, 0
    %s66 = sadd.s32 %s65, 1
    %s67 = scalar_select %p64, %s65, %s66
    %p70 = pneg %p64
    %p71 = scmp.eq.s32.totalorder %s8, 1
    %p72 = por %p70, %p71
    %p73 = scmp.ne.s32.totalorder %s65, %s68
    %p74 = scmp.eq.s32.totalorder %s8, 0
    %p75 = por %p73, %p74
    %p76 = scmp.ne.s32.totalorder %s65, %s68
    %p77 = scmp.eq.s32.totalorder %s13, 1
    %p78 = por %p76, %p77
    %p79 = scmp.ne.s32.totalorder %s68, %s69
    %p80 = scmp.eq.s32.totalorder %s13, 0
    %p81 = por %p79, %p80
    %p82 = scmp.ne.s32.totalorder %s68, %s69
    %p83 = scmp.eq.s32.totalorder %s14, 1
    %p84 = por %p82, %p83
    %p86 = scmp.ne.s32.totalorder %s69, %s85
    %p87 = scmp.eq.s32.totalorder %s14, 0
    %p88 = por %p86, %p87
    %p89 = scmp.le.s32.totalorder 1, %s8
    %p90 = scmp.lt.s32.totalorder %s8, 3
    %p91 = pnand %p89, %p90
    %p92 = pneg %p91
    // Predicated region
    $region9: #{discriminator_forward.5} parent=5 // pred_check
      _
    $region10: #{discriminator_forward.5} parent=5 // pred_check_branch
      %94 = sbr.rel (%p91) target = $region12
    $region11: #{discriminator_forward.5} parent=5 // pred_region
      %s95 = ssub.s32 %s8, 1
      // Predicated region
      $region13: #{discriminator_forward.5} parent=11 // pred_check
        %p96 = pneg %p55
      $region14: #{discriminator_forward.5} parent=11 // pred_check_branch
        %98 = sbr.rel (%p96) target = $region16
      $region15: #{discriminator_forward.5} parent=11 // pred_region
        _
      $region16: #{discriminator_forward.5} parent=11 // pred_fallthru
        _
    $region12: #{discriminator_forward.5} parent=5 // pred_fallthru
      _
    %p99 = scmp.lt.s32.totalorder %s8, 2
    // Predicated region
    $region17: #{discriminator_forward.5} parent=5 // pred_check
      %p100 = pneg %p99
    $region18: #{discriminator_forward.5} parent=5 // pred_check_branch
      %102 = sbr.rel (%p100) target = $region20
    $region19: #{discriminator_forward.5} parent=5 // pred_region
      // Predicated region
      $region21: #{discriminator_forward.5} parent=19 // pred_check
        %p103 = pneg %p28
      $region22: #{discriminator_forward.5} parent=19 // pred_check_branch
        %105 = sbr.rel (%p103) target = $region24
      $region23: #{discriminator_forward.5} parent=19 // pred_region
        %s106 = smul.u32 128, %s8
        %p107 = scmp.lt.s32.totalorder %s106, 255
        %s108 = scalar_select %p107, %s106, 255
        %s109 = smul.addr %s108, 4
        %s110 = scalar_lea.vmem %s0, %s109
        %s111 = smul.u32 128, %s8
      $region24: #{discriminator_forward.5} parent=19 // pred_fallthru
        _
    $region20: #{discriminator_forward.5} parent=5 // pred_fallthru
      _
    %p112 = scmp.le.s32.totalorder 1, %s8
    %p113 = scmp.lt.s32.totalorder %s8, 3
    %p114 = pnand %p112, %p113
    %p115 = pneg %p114
    // Predicated region
    $region25: #{discriminator_forward.5} parent=5 // pred_check
      _
    $region26: #{discriminator_forward.5} parent=5 // pred_check_branch
      %117 = sbr.rel (%p114) target = $region28
    $region27: #{discriminator_forward.5} parent=5 // pred_region
      %s118 = ssub.s32 %s8, 1
      %s119 = smul.u32 128, %s13
      %p120 = scmp.lt.s32.totalorder %s119, 255
      %s121 = scalar_select %p120, %s119, 255
      %s122 = smul.addr %s121, 4
      %s123 = scalar_lea.vmem %s0, %s122
      %p124 = pneg %p34
      %p125 = pneg %p31
      %p126 = pneg %p55
      %p127 = pneg %p52
      %p128 = pneg %p81
      %p129 = pneg %p78
      %s130 = smul.u32 128, %s13
      %p131 = scmp.lt.s32.totalorder %s130, 255
      %s132 = scalar_select %p131, %s130, 255
      %s133 = smul.addr %s132, 4
      %s134 = scalar_lea.vmem %s2, %s133
      %s135 = smul.u32 128, %s13
      %p136 = scmp.lt.s32.totalorder %s135, 255
      %s137 = scalar_select %p136, %s135, 255
      %s138 = smul.addr %s137, 4
      %s139 = scalar_lea.vmem %s0, %s138
      %s140 = smul.u32 128, %s13
      %s141 = smul.u32 128, %s13
      %p142 = scmp.lt.s32.totalorder %s141, 255
      %s143 = scalar_select %p142, %s141, 255
      %s144 = smul.addr %s143, 4
      %s145 = scalar_lea.vmem %s2, %s144
      %s146 = smul.u32 128, %s13
      %v148 = vld [vmem:[%s139] sm:$0xf]
      %v149 = vld [vmem:[%s139 + $0x4] sm:$0xf]
      %v150 = vld [vmem:[%s139 + $0x8] sm:$0xf]
      %v151 = vld [vmem:[%s139 + $0xc] sm:$0xf]
      %v152 = vld [vmem:[%s139 + $0x10] sm:$0xf]
      %v153 = vld [vmem:[%s139 + $0x14] sm:$0xf]
      %v154 = vld [vmem:[%s139 + $0x18] sm:$0xf]
      %v155 = vld [vmem:[%s139 + $0x1c] sm:$0xf]
      %v156 = vld [vmem:[%s139 + $0x20] sm:$0xf]
      %v157 = vld [vmem:[%s139 + $0x24] sm:$0xf]
      %v158 = vld [vmem:[%s139 + $0x28] sm:$0xf]
      %v159 = vld [vmem:[%s139 + $0x2c] sm:$0xf]
      %v160 = vld [vmem:[%s139 + $0x30] sm:$0xf]
      %v161 = vld [vmem:[%s139 + $0x34] sm:$0xf]
      %v162 = vld [vmem:[%s139 + $0x38] sm:$0xf]
      %v163 = vld [vmem:[%s139 + $0x3c] sm:$0xf]
      %v164 = vld [vmem:[%s139 + $0x40] sm:$0xf]
      %v165 = vld [vmem:[%s139 + $0x44] sm:$0xf]
      %v166 = vld [vmem:[%s139 + $0x48] sm:$0xf]
      %v167 = vld [vmem:[%s139 + $0x4c] sm:$0xf]
      %v168 = vld [vmem:[%s139 + $0x50] sm:$0xf]
      %v169 = vld [vmem:[%s139 + $0x54] sm:$0xf]
      %v170 = vld [vmem:[%s139 + $0x58] sm:$0xf]
      %v171 = vld [vmem:[%s139 + $0x5c] sm:$0xf]
      %v172 = vld [vmem:[%s139 + $0x60] sm:$0xf]
      %v173 = vld [vmem:[%s139 + $0x64] sm:$0xf]
      %v174 = vld [vmem:[%s139 + $0x68] sm:$0xf]
      %v175 = vld [vmem:[%s139 + $0x6c] sm:$0xf]
      %v176 = vld [vmem:[%s139 + $0x70] sm:$0xf]
      %v177 = vld [vmem:[%s139 + $0x74] sm:$0xf]
      %v178 = vld [vmem:[%s139 + $0x78] sm:$0xf]
      %v179 = vld [vmem:[%s139 + $0x7c] sm:$0xf]
      %v180 = vld [vmem:[%s139 + $0x80] sm:$0xf]
      %v181 = vld [vmem:[%s139 + $0x84] sm:$0xf]
      %v182 = vld [vmem:[%s139 + $0x88] sm:$0xf]
      %v183 = vld [vmem:[%s139 + $0x8c] sm:$0xf]
      %v184 = vld [vmem:[%s139 + $0x90] sm:$0xf]
      %v185 = vld [vmem:[%s139 + $0x94] sm:$0xf]
      %v186 = vld [vmem:[%s139 + $0x98] sm:$0xf]
      %v187 = vld [vmem:[%s139 + $0x9c] sm:$0xf]
      %v188 = vld [vmem:[%s139 + $0xa0] sm:$0xf]
      %v189 = vld [vmem:[%s139 + $0xa4] sm:$0xf]
      %v190 = vld [vmem:[%s139 + $0xa8] sm:$0xf]
      %v191 = vld [vmem:[%s139 + $0xac] sm:$0xf]
      %v192 = vld [vmem:[%s139 + $0xb0] sm:$0xf]
      %v193 = vld [vmem:[%s139 + $0xb4] sm:$0xf]
      %v194 = vld [vmem:[%s139 + $0xb8] sm:$0xf]
      %v195 = vld [vmem:[%s139 + $0xbc] sm:$0xf]
      %v196 = vld [vmem:[%s139 + $0xc0] sm:$0xf]
      %v197 = vld [vmem:[%s139 + $0xc4] sm:$0xf]
      %v198 = vld [vmem:[%s139 + $0xc8] sm:$0xf]
      %v199 = vld [vmem:[%s139 + $0xcc] sm:$0xf]
      %v200 = vld [vmem:[%s139 + $0xd0] sm:$0xf]
      %v201 = vld [vmem:[%s139 + $0xd4] sm:$0xf]
      %v202 = vld [vmem:[%s139 + $0xd8] sm:$0xf]
      %v203 = vld [vmem:[%s139 + $0xdc] sm:$0xf]
      %v204 = vld [vmem:[%s139 + $0xe0] sm:$0xf]
      %v205 = vld [vmem:[%s139 + $0xe4] sm:$0xf]
      %v206 = vld [vmem:[%s139 + $0xe8] sm:$0xf]
      %v207 = vld [vmem:[%s139 + $0xec] sm:$0xf]
      %v208 = vld [vmem:[%s139 + $0xf0] sm:$0xf]
      %v209 = vld [vmem:[%s139 + $0xf4] sm:$0xf]
      %v210 = vld [vmem:[%s139 + $0xf8] sm:$0xf]
      %v211 = vld [vmem:[%s139 + $0xfc] sm:$0xf]
      %v212 = vld [vmem:[%s139 + $0x100] sm:$0xf]
      %v213 = vld [vmem:[%s139 + $0x104] sm:$0xf]
      %v214 = vld [vmem:[%s139 + $0x108] sm:$0xf]
      %v215 = vld [vmem:[%s139 + $0x10c] sm:$0xf]
      %v216 = vld [vmem:[%s139 + $0x110] sm:$0xf]
      %v217 = vld [vmem:[%s139 + $0x114] sm:$0xf]
      %v218 = vld [vmem:[%s139 + $0x118] sm:$0xf]
      %v219 = vld [vmem:[%s139 + $0x11c] sm:$0xf]
      %v220 = vld [vmem:[%s139 + $0x120] sm:$0xf]
      %v221 = vld [vmem:[%s139 + $0x124] sm:$0xf]
      %v222 = vld [vmem:[%s139 + $0x128] sm:$0xf]
      %v223 = vld [vmem:[%s139 + $0x12c] sm:$0xf]
      %v224 = vld [vmem:[%s139 + $0x130] sm:$0xf]
      %v225 = vld [vmem:[%s139 + $0x134] sm:$0xf]
      %v226 = vld [vmem:[%s139 + $0x138] sm:$0xf]
      %v227 = vld [vmem:[%s139 + $0x13c] sm:$0xf]
      %v228 = vld [vmem:[%s139 + $0x140] sm:$0xf]
      %v229 = vld [vmem:[%s139 + $0x144] sm:$0xf]
      %v230 = vld [vmem:[%s139 + $0x148] sm:$0xf]
      %v231 = vld [vmem:[%s139 + $0x14c] sm:$0xf]
      %v232 = vld [vmem:[%s139 + $0x150] sm:$0xf]
      %v233 = vld [vmem:[%s139 + $0x154] sm:$0xf]
      %v234 = vld [vmem:[%s139 + $0x158] sm:$0xf]
      %v235 = vld [vmem:[%s139 + $0x15c] sm:$0xf]
      %v236 = vld [vmem:[%s139 + $0x160] sm:$0xf]
      %v237 = vld [vmem:[%s139 + $0x164] sm:$0xf]
      %v238 = vld [vmem:[%s139 + $0x168] sm:$0xf]
      %v239 = vld [vmem:[%s139 + $0x16c] sm:$0xf]
      %v240 = vld [vmem:[%s139 + $0x170] sm:$0xf]
      %v241 = vld [vmem:[%s139 + $0x174] sm:$0xf]
      %v242 = vld [vmem:[%s139 + $0x178] sm:$0xf]
      %v243 = vld [vmem:[%s139 + $0x17c] sm:$0xf]
      %v244 = vld [vmem:[%s139 + $0x180] sm:$0xf]
      %v245 = vld [vmem:[%s139 + $0x184] sm:$0xf]
      %v246 = vld [vmem:[%s139 + $0x188] sm:$0xf]
      %v247 = vld [vmem:[%s139 + $0x18c] sm:$0xf]
      %v248 = vld [vmem:[%s139 + $0x190] sm:$0xf]
      %v249 = vld [vmem:[%s139 + $0x194] sm:$0xf]
      %v250 = vld [vmem:[%s139 + $0x198] sm:$0xf]
      %v251 = vld [vmem:[%s139 + $0x19c] sm:$0xf]
      %v252 = vld [vmem:[%s139 + $0x1a0] sm:$0xf]
      %v253 = vld [vmem:[%s139 + $0x1a4] sm:$0xf]
      %v254 = vld [vmem:[%s139 + $0x1a8] sm:$0xf]
      %v255 = vld [vmem:[%s139 + $0x1ac] sm:$0xf]
      %v256 = vld [vmem:[%s139 + $0x1b0] sm:$0xf]
      %v257 = vld [vmem:[%s139 + $0x1b4] sm:$0xf]
      %v258 = vld [vmem:[%s139 + $0x1b8] sm:$0xf]
      %v259 = vld [vmem:[%s139 + $0x1bc] sm:$0xf]
      %v260 = vld [vmem:[%s139 + $0x1c0] sm:$0xf]
      %v261 = vld [vmem:[%s139 + $0x1c4] sm:$0xf]
      %v262 = vld [vmem:[%s139 + $0x1c8] sm:$0xf]
      %v263 = vld [vmem:[%s139 + $0x1cc] sm:$0xf]
      %v264 = vld [vmem:[%s139 + $0x1d0] sm:$0xf]
      %v265 = vld [vmem:[%s139 + $0x1d4] sm:$0xf]
      %v266 = vld [vmem:[%s139 + $0x1d8] sm:$0xf]
      %v267 = vld [vmem:[%s139 + $0x1dc] sm:$0xf]
      %v268 = vld [vmem:[%s139 + $0x1e0] sm:$0xf]
      %v269 = vld [vmem:[%s139 + $0x1e4] sm:$0xf]
      %v270 = vld [vmem:[%s139 + $0x1e8] sm:$0xf]
      %v271 = vld [vmem:[%s139 + $0x1ec] sm:$0xf]
      %v272 = vld [vmem:[%s139 + $0x1f0] sm:$0xf]
      %v273 = vld [vmem:[%s139 + $0x1f4] sm:$0xf]
      %v274 = vld [vmem:[%s139 + $0x1f8] sm:$0xf]
      %v275 = vld [vmem:[%s139 + $0x1fc] sm:$0xf]
      %v276 = vld [vmem:[%s1] sm:$0xf]
      %v277 = vld [vmem:[%s1 + $0x4] sm:$0xf]
      %v278 = vld [vmem:[%s1 + $0x8] sm:$0xf]
      %v279 = vld [vmem:[%s1 + $0xc] sm:$0xf]
      %v280 = vld [vmem:[%s1 + $0x10] sm:$0xf]
      %v281 = vld [vmem:[%s1 + $0x14] sm:$0xf]
      %v282 = vld [vmem:[%s1 + $0x18] sm:$0xf]
      %v283 = vld [vmem:[%s1 + $0x1c] sm:$0xf]
      %v284 = vld [vmem:[%s1 + $0x20] sm:$0xf]
      %v285 = vld [vmem:[%s1 + $0x24] sm:$0xf]
      %v286 = vld [vmem:[%s1 + $0x28] sm:$0xf]
      %v287 = vld [vmem:[%s1 + $0x2c] sm:$0xf]
      %v288 = vld [vmem:[%s1 + $0x30] sm:$0xf]
      %v289 = vld [vmem:[%s1 + $0x34] sm:$0xf]
      %v290 = vld [vmem:[%s1 + $0x38] sm:$0xf]
      %v291 = vld [vmem:[%s1 + $0x3c] sm:$0xf]
      %v420 = vunpack.c.l.b16 %v148
      %v421 = vunpack.c.l.b16 %v149
      %v422 = vunpack.c.l.b16 %v150
      %v423 = vunpack.c.l.b16 %v151
      %v424 = vunpack.c.l.b16 %v152
      %v425 = vunpack.c.l.b16 %v153
      %v426 = vunpack.c.l.b16 %v154
      %v427 = vunpack.c.l.b16 %v155
      %v428 = vunpack.c.l.b16 %v156
      %v429 = vunpack.c.l.b16 %v157
      %v430 = vunpack.c.l.b16 %v158
      %v431 = vunpack.c.l.b16 %v159
      %v432 = vunpack.c.l.b16 %v160
      %v433 = vunpack.c.l.b16 %v161
      %v434 = vunpack.c.l.b16 %v162
      %v435 = vunpack.c.l.b16 %v163
      %v436 = vunpack.c.l.b16 %v164
      %v437 = vunpack.c.l.b16 %v165
      %v438 = vunpack.c.l.b16 %v166
      %v439 = vunpack.c.l.b16 %v167
      %v440 = vunpack.c.l.b16 %v168
      %v441 = vunpack.c.l.b16 %v169
      %v442 = vunpack.c.l.b16 %v170
      %v443 = vunpack.c.l.b16 %v171
      %v444 = vunpack.c.l.b16 %v172
      %v445 = vunpack.c.l.b16 %v173
      %v446 = vunpack.c.l.b16 %v174
      %v447 = vunpack.c.l.b16 %v175
      %v448 = vunpack.c.l.b16 %v176
      %v449 = vunpack.c.l.b16 %v177
      %v450 = vunpack.c.l.b16 %v178
      %v451 = vunpack.c.l.b16 %v179
      %v452 = vunpack.c.l.b16 %v180
      %v453 = vunpack.c.l.b16 %v181
      %v454 = vunpack.c.l.b16 %v182
      %v455 = vunpack.c.l.b16 %v183
      %v456 = vunpack.c.l.b16 %v184
      %v457 = vunpack.c.l.b16 %v185
      %v458 = vunpack.c.l.b16 %v186
      %v459 = vunpack.c.l.b16 %v187
      %v460 = vunpack.c.l.b16 %v188
      %v461 = vunpack.c.l.b16 %v189
      %v462 = vunpack.c.l.b16 %v190
      %v463 = vunpack.c.l.b16 %v191
      %v464 = vunpack.c.l.b16 %v192
      %v465 = vunpack.c.l.b16 %v193
      %v466 = vunpack.c.l.b16 %v194
      %v467 = vunpack.c.l.b16 %v195
      %v468 = vunpack.c.l.b16 %v196
      %v469 = vunpack.c.l.b16 %v197
      %v470 = vunpack.c.l.b16 %v198
      %v471 = vunpack.c.l.b16 %v199
      %v472 = vunpack.c.l.b16 %v200
      %v473 = vunpack.c.l.b16 %v201
      %v474 = vunpack.c.l.b16 %v202
      %v475 = vunpack.c.l.b16 %v203
      %v476 = vunpack.c.l.b16 %v204
      %v477 = vunpack.c.l.b16 %v205
      %v478 = vunpack.c.l.b16 %v206
      %v479 = vunpack.c.l.b16 %v207
      %v480 = vunpack.c.l.b16 %v208
      %v481 = vunpack.c.l.b16 %v209
      %v482 = vunpack.c.l.b16 %v210
      %v483 = vunpack.c.l.b16 %v211
      %v484 = vunpack.c.l.b16 %v212
      %v485 = vunpack.c.l.b16 %v213
      %v486 = vunpack.c.l.b16 %v214
      %v487 = vunpack.c.l.b16 %v215
      %v488 = vunpack.c.l.b16 %v216
      %v489 = vunpack.c.l.b16 %v217
      %v490 = vunpack.c.l.b16 %v218
      %v491 = vunpack.c.l.b16 %v219
      %v492 = vunpack.c.l.b16 %v220
      %v493 = vunpack.c.l.b16 %v221
      %v494 = vunpack.c.l.b16 %v222
      %v495 = vunpack.c.l.b16 %v223
      %v496 = vunpack.c.l.b16 %v224
      %v497 = vunpack.c.l.b16 %v225
      %v498 = vunpack.c.l.b16 %v226
      %v499 = vunpack.c.l.b16 %v227
      %v500 = vunpack.c.l.b16 %v228
      %v501 = vunpack.c.l.b16 %v229
      %v502 = vunpack.c.l.b16 %v230
      %v503 = vunpack.c.l.b16 %v231
      %v504 = vunpack.c.l.b16 %v232
      %v505 = vunpack.c.l.b16 %v233
      %v506 = vunpack.c.l.b16 %v234
      %v507 = vunpack.c.l.b16 %v235
      %v508 = vunpack.c.l.b16 %v236
      %v509 = vunpack.c.l.b16 %v237
      %v510 = vunpack.c.l.b16 %v238
      %v511 = vunpack.c.l.b16 %v239
      %v512 = vunpack.c.l.b16 %v240
      %v513 = vunpack.c.l.b16 %v241
      %v514 = vunpack.c.l.b16 %v242
      %v515 = vunpack.c.l.b16 %v243
      %v516 = vunpack.c.l.b16 %v244
      %v517 = vunpack.c.l.b16 %v245
      %v518 = vunpack.c.l.b16 %v246
      %v519 = vunpack.c.l.b16 %v247
      %v520 = vunpack.c.l.b16 %v248
      %v521 = vunpack.c.l.b16 %v249
      %v522 = vunpack.c.l.b16 %v250
      %v523 = vunpack.c.l.b16 %v251
      %v524 = vunpack.c.l.b16 %v252
      %v525 = vunpack.c.l.b16 %v253
      %v526 = vunpack.c.l.b16 %v254
      %v527 = vunpack.c.l.b16 %v255
      %v528 = vunpack.c.l.b16 %v256
      %v529 = vunpack.c.l.b16 %v257
      %v530 = vunpack.c.l.b16 %v258
      %v531 = vunpack.c.l.b16 %v259
      %v532 = vunpack.c.l.b16 %v260
      %v533 = vunpack.c.l.b16 %v261
      %v534 = vunpack.c.l.b16 %v262
      %v535 = vunpack.c.l.b16 %v263
      %v536 = vunpack.c.l.b16 %v264
      %v537 = vunpack.c.l.b16 %v265
      %v538 = vunpack.c.l.b16 %v266
      %v539 = vunpack.c.l.b16 %v267
      %v540 = vunpack.c.l.b16 %v268
      %v541 = vunpack.c.l.b16 %v269
      %v542 = vunpack.c.l.b16 %v270
      %v543 = vunpack.c.l.b16 %v271
      %v544 = vunpack.c.l.b16 %v272
      %v545 = vunpack.c.l.b16 %v273
      %v546 = vunpack.c.l.b16 %v274
      %v547 = vunpack.c.l.b16 %v275
      %v548 = vpack.c.b16 %v421, %v420
      %v549 = vpack.c.b16 %v423, %v422
      %v550 = vpack.c.b16 %v425, %v424
      %v551 = vpack.c.b16 %v427, %v426
      %v552 = vpack.c.b16 %v429, %v428
      %v553 = vpack.c.b16 %v431, %v430
      %v554 = vpack.c.b16 %v433, %v432
      %v555 = vpack.c.b16 %v435, %v434
      %v556 = vpack.c.b16 %v437, %v436
      %v557 = vpack.c.b16 %v439, %v438
      %v558 = vpack.c.b16 %v441, %v440
      %v559 = vpack.c.b16 %v443, %v442
      %v560 = vpack.c.b16 %v445, %v444
      %v561 = vpack.c.b16 %v447, %v446
      %v562 = vpack.c.b16 %v449, %v448
      %v563 = vpack.c.b16 %v451, %v450
      %v564 = vpack.c.b16 %v453, %v452
      %v565 = vpack.c.b16 %v455, %v454
      %v566 = vpack.c.b16 %v457, %v456
      %v567 = vpack.c.b16 %v459, %v458
      %v568 = vpack.c.b16 %v461, %v460
      %v569 = vpack.c.b16 %v463, %v462
      %v570 = vpack.c.b16 %v465, %v464
      %v571 = vpack.c.b16 %v467, %v466
      %v572 = vpack.c.b16 %v469, %v468
      %v573 = vpack.c.b16 %v471, %v470
      %v574 = vpack.c.b16 %v473, %v472
      %v575 = vpack.c.b16 %v475, %v474
      %v576 = vpack.c.b16 %v477, %v476
      %v577 = vpack.c.b16 %v479, %v478
      %v578 = vpack.c.b16 %v481, %v480
      %v579 = vpack.c.b16 %v483, %v482
      %v580 = vpack.c.b16 %v485, %v484
      %v581 = vpack.c.b16 %v487, %v486
      %v582 = vpack.c.b16 %v489, %v488
      %v583 = vpack.c.b16 %v491, %v490
      %v584 = vpack.c.b16 %v493, %v492
      %v585 = vpack.c.b16 %v495, %v494
      %v586 = vpack.c.b16 %v497, %v496
      %v587 = vpack.c.b16 %v499, %v498
      %v588 = vpack.c.b16 %v501, %v500
      %v589 = vpack.c.b16 %v503, %v502
      %v590 = vpack.c.b16 %v505, %v504
      %v591 = vpack.c.b16 %v507, %v506
      %v592 = vpack.c.b16 %v509, %v508
      %v593 = vpack.c.b16 %v511, %v510
      %v594 = vpack.c.b16 %v513, %v512
      %v595 = vpack.c.b16 %v515, %v514
      %v596 = vpack.c.b16 %v517, %v516
      %v597 = vpack.c.b16 %v519, %v518
      %v598 = vpack.c.b16 %v521, %v520
      %v599 = vpack.c.b16 %v523, %v522
      %v600 = vpack.c.b16 %v525, %v524
      %v601 = vpack.c.b16 %v527, %v526
      %v602 = vpack.c.b16 %v529, %v528
      %v603 = vpack.c.b16 %v531, %v530
      %v604 = vpack.c.b16 %v533, %v532
      %v605 = vpack.c.b16 %v535, %v534
      %v606 = vpack.c.b16 %v537, %v536
      %v607 = vpack.c.b16 %v539, %v538
      %v608 = vpack.c.b16 %v541, %v540
      %v609 = vpack.c.b16 %v543, %v542
      %v610 = vpack.c.b16 %v545, %v544
      %v611 = vpack.c.b16 %v547, %v546
      %v692 = vunpack.c.l.b16 %v276
      %v693 = vunpack.c.l.b16 %v277
      %v694 = vunpack.c.l.b16 %v278
      %v695 = vunpack.c.l.b16 %v279
      %v696 = vunpack.c.l.b16 %v280
      %v697 = vunpack.c.l.b16 %v281
      %v698 = vunpack.c.l.b16 %v282
      %v699 = vunpack.c.l.b16 %v283
      %v700 = vunpack.c.l.b16 %v284
      %v701 = vunpack.c.l.b16 %v285
      %v702 = vunpack.c.l.b16 %v286
      %v703 = vunpack.c.l.b16 %v287
      %v704 = vunpack.c.l.b16 %v288
      %v705 = vunpack.c.l.b16 %v289
      %v706 = vunpack.c.l.b16 %v290
      %v707 = vunpack.c.l.b16 %v291
      %v708 = vpack.c.b16 %v693, %v692
      %v709 = vpack.c.b16 %v695, %v694
      %v710 = vpack.c.b16 %v697, %v696
      %v711 = vpack.c.b16 %v699, %v698
      %v712 = vpack.c.b16 %v701, %v700
      %v713 = vpack.c.b16 %v703, %v702
      %v714 = vpack.c.b16 %v705, %v704
      %v715 = vpack.c.b16 %v707, %v706
      %724 = vmatprep.subr.bf16.mxu0 0
      %725 = vmatpush1.bf16.msra.mxu0 %v715
      %726 = vmatprep.subr.bf16.mxu0 0
      %727 = vmatpush1.bf16.msra.mxu0 %v714
      %728 = vmatprep.subr.bf16.mxu0 0
      %729 = vmatpush1.bf16.msra.mxu0 %v713
      %730 = vmatprep.subr.bf16.mxu0 0
      %731 = vmatpush1.bf16.msra.mxu0 %v712
      %732 = vmatprep.subr.bf16.mxu0 0
      %733 = vmatpush1.bf16.msra.mxu0 %v711
      %734 = vmatprep.subr.bf16.mxu0 0
      %735 = vmatpush1.bf16.msra.mxu0 %v710
      %736 = vmatprep.subr.bf16.mxu0 0
      %737 = vmatpush1.bf16.msra.mxu0 %v709
      %738 = vmatprep.subr.bf16.mxu0 0
      %739 = vmatpush1.bf16.msra.mxu0 %v708
      %740 = vmatprep.subr.bf16.mxu0 0
      %741 = vmatpush2.bf16.msra.mxu0 0
      %742 = vmatprep.subr.bf16.mxu0 0
      %743 = vmatpush2.bf16.msra.mxu0 0
      %744 = vmatprep.subr.bf16.mxu0 0
      %745 = vmatpush2.bf16.msra.mxu0 0
      %746 = vmatprep.subr.bf16.mxu0 0
      %747 = vmatpush2.bf16.msra.mxu0 0
      %748 = vmatprep.subr.bf16.mxu0 0
      %749 = vmatpush2.bf16.msra.mxu0 0
      %750 = vmatprep.subr.bf16.mxu0 0
      %751 = vmatpush2.bf16.msra.mxu0 0
      %752 = vmatprep.subr.bf16.mxu0 0
      %753 = vmatpush2.bf16.msra.mxu0 0
      %754 = vmatprep.subr.bf16.mxu0 0
      %755 = vmatpush2.bf16.msra.mxu0 0
      %756 = vmatprep.mubr.bf16.mxu0 0
      %757 = vmatmul.mubr.bf16.gmra.mxu0 %v548
      %v758 = vpop.f32.mrf.mxu0
      %v759 = vadd.f32 0.0, %v758
      %v760 = vpop.f32.mrf.mxu0
      %v761 = vpop.f32.mrf.mxu0
      %v762 = vadd.f32 0.0, %v761
      %v763 = vpop.f32.mrf.mxu0
      %764 = vmatprep.mubr.bf16.mxu0 0
      %765 = vmatmul.mubr.bf16.gmra.mxu0 %v549
      %v766 = vpop.f32.mrf.mxu0
      %v767 = vadd.f32 0.0, %v766
      %v768 = vpop.f32.mrf.mxu0
      %v769 = vpop.f32.mrf.mxu0
      %v770 = vadd.f32 0.0, %v769
      %v771 = vpop.f32.mrf.mxu0
      %772 = vmatprep.mubr.bf16.mxu0 0
      %773 = vmatmul.mubr.bf16.gmra.mxu0 %v550
      %v774 = vpop.f32.mrf.mxu0
      %v775 = vadd.f32 0.0, %v774
      %v776 = vpop.f32.mrf.mxu0
      %v777 = vpop.f32.mrf.mxu0
      %v778 = vadd.f32 0.0, %v777
      %v779 = vpop.f32.mrf.mxu0
      %780 = vmatprep.mubr.bf16.mxu0 0
      %781 = vmatmul.mubr.bf16.gmra.mxu0 %v551
      %v782 = vpop.f32.mrf.mxu0
      %v783 = vadd.f32 0.0, %v782
      %v784 = vpop.f32.mrf.mxu0
      %v785 = vpop.f32.mrf.mxu0
      %v786 = vadd.f32 0.0, %v785
      %v787 = vpop.f32.mrf.mxu0
      %788 = vmatprep.mubr.bf16.mxu0 0
      %789 = vmatmul.mubr.bf16.gmra.mxu0 %v552
      %v790 = vpop.f32.mrf.mxu0
      %v791 = vadd.f32 0.0, %v790
      %v792 = vpop.f32.mrf.mxu0
      %v793 = vpop.f32.mrf.mxu0
      %v794 = vadd.f32 0.0, %v793
      %v795 = vpop.f32.mrf.mxu0
      %796 = vmatprep.mubr.bf16.mxu0 0
      %797 = vmatmul.mubr.bf16.gmra.mxu0 %v553
      %v798 = vpop.f32.mrf.mxu0
      %v799 = vadd.f32 0.0, %v798
      %v800 = vpop.f32.mrf.mxu0
      %v801 = vpop.f32.mrf.mxu0
      %v802 = vadd.f32 0.0, %v801
      %v803 = vpop.f32.mrf.mxu0
      %804 = vmatprep.mubr.bf16.mxu0 0
      %805 = vmatmul.mubr.bf16.gmra.mxu0 %v554
      %v806 = vpop.f32.mrf.mxu0
      %v807 = vadd.f32 0.0, %v806
      %v808 = vpop.f32.mrf.mxu0
      %v809 = vpop.f32.mrf.mxu0
      %v810 = vadd.f32 0.0, %v809
      %v811 = vpop.f32.mrf.mxu0
      %812 = vmatprep.mubr.bf16.mxu0 0
      %813 = vmatmul.mubr.bf16.gmra.mxu0 %v555
      %v814 = vpop.f32.mrf.mxu0
      %v815 = vadd.f32 0.0, %v814
      %v816 = vpop.f32.mrf.mxu0
      %v817 = vpop.f32.mrf.mxu0
      %v818 = vadd.f32 0.0, %v817
      %v819 = vpop.f32.mrf.mxu0
      %820 = vmatprep.mubr.bf16.mxu0 0
      %821 = vmatmul.mubr.bf16.gmra.mxu0 %v556
      %v822 = vpop.f32.mrf.mxu0
      %v823 = vadd.f32 0.0, %v822
      %v824 = vpop.f32.mrf.mxu0
      %v825 = vpop.f32.mrf.mxu0
      %v826 = vadd.f32 0.0, %v825
      %v827 = vpop.f32.mrf.mxu0
      %828 = vmatprep.mubr.bf16.mxu0 0
      %829 = vmatmul.mubr.bf16.gmra.mxu0 %v557
      %v830 = vpop.f32.mrf.mxu0
      %v831 = vadd.f32 0.0, %v830
      %v832 = vpop.f32.mrf.mxu0
      %v833 = vpop.f32.mrf.mxu0
      %v834 = vadd.f32 0.0, %v833
      %v835 = vpop.f32.mrf.mxu0
      %836 = vmatprep.mubr.bf16.mxu0 0
      %837 = vmatmul.mubr.bf16.gmra.mxu0 %v558
      %v838 = vpop.f32.mrf.mxu0
      %v839 = vadd.f32 0.0, %v838
      %v840 = vpop.f32.mrf.mxu0
      %v841 = vpop.f32.mrf.mxu0
      %v842 = vadd.f32 0.0, %v841
      %v843 = vpop.f32.mrf.mxu0
      %844 = vmatprep.mubr.bf16.mxu0 0
      %845 = vmatmul.mubr.bf16.gmra.mxu0 %v559
      %v846 = vpop.f32.mrf.mxu0
      %v847 = vadd.f32 0.0, %v846
      %v848 = vpop.f32.mrf.mxu0
      %v849 = vpop.f32.mrf.mxu0
      %v850 = vadd.f32 0.0, %v849
      %v851 = vpop.f32.mrf.mxu0
      %852 = vmatprep.mubr.bf16.mxu0 0
      %853 = vmatmul.mubr.bf16.gmra.mxu0 %v560
      %v854 = vpop.f32.mrf.mxu0
      %v855 = vadd.f32 0.0, %v854
      %v856 = vpop.f32.mrf.mxu0
      %v857 = vpop.f32.mrf.mxu0
      %v858 = vadd.f32 0.0, %v857
      %v859 = vpop.f32.mrf.mxu0
      %860 = vmatprep.mubr.bf16.mxu0 0
      %861 = vmatmul.mubr.bf16.gmra.mxu0 %v561
      %v862 = vpop.f32.mrf.mxu0
      %v863 = vadd.f32 0.0, %v862
      %v864 = vpop.f32.mrf.mxu0
      %v865 = vpop.f32.mrf.mxu0
      %v866 = vadd.f32 0.0, %v865
      %v867 = vpop.f32.mrf.mxu0
      %868 = vmatprep.mubr.bf16.mxu0 0
      %869 = vmatmul.mubr.bf16.gmra.mxu0 %v562
      %v870 = vpop.f32.mrf.mxu0
      %v871 = vadd.f32 0.0, %v870
      %v872 = vpop.f32.mrf.mxu0
      %v873 = vpop.f32.mrf.mxu0
      %v874 = vadd.f32 0.0, %v873
      %v875 = vpop.f32.mrf.mxu0
      %876 = vmatprep.mubr.bf16.mxu0 0
      %877 = vmatmul.mubr.bf16.gmra.mxu0 %v563
      %v878 = vpop.f32.mrf.mxu0
      %v879 = vadd.f32 0.0, %v878
      %v880 = vpop.f32.mrf.mxu0
      %v881 = vpop.f32.mrf.mxu0
      %v882 = vadd.f32 0.0, %v881
      %v883 = vpop.f32.mrf.mxu0
      %884 = vmatprep.mubr.bf16.mxu0 0
      %885 = vmatmul.mubr.bf16.gmra.mxu0 %v564
      %v886 = vpop.f32.mrf.mxu0
      %v887 = vadd.f32 0.0, %v886
      %v888 = vpop.f32.mrf.mxu0
      %v889 = vpop.f32.mrf.mxu0
      %v890 = vadd.f32 0.0, %v889
      %v891 = vpop.f32.mrf.mxu0
      %892 = vmatprep.mubr.bf16.mxu0 0
      %893 = vmatmul.mubr.bf16.gmra.mxu0 %v565
      %v894 = vpop.f32.mrf.mxu0
      %v895 = vadd.f32 0.0, %v894
      %v896 = vpop.f32.mrf.mxu0
      %v897 = vpop.f32.mrf.mxu0
      %v898 = vadd.f32 0.0, %v897
      %v899 = vpop.f32.mrf.mxu0
      %900 = vmatprep.mubr.bf16.mxu0 0
      %901 = vmatmul.mubr.bf16.gmra.mxu0 %v566
      %v902 = vpop.f32.mrf.mxu0
      %v903 = vadd.f32 0.0, %v902
      %v904 = vpop.f32.mrf.mxu0
      %v905 = vpop.f32.mrf.mxu0
      %v906 = vadd.f32 0.0, %v905
      %v907 = vpop.f32.mrf.mxu0
      %908 = vmatprep.mubr.bf16.mxu0 0
      %909 = vmatmul.mubr.bf16.gmra.mxu0 %v567
      %v910 = vpop.f32.mrf.mxu0
      %v911 = vadd.f32 0.0, %v910
      %v912 = vpop.f32.mrf.mxu0
      %v913 = vpop.f32.mrf.mxu0
      %v914 = vadd.f32 0.0, %v913
      %v915 = vpop.f32.mrf.mxu0
      %916 = vmatprep.mubr.bf16.mxu0 0
      %917 = vmatmul.mubr.bf16.gmra.mxu0 %v568
      %v918 = vpop.f32.mrf.mxu0
      %v919 = vadd.f32 0.0, %v918
      %v920 = vpop.f32.mrf.mxu0
      %v921 = vpop.f32.mrf.mxu0
      %v922 = vadd.f32 0.0, %v921
      %v923 = vpop.f32.mrf.mxu0
      %924 = vmatprep.mubr.bf16.mxu0 0
      %925 = vmatmul.mubr.bf16.gmra.mxu0 %v569
      %v926 = vpop.f32.mrf.mxu0
      %v927 = vadd.f32 0.0, %v926
      %v928 = vpop.f32.mrf.mxu0
      %v929 = vpop.f32.mrf.mxu0
      %v930 = vadd.f32 0.0, %v929
      %v931 = vpop.f32.mrf.mxu0
      %932 = vmatprep.mubr.bf16.mxu0 0
      %933 = vmatmul.mubr.bf16.gmra.mxu0 %v570
      %v934 = vpop.f32.mrf.mxu0
      %v935 = vadd.f32 0.0, %v934
      %v936 = vpop.f32.mrf.mxu0
      %v937 = vpop.f32.mrf.mxu0
      %v938 = vadd.f32 0.0, %v937
      %v939 = vpop.f32.mrf.mxu0
      %940 = vmatprep.mubr.bf16.mxu0 0
      %941 = vmatmul.mubr.bf16.gmra.mxu0 %v571
      %v942 = vpop.f32.mrf.mxu0
      %v943 = vadd.f32 0.0, %v942
      %v944 = vpop.f32.mrf.mxu0
      %v945 = vpop.f32.mrf.mxu0
      %v946 = vadd.f32 0.0, %v945
      %v947 = vpop.f32.mrf.mxu0
      %948 = vmatprep.mubr.bf16.mxu0 0
      %949 = vmatmul.mubr.bf16.gmra.mxu0 %v572
      %v950 = vpop.f32.mrf.mxu0
      %v951 = vadd.f32 0.0, %v950
      %v952 = vpop.f32.mrf.mxu0
      %v953 = vpop.f32.mrf.mxu0
      %v954 = vadd.f32 0.0, %v953
      %v955 = vpop.f32.mrf.mxu0
      %956 = vmatprep.mubr.bf16.mxu0 0
      %957 = vmatmul.mubr.bf16.gmra.mxu0 %v573
      %v958 = vpop.f32.mrf.mxu0
      %v959 = vadd.f32 0.0, %v958
      %v960 = vpop.f32.mrf.mxu0
      %v961 = vpop.f32.mrf.mxu0
      %v962 = vadd.f32 0.0, %v961
      %v963 = vpop.f32.mrf.mxu0
      %964 = vmatprep.mubr.bf16.mxu0 0
      %965 = vmatmul.mubr.bf16.gmra.mxu0 %v574
      %v966 = vpop.f32.mrf.mxu0
      %v967 = vadd.f32 0.0, %v966
      %v968 = vpop.f32.mrf.mxu0
      %v969 = vpop.f32.mrf.mxu0
      %v970 = vadd.f32 0.0, %v969
      %v971 = vpop.f32.mrf.mxu0
      %972 = vmatprep.mubr.bf16.mxu0 0
      %973 = vmatmul.mubr.bf16.gmra.mxu0 %v575
      %v974 = vpop.f32.mrf.mxu0
      %v975 = vadd.f32 0.0, %v974
      %v976 = vpop.f32.mrf.mxu0
      %v977 = vpop.f32.mrf.mxu0
      %v978 = vadd.f32 0.0, %v977
      %v979 = vpop.f32.mrf.mxu0
      %980 = vmatprep.mubr.bf16.mxu0 0
      %981 = vmatmul.mubr.bf16.gmra.mxu0 %v576
      %v982 = vpop.f32.mrf.mxu0
      %v983 = vadd.f32 0.0, %v982
      %v984 = vpop.f32.mrf.mxu0
      %v985 = vpop.f32.mrf.mxu0
      %v986 = vadd.f32 0.0, %v985
      %v987 = vpop.f32.mrf.mxu0
      %988 = vmatprep.mubr.bf16.mxu0 0
      %989 = vmatmul.mubr.bf16.gmra.mxu0 %v577
      %v990 = vpop.f32.mrf.mxu0
      %v991 = vadd.f32 0.0, %v990
      %v992 = vpop.f32.mrf.mxu0
      %v993 = vpop.f32.mrf.mxu0
      %v994 = vadd.f32 0.0, %v993
      %v995 = vpop.f32.mrf.mxu0
      %996 = vmatprep.mubr.bf16.mxu0 0
      %997 = vmatmul.mubr.bf16.gmra.mxu0 %v578
      %v998 = vpop.f32.mrf.mxu0
      %v999 = vadd.f32 0.0, %v998
      %v1000 = vpop.f32.mrf.mxu0
      %v1001 = vpop.f32.mrf.mxu0
      %v1002 = vadd.f32 0.0, %v1001
      %v1003 = vpop.f32.mrf.mxu0
      %1004 = vmatprep.mubr.bf16.mxu0 0
      %1005 = vmatmul.mubr.bf16.gmra.mxu0 %v579
      %v1006 = vpop.f32.mrf.mxu0
      %v1007 = vadd.f32 0.0, %v1006
      %v1008 = vpop.f32.mrf.mxu0
      %v1009 = vpop.f32.mrf.mxu0
      %v1010 = vadd.f32 0.0, %v1009
      %v1011 = vpop.f32.mrf.mxu0
      %1012 = vmatprep.mubr.bf16.mxu0 0
      %1013 = vmatmul.mubr.bf16.gmra.mxu0 %v580
      %v1014 = vpop.f32.mrf.mxu0
      %v1015 = vadd.f32 0.0, %v1014
      %v1016 = vpop.f32.mrf.mxu0
      %v1017 = vpop.f32.mrf.mxu0
      %v1018 = vadd.f32 0.0, %v1017
      %v1019 = vpop.f32.mrf.mxu0
      %1020 = vmatprep.mubr.bf16.mxu0 0
      %1021 = vmatmul.mubr.bf16.gmra.mxu0 %v581
      %v1022 = vpop.f32.mrf.mxu0
      %v1023 = vadd.f32 0.0, %v1022
      %v1024 = vpop.f32.mrf.mxu0
      %v1025 = vpop.f32.mrf.mxu0
      %v1026 = vadd.f32 0.0, %v1025
      %v1027 = vpop.f32.mrf.mxu0
      %1028 = vmatprep.mubr.bf16.mxu0 0
      %1029 = vmatmul.mubr.bf16.gmra.mxu0 %v582
      %v1030 = vpop.f32.mrf.mxu0
      %v1031 = vadd.f32 0.0, %v1030
      %v1032 = vpop.f32.mrf.mxu0
      %v1033 = vpop.f32.mrf.mxu0
      %v1034 = vadd.f32 0.0, %v1033
      %v1035 = vpop.f32.mrf.mxu0
      %1036 = vmatprep.mubr.bf16.mxu0 0
      %1037 = vmatmul.mubr.bf16.gmra.mxu0 %v583
      %v1038 = vpop.f32.mrf.mxu0
      %v1039 = vadd.f32 0.0, %v1038
      %v1040 = vpop.f32.mrf.mxu0
      %v1041 = vpop.f32.mrf.mxu0
      %v1042 = vadd.f32 0.0, %v1041
      %v1043 = vpop.f32.mrf.mxu0
      %1044 = vmatprep.mubr.bf16.mxu0 0
      %1045 = vmatmul.mubr.bf16.gmra.mxu0 %v584
      %v1046 = vpop.f32.mrf.mxu0
      %v1047 = vadd.f32 0.0, %v1046
      %v1048 = vpop.f32.mrf.mxu0
      %v1049 = vpop.f32.mrf.mxu0
      %v1050 = vadd.f32 0.0, %v1049
      %v1051 = vpop.f32.mrf.mxu0
      %1052 = vmatprep.mubr.bf16.mxu0 0
      %1053 = vmatmul.mubr.bf16.gmra.mxu0 %v585
      %v1054 = vpop.f32.mrf.mxu0
      %v1055 = vadd.f32 0.0, %v1054
      %v1056 = vpop.f32.mrf.mxu0
      %v1057 = vpop.f32.mrf.mxu0
      %v1058 = vadd.f32 0.0, %v1057
      %v1059 = vpop.f32.mrf.mxu0
      %1060 = vmatprep.mubr.bf16.mxu0 0
      %1061 = vmatmul.mubr.bf16.gmra.mxu0 %v586
      %v1062 = vpop.f32.mrf.mxu0
      %v1063 = vadd.f32 0.0, %v1062
      %v1064 = vpop.f32.mrf.mxu0
      %v1065 = vpop.f32.mrf.mxu0
      %v1066 = vadd.f32 0.0, %v1065
      %v1067 = vpop.f32.mrf.mxu0
      %1068 = vmatprep.mubr.bf16.mxu0 0
      %1069 = vmatmul.mubr.bf16.gmra.mxu0 %v587
      %v1070 = vpop.f32.mrf.mxu0
      %v1071 = vadd.f32 0.0, %v1070
      %v1072 = vpop.f32.mrf.mxu0
      %v1073 = vpop.f32.mrf.mxu0
      %v1074 = vadd.f32 0.0, %v1073
      %v1075 = vpop.f32.mrf.mxu0
      %1076 = vmatprep.mubr.bf16.mxu0 0
      %1077 = vmatmul.mubr.bf16.gmra.mxu0 %v588
      %v1078 = vpop.f32.mrf.mxu0
      %v1079 = vadd.f32 0.0, %v1078
      %v1080 = vpop.f32.mrf.mxu0
      %v1081 = vpop.f32.mrf.mxu0
      %v1082 = vadd.f32 0.0, %v1081
      %v1083 = vpop.f32.mrf.mxu0
      %1084 = vmatprep.mubr.bf16.mxu0 0
      %1085 = vmatmul.mubr.bf16.gmra.mxu0 %v589
      %v1086 = vpop.f32.mrf.mxu0
      %v1087 = vadd.f32 0.0, %v1086
      %v1088 = vpop.f32.mrf.mxu0
      %v1089 = vpop.f32.mrf.mxu0
      %v1090 = vadd.f32 0.0, %v1089
      %v1091 = vpop.f32.mrf.mxu0
      %1092 = vmatprep.mubr.bf16.mxu0 0
      %1093 = vmatmul.mubr.bf16.gmra.mxu0 %v590
      %v1094 = vpop.f32.mrf.mxu0
      %v1095 = vadd.f32 0.0, %v1094
      %v1096 = vpop.f32.mrf.mxu0
      %v1097 = vpop.f32.mrf.mxu0
      %v1098 = vadd.f32 0.0, %v1097
      %v1099 = vpop.f32.mrf.mxu0
      %1100 = vmatprep.mubr.bf16.mxu0 0
      %1101 = vmatmul.mubr.bf16.gmra.mxu0 %v591
      %v1102 = vpop.f32.mrf.mxu0
      %v1103 = vadd.f32 0.0, %v1102
      %v1104 = vpop.f32.mrf.mxu0
      %v1105 = vpop.f32.mrf.mxu0
      %v1106 = vadd.f32 0.0, %v1105
      %v1107 = vpop.f32.mrf.mxu0
      %1108 = vmatprep.mubr.bf16.mxu0 0
      %1109 = vmatmul.mubr.bf16.gmra.mxu0 %v592
      %v1110 = vpop.f32.mrf.mxu0
      %v1111 = vadd.f32 0.0, %v1110
      %v1112 = vpop.f32.mrf.mxu0
      %v1113 = vpop.f32.mrf.mxu0
      %v1114 = vadd.f32 0.0, %v1113
      %v1115 = vpop.f32.mrf.mxu0
      %1116 = vmatprep.mubr.bf16.mxu0 0
      %1117 = vmatmul.mubr.bf16.gmra.mxu0 %v593
      %v1118 = vpop.f32.mrf.mxu0
      %v1119 = vadd.f32 0.0, %v1118
      %v1120 = vpop.f32.mrf.mxu0
      %v1121 = vpop.f32.mrf.mxu0
      %v1122 = vadd.f32 0.0, %v1121
      %v1123 = vpop.f32.mrf.mxu0
      %1124 = vmatprep.mubr.bf16.mxu0 0
      %1125 = vmatmul.mubr.bf16.gmra.mxu0 %v594
      %v1126 = vpop.f32.mrf.mxu0
      %v1127 = vadd.f32 0.0, %v1126
      %v1128 = vpop.f32.mrf.mxu0
      %v1129 = vpop.f32.mrf.mxu0
      %v1130 = vadd.f32 0.0, %v1129
      %v1131 = vpop.f32.mrf.mxu0
      %1132 = vmatprep.mubr.bf16.mxu0 0
      %1133 = vmatmul.mubr.bf16.gmra.mxu0 %v595
      %v1134 = vpop.f32.mrf.mxu0
      %v1135 = vadd.f32 0.0, %v1134
      %v1136 = vpop.f32.mrf.mxu0
      %v1137 = vpop.f32.mrf.mxu0
      %v1138 = vadd.f32 0.0, %v1137
      %v1139 = vpop.f32.mrf.mxu0
      %1140 = vmatprep.mubr.bf16.mxu0 0
      %1141 = vmatmul.mubr.bf16.gmra.mxu0 %v596
      %v1142 = vpop.f32.mrf.mxu0
      %v1143 = vadd.f32 0.0, %v1142
      %v1144 = vpop.f32.mrf.mxu0
      %v1145 = vpop.f32.mrf.mxu0
      %v1146 = vadd.f32 0.0, %v1145
      %v1147 = vpop.f32.mrf.mxu0
      %1148 = vmatprep.mubr.bf16.mxu0 0
      %1149 = vmatmul.mubr.bf16.gmra.mxu0 %v597
      %v1150 = vpop.f32.mrf.mxu0
      %v1151 = vadd.f32 0.0, %v1150
      %v1152 = vpop.f32.mrf.mxu0
      %v1153 = vpop.f32.mrf.mxu0
      %v1154 = vadd.f32 0.0, %v1153
      %v1155 = vpop.f32.mrf.mxu0
      %1156 = vmatprep.mubr.bf16.mxu0 0
      %1157 = vmatmul.mubr.bf16.gmra.mxu0 %v598
      %v1158 = vpop.f32.mrf.mxu0
      %v1159 = vadd.f32 0.0, %v1158
      %v1160 = vpop.f32.mrf.mxu0
      %v1161 = vpop.f32.mrf.mxu0
      %v1162 = vadd.f32 0.0, %v1161
      %v1163 = vpop.f32.mrf.mxu0
      %1164 = vmatprep.mubr.bf16.mxu0 0
      %1165 = vmatmul.mubr.bf16.gmra.mxu0 %v599
      %v1166 = vpop.f32.mrf.mxu0
      %v1167 = vadd.f32 0.0, %v1166
      %v1168 = vpop.f32.mrf.mxu0
      %v1169 = vpop.f32.mrf.mxu0
      %v1170 = vadd.f32 0.0, %v1169
      %v1171 = vpop.f32.mrf.mxu0
      %1172 = vmatprep.mubr.bf16.mxu0 0
      %1173 = vmatmul.mubr.bf16.gmra.mxu0 %v600
      %v1174 = vpop.f32.mrf.mxu0
      %v1175 = vadd.f32 0.0, %v1174
      %v1176 = vpop.f32.mrf.mxu0
      %v1177 = vpop.f32.mrf.mxu0
      %v1178 = vadd.f32 0.0, %v1177
      %v1179 = vpop.f32.mrf.mxu0
      %1180 = vmatprep.mubr.bf16.mxu0 0
      %1181 = vmatmul.mubr.bf16.gmra.mxu0 %v601
      %v1182 = vpop.f32.mrf.mxu0
      %v1183 = vadd.f32 0.0, %v1182
      %v1184 = vpop.f32.mrf.mxu0
      %v1185 = vpop.f32.mrf.mxu0
      %v1186 = vadd.f32 0.0, %v1185
      %v1187 = vpop.f32.mrf.mxu0
      %1188 = vmatprep.mubr.bf16.mxu0 0
      %1189 = vmatmul.mubr.bf16.gmra.mxu0 %v602
      %v1190 = vpop.f32.mrf.mxu0
      %v1191 = vadd.f32 0.0, %v1190
      %v1192 = vpop.f32.mrf.mxu0
      %v1193 = vpop.f32.mrf.mxu0
      %v1194 = vadd.f32 0.0, %v1193
      %v1195 = vpop.f32.mrf.mxu0
      %1196 = vmatprep.mubr.bf16.mxu0 0
      %1197 = vmatmul.mubr.bf16.gmra.mxu0 %v603
      %v1198 = vpop.f32.mrf.mxu0
      %v1199 = vadd.f32 0.0, %v1198
      %v1200 = vpop.f32.mrf.mxu0
      %v1201 = vpop.f32.mrf.mxu0
      %v1202 = vadd.f32 0.0, %v1201
      %v1203 = vpop.f32.mrf.mxu0
      %1204 = vmatprep.mubr.bf16.mxu0 0
      %1205 = vmatmul.mubr.bf16.gmra.mxu0 %v604
      %v1206 = vpop.f32.mrf.mxu0
      %v1207 = vadd.f32 0.0, %v1206
      %v1208 = vpop.f32.mrf.mxu0
      %v1209 = vpop.f32.mrf.mxu0
      %v1210 = vadd.f32 0.0, %v1209
      %v1211 = vpop.f32.mrf.mxu0
      %1212 = vmatprep.mubr.bf16.mxu0 0
      %1213 = vmatmul.mubr.bf16.gmra.mxu0 %v605
      %v1214 = vpop.f32.mrf.mxu0
      %v1215 = vadd.f32 0.0, %v1214
      %v1216 = vpop.f32.mrf.mxu0
      %v1217 = vpop.f32.mrf.mxu0
      %v1218 = vadd.f32 0.0, %v1217
      %v1219 = vpop.f32.mrf.mxu0
      %1220 = vmatprep.mubr.bf16.mxu0 0
      %1221 = vmatmul.mubr.bf16.gmra.mxu0 %v606
      %v1222 = vpop.f32.mrf.mxu0
      %v1223 = vadd.f32 0.0, %v1222
      %v1224 = vpop.f32.mrf.mxu0
      %v1225 = vpop.f32.mrf.mxu0
      %v1226 = vadd.f32 0.0, %v1225
      %v1227 = vpop.f32.mrf.mxu0
      %1228 = vmatprep.mubr.bf16.mxu0 0
      %1229 = vmatmul.mubr.bf16.gmra.mxu0 %v607
      %v1230 = vpop.f32.mrf.mxu0
      %v1231 = vadd.f32 0.0, %v1230
      %v1232 = vpop.f32.mrf.mxu0
      %v1233 = vpop.f32.mrf.mxu0
      %v1234 = vadd.f32 0.0, %v1233
      %v1235 = vpop.f32.mrf.mxu0
      %1236 = vmatprep.mubr.bf16.mxu0 0
      %1237 = vmatmul.mubr.bf16.gmra.mxu0 %v608
      %v1238 = vpop.f32.mrf.mxu0
      %v1239 = vadd.f32 0.0, %v1238
      %v1240 = vpop.f32.mrf.mxu0
      %v1241 = vpop.f32.mrf.mxu0
      %v1242 = vadd.f32 0.0, %v1241
      %v1243 = vpop.f32.mrf.mxu0
      %1244 = vmatprep.mubr.bf16.mxu0 0
      %1245 = vmatmul.mubr.bf16.gmra.mxu0 %v609
      %v1246 = vpop.f32.mrf.mxu0
      %v1247 = vadd.f32 0.0, %v1246
      %v1248 = vpop.f32.mrf.mxu0
      %v1249 = vpop.f32.mrf.mxu0
      %v1250 = vadd.f32 0.0, %v1249
      %v1251 = vpop.f32.mrf.mxu0
      %1252 = vmatprep.mubr.bf16.mxu0 0
      %1253 = vmatmul.mubr.bf16.gmra.mxu0 %v610
      %v1254 = vpop.f32.mrf.mxu0
      %v1255 = vadd.f32 0.0, %v1254
      %v1256 = vpop.f32.mrf.mxu0
      %v1257 = vpop.f32.mrf.mxu0
      %v1258 = vadd.f32 0.0, %v1257
      %v1259 = vpop.f32.mrf.mxu0
      %1260 = vmatprep.mubr.bf16.mxu0 0
      %1261 = vmatmul.mubr.bf16.gmra.mxu0 %v611
      %v1262 = vpop.f32.mrf.mxu0
      %v1263 = vadd.f32 0.0, %v1262
      %v1264 = vpop.f32.mrf.mxu0
      %v1265 = vpop.f32.mrf.mxu0
      %v1266 = vadd.f32 0.0, %v1265
      %v1267 = vpop.f32.mrf.mxu0
      %1268 = vdwg.mxu0
      %v1269 = vmul.f32 %v759, 0.2
      %v1270 = vmul.f32 %v762, 0.2
      %v1271 = vmul.f32 %v767, 0.2
      %v1272 = vmul.f32 %v770, 0.2
      %v1273 = vmul.f32 %v775, 0.2
      %v1274 = vmul.f32 %v778, 0.2
      %v1275 = vmul.f32 %v783, 0.2
      %v1276 = vmul.f32 %v786, 0.2
      %v1277 = vmul.f32 %v791, 0.2
      %v1278 = vmul.f32 %v794, 0.2
      %v1279 = vmul.f32 %v799, 0.2
      %v1280 = vmul.f32 %v802, 0.2
      %v1281 = vmul.f32 %v807, 0.2
      %v1282 = vmul.f32 %v810, 0.2
      %v1283 = vmul.f32 %v815, 0.2
      %v1284 = vmul.f32 %v818, 0.2
      %v1285 = vmul.f32 %v823, 0.2
      %v1286 = vmul.f32 %v826, 0.2
      %v1287 = vmul.f32 %v831, 0.2
      %v1288 = vmul.f32 %v834, 0.2
      %v1289 = vmul.f32 %v839, 0.2
      %v1290 = vmul.f32 %v842, 0.2
      %v1291 = vmul.f32 %v847, 0.2
      %v1292 = vmul.f32 %v850, 0.2
      %v1293 = vmul.f32 %v855, 0.2
      %v1294 = vmul.f32 %v858, 0.2
      %v1295 = vmul.f32 %v863, 0.2
      %v1296 = vmul.f32 %v866, 0.2
      %v1297 = vmul.f32 %v871, 0.2
      %v1298 = vmul.f32 %v874, 0.2
      %v1299 = vmul.f32 %v879, 0.2
      %v1300 = vmul.f32 %v882, 0.2
      %v1301 = vmul.f32 %v887, 0.2
      %v1302 = vmul.f32 %v890, 0.2
      %v1303 = vmul.f32 %v895, 0.2
      %v1304 = vmul.f32 %v898, 0.2
      %v1305 = vmul.f32 %v903, 0.2
      %v1306 = vmul.f32 %v906, 0.2
      %v1307 = vmul.f32 %v911, 0.2
      %v1308 = vmul.f32 %v914, 0.2
      %v1309 = vmul.f32 %v919, 0.2
      %v1310 = vmul.f32 %v922, 0.2
      %v1311 = vmul.f32 %v927, 0.2
      %v1312 = vmul.f32 %v930, 0.2
      %v1313 = vmul.f32 %v935, 0.2
      %v1314 = vmul.f32 %v938, 0.2
      %v1315 = vmul.f32 %v943, 0.2
      %v1316 = vmul.f32 %v946, 0.2
      %v1317 = vmul.f32 %v951, 0.2
      %v1318 = vmul.f32 %v954, 0.2
      %v1319 = vmul.f32 %v959, 0.2
      %v1320 = vmul.f32 %v962, 0.2
      %v1321 = vmul.f32 %v967, 0.2
      %v1322 = vmul.f32 %v970, 0.2
      %v1323 = vmul.f32 %v975, 0.2
      %v1324 = vmul.f32 %v978, 0.2
      %v1325 = vmul.f32 %v983, 0.2
      %v1326 = vmul.f32 %v986, 0.2
      %v1327 = vmul.f32 %v991, 0.2
      %v1328 = vmul.f32 %v994, 0.2
      %v1329 = vmul.f32 %v999, 0.2
      %v1330 = vmul.f32 %v1002, 0.2
      %v1331 = vmul.f32 %v1007, 0.2
      %v1332 = vmul.f32 %v1010, 0.2
      %v1333 = vmul.f32 %v1015, 0.2
      %v1334 = vmul.f32 %v1018, 0.2
      %v1335 = vmul.f32 %v1023, 0.2
      %v1336 = vmul.f32 %v1026, 0.2
      %v1337 = vmul.f32 %v1031, 0.2
      %v1338 = vmul.f32 %v1034, 0.2
      %v1339 = vmul.f32 %v1039, 0.2
      %v1340 = vmul.f32 %v1042, 0.2
      %v1341 = vmul.f32 %v1047, 0.2
      %v1342 = vmul.f32 %v1050, 0.2
      %v1343 = vmul.f32 %v1055, 0.2
      %v1344 = vmul.f32 %v1058, 0.2
      %v1345 = vmul.f32 %v1063, 0.2
      %v1346 = vmul.f32 %v1066, 0.2
      %v1347 = vmul.f32 %v1071, 0.2
      %v1348 = vmul.f32 %v1074, 0.2
      %v1349 = vmul.f32 %v1079, 0.2
      %v1350 = vmul.f32 %v1082, 0.2
      %v1351 = vmul.f32 %v1087, 0.2
      %v1352 = vmul.f32 %v1090, 0.2
      %v1353 = vmul.f32 %v1095, 0.2
      %v1354 = vmul.f32 %v1098, 0.2
      %v1355 = vmul.f32 %v1103, 0.2
      %v1356 = vmul.f32 %v1106, 0.2
      %v1357 = vmul.f32 %v1111, 0.2
      %v1358 = vmul.f32 %v1114, 0.2
      %v1359 = vmul.f32 %v1119, 0.2
      %v1360 = vmul.f32 %v1122, 0.2
      %v1361 = vmul.f32 %v1127, 0.2
      %v1362 = vmul.f32 %v1130, 0.2
      %v1363 = vmul.f32 %v1135, 0.2
      %v1364 = vmul.f32 %v1138, 0.2
      %v1365 = vmul.f32 %v1143, 0.2
      %v1366 = vmul.f32 %v1146, 0.2
      %v1367 = vmul.f32 %v1151, 0.2
      %v1368 = vmul.f32 %v1154, 0.2
      %v1369 = vmul.f32 %v1159, 0.2
      %v1370 = vmul.f32 %v1162, 0.2
      %v1371 = vmul.f32 %v1167, 0.2
      %v1372 = vmul.f32 %v1170, 0.2
      %v1373 = vmul.f32 %v1175, 0.2
      %v1374 = vmul.f32 %v1178, 0.2
      %v1375 = vmul.f32 %v1183, 0.2
      %v1376 = vmul.f32 %v1186, 0.2
      %v1377 = vmul.f32 %v1191, 0.2
      %v1378 = vmul.f32 %v1194, 0.2
      %v1379 = vmul.f32 %v1199, 0.2
      %v1380 = vmul.f32 %v1202, 0.2
      %v1381 = vmul.f32 %v1207, 0.2
      %v1382 = vmul.f32 %v1210, 0.2
      %v1383 = vmul.f32 %v1215, 0.2
      %v1384 = vmul.f32 %v1218, 0.2
      %v1385 = vmul.f32 %v1223, 0.2
      %v1386 = vmul.f32 %v1226, 0.2
      %v1387 = vmul.f32 %v1231, 0.2
      %v1388 = vmul.f32 %v1234, 0.2
      %v1389 = vmul.f32 %v1239, 0.2
      %v1390 = vmul.f32 %v1242, 0.2
      %v1391 = vmul.f32 %v1247, 0.2
      %v1392 = vmul.f32 %v1250, 0.2
      %v1393 = vmul.f32 %v1255, 0.2
      %v1394 = vmul.f32 %v1258, 0.2
      %v1395 = vmul.f32 %v1263, 0.2
      %v1396 = vmul.f32 %v1266, 0.2
      %v1397 = vmax.f32 %v759, %v1269
      %v1398 = vmax.f32 %v762, %v1270
      %v1399 = vmax.f32 %v767, %v1271
      %v1400 = vmax.f32 %v770, %v1272
      %v1401 = vmax.f32 %v775, %v1273
      %v1402 = vmax.f32 %v778, %v1274
      %v1403 = vmax.f32 %v783, %v1275
      %v1404 = vmax.f32 %v786, %v1276
      %v1405 = vmax.f32 %v791, %v1277
      %v1406 = vmax.f32 %v794, %v1278
      %v1407 = vmax.f32 %v799, %v1279
      %v1408 = vmax.f32 %v802, %v1280
      %v1409 = vmax.f32 %v807, %v1281
      %v1410 = vmax.f32 %v810, %v1282
      %v1411 = vmax.f32 %v815, %v1283
      %v1412 = vmax.f32 %v818, %v1284
      %v1413 = vmax.f32 %v823, %v1285
      %v1414 = vmax.f32 %v826, %v1286
      %v1415 = vmax.f32 %v831, %v1287
      %v1416 = vmax.f32 %v834, %v1288
      %v1417 = vmax.f32 %v839, %v1289
      %v1418 = vmax.f32 %v842, %v1290
      %v1419 = vmax.f32 %v847, %v1291
      %v1420 = vmax.f32 %v850, %v1292
      %v1421 = vmax.f32 %v855, %v1293
      %v1422 = vmax.f32 %v858, %v1294
      %v1423 = vmax.f32 %v863, %v1295
      %v1424 = vmax.f32 %v866, %v1296
      %v1425 = vmax.f32 %v871, %v1297
      %v1426 = vmax.f32 %v874, %v1298
      %v1427 = vmax.f32 %v879, %v1299
      %v1428 = vmax.f32 %v882, %v1300
      %v1429 = vmax.f32 %v887, %v1301
      %v1430 = vmax.f32 %v890, %v1302
      %v1431 = vmax.f32 %v895, %v1303
      %v1432 = vmax.f32 %v898, %v1304
      %v1433 = vmax.f32 %v903, %v1305
      %v1434 = vmax.f32 %v906, %v1306
      %v1435 = vmax.f32 %v911, %v1307
      %v1436 = vmax.f32 %v914, %v1308
      %v1437 = vmax.f32 %v919, %v1309
      %v1438 = vmax.f32 %v922, %v1310
      %v1439 = vmax.f32 %v927, %v1311
      %v1440 = vmax.f32 %v930, %v1312
      %v1441 = vmax.f32 %v935, %v1313
      %v1442 = vmax.f32 %v938, %v1314
      %v1443 = vmax.f32 %v943, %v1315
      %v1444 = vmax.f32 %v946, %v1316
      %v1445 = vmax.f32 %v951, %v1317
      %v1446 = vmax.f32 %v954, %v1318
      %v1447 = vmax.f32 %v959, %v1319
      %v1448 = vmax.f32 %v962, %v1320
      %v1449 = vmax.f32 %v967, %v1321
      %v1450 = vmax.f32 %v970, %v1322
      %v1451 = vmax.f32 %v975, %v1323
      %v1452 = vmax.f32 %v978, %v1324
      %v1453 = vmax.f32 %v983, %v1325
      %v1454 = vmax.f32 %v986, %v1326
      %v1455 = vmax.f32 %v991, %v1327
      %v1456 = vmax.f32 %v994, %v1328
      %v1457 = vmax.f32 %v999, %v1329
      %v1458 = vmax.f32 %v1002, %v1330
      %v1459 = vmax.f32 %v1007, %v1331
      %v1460 = vmax.f32 %v1010, %v1332
      %v1461 = vmax.f32 %v1015, %v1333
      %v1462 = vmax.f32 %v1018, %v1334
      %v1463 = vmax.f32 %v1023, %v1335
      %v1464 = vmax.f32 %v1026, %v1336
      %v1465 = vmax.f32 %v1031, %v1337
      %v1466 = vmax.f32 %v1034, %v1338
      %v1467 = vmax.f32 %v1039, %v1339
      %v1468 = vmax.f32 %v1042, %v1340
      %v1469 = vmax.f32 %v1047, %v1341
      %v1470 = vmax.f32 %v1050, %v1342
      %v1471 = vmax.f32 %v1055, %v1343
      %v1472 = vmax.f32 %v1058, %v1344
      %v1473 = vmax.f32 %v1063, %v1345
      %v1474 = vmax.f32 %v1066, %v1346
      %v1475 = vmax.f32 %v1071, %v1347
      %v1476 = vmax.f32 %v1074, %v1348
      %v1477 = vmax.f32 %v1079, %v1349
      %v1478 = vmax.f32 %v1082, %v1350
      %v1479 = vmax.f32 %v1087, %v1351
      %v1480 = vmax.f32 %v1090, %v1352
      %v1481 = vmax.f32 %v1095, %v1353
      %v1482 = vmax.f32 %v1098, %v1354
      %v1483 = vmax.f32 %v1103, %v1355
      %v1484 = vmax.f32 %v1106, %v1356
      %v1485 = vmax.f32 %v1111, %v1357
      %v1486 = vmax.f32 %v1114, %v1358
      %v1487 = vmax.f32 %v1119, %v1359
      %v1488 = vmax.f32 %v1122, %v1360
      %v1489 = vmax.f32 %v1127, %v1361
      %v1490 = vmax.f32 %v1130, %v1362
      %v1491 = vmax.f32 %v1135, %v1363
      %v1492 = vmax.f32 %v1138, %v1364
      %v1493 = vmax.f32 %v1143, %v1365
      %v1494 = vmax.f32 %v1146, %v1366
      %v1495 = vmax.f32 %v1151, %v1367
      %v1496 = vmax.f32 %v1154, %v1368
      %v1497 = vmax.f32 %v1159, %v1369
      %v1498 = vmax.f32 %v1162, %v1370
      %v1499 = vmax.f32 %v1167, %v1371
      %v1500 = vmax.f32 %v1170, %v1372
      %v1501 = vmax.f32 %v1175, %v1373
      %v1502 = vmax.f32 %v1178, %v1374
      %v1503 = vmax.f32 %v1183, %v1375
      %v1504 = vmax.f32 %v1186, %v1376
      %v1505 = vmax.f32 %v1191, %v1377
      %v1506 = vmax.f32 %v1194, %v1378
      %v1507 = vmax.f32 %v1199, %v1379
      %v1508 = vmax.f32 %v1202, %v1380
      %v1509 = vmax.f32 %v1207, %v1381
      %v1510 = vmax.f32 %v1210, %v1382
      %v1511 = vmax.f32 %v1215, %v1383
      %v1512 = vmax.f32 %v1218, %v1384
      %v1513 = vmax.f32 %v1223, %v1385
      %v1514 = vmax.f32 %v1226, %v1386
      %v1515 = vmax.f32 %v1231, %v1387
      %v1516 = vmax.f32 %v1234, %v1388
      %v1517 = vmax.f32 %v1239, %v1389
      %v1518 = vmax.f32 %v1242, %v1390
      %v1519 = vmax.f32 %v1247, %v1391
      %v1520 = vmax.f32 %v1250, %v1392
      %v1521 = vmax.f32 %v1255, %v1393
      %v1522 = vmax.f32 %v1258, %v1394
      %v1523 = vmax.f32 %v1263, %v1395
      %v1524 = vmax.f32 %v1266, %v1396
      %v1525 = vpack.c.bf16 %v1398, %v1397
      %v1526 = vpack.c.bf16 %v1400, %v1399
      %v1527 = vpack.c.bf16 %v1402, %v1401
      %v1528 = vpack.c.bf16 %v1404, %v1403
      %v1529 = vpack.c.bf16 %v1406, %v1405
      %v1530 = vpack.c.bf16 %v1408, %v1407
      %v1531 = vpack.c.bf16 %v1410, %v1409
      %v1532 = vpack.c.bf16 %v1412, %v1411
      %v1533 = vpack.c.bf16 %v1414, %v1413
      %v1534 = vpack.c.bf16 %v1416, %v1415
      %v1535 = vpack.c.bf16 %v1418, %v1417
      %v1536 = vpack.c.bf16 %v1420, %v1419
      %v1537 = vpack.c.bf16 %v1422, %v1421
      %v1538 = vpack.c.bf16 %v1424, %v1423
      %v1539 = vpack.c.bf16 %v1426, %v1425
      %v1540 = vpack.c.bf16 %v1428, %v1427
      %v1541 = vpack.c.bf16 %v1430, %v1429
      %v1542 = vpack.c.bf16 %v1432, %v1431
      %v1543 = vpack.c.bf16 %v1434, %v1433
      %v1544 = vpack.c.bf16 %v1436, %v1435
      %v1545 = vpack.c.bf16 %v1438, %v1437
      %v1546 = vpack.c.bf16 %v1440, %v1439
      %v1547 = vpack.c.bf16 %v1442, %v1441
      %v1548 = vpack.c.bf16 %v1444, %v1443
      %v1549 = vpack.c.bf16 %v1446, %v1445
      %v1550 = vpack.c.bf16 %v1448, %v1447
      %v1551 = vpack.c.bf16 %v1450, %v1449
      %v1552 = vpack.c.bf16 %v1452, %v1451
      %v1553 = vpack.c.bf16 %v1454, %v1453
      %v1554 = vpack.c.bf16 %v1456, %v1455
      %v1555 = vpack.c.bf16 %v1458, %v1457
      %v1556 = vpack.c.bf16 %v1460, %v1459
      %v1557 = vpack.c.bf16 %v1462, %v1461
      %v1558 = vpack.c.bf16 %v1464, %v1463
      %v1559 = vpack.c.bf16 %v1466, %v1465
      %v1560 = vpack.c.bf16 %v1468, %v1467
      %v1561 = vpack.c.bf16 %v1470, %v1469
      %v1562 = vpack.c.bf16 %v1472, %v1471
      %v1563 = vpack.c.bf16 %v1474, %v1473
      %v1564 = vpack.c.bf16 %v1476, %v1475
      %v1565 = vpack.c.bf16 %v1478, %v1477
      %v1566 = vpack.c.bf16 %v1480, %v1479
      %v1567 = vpack.c.bf16 %v1482, %v1481
      %v1568 = vpack.c.bf16 %v1484, %v1483
      %v1569 = vpack.c.bf16 %v1486, %v1485
      %v1570 = vpack.c.bf16 %v1488, %v1487
      %v1571 = vpack.c.bf16 %v1490, %v1489
      %v1572 = vpack.c.bf16 %v1492, %v1491
      %v1573 = vpack.c.bf16 %v1494, %v1493
      %v1574 = vpack.c.bf16 %v1496, %v1495
      %v1575 = vpack.c.bf16 %v1498, %v1497
      %v1576 = vpack.c.bf16 %v1500, %v1499
      %v1577 = vpack.c.bf16 %v1502, %v1501
      %v1578 = vpack.c.bf16 %v1504, %v1503
      %v1579 = vpack.c.bf16 %v1506, %v1505
      %v1580 = vpack.c.bf16 %v1508, %v1507
      %v1581 = vpack.c.bf16 %v1510, %v1509
      %v1582 = vpack.c.bf16 %v1512, %v1511
      %v1583 = vpack.c.bf16 %v1514, %v1513
      %v1584 = vpack.c.bf16 %v1516, %v1515
      %v1585 = vpack.c.bf16 %v1518, %v1517
      %v1586 = vpack.c.bf16 %v1520, %v1519
      %v1587 = vpack.c.bf16 %v1522, %v1521
      %v1588 = vpack.c.bf16 %v1524, %v1523
      %v1653 = vunpack.c.l.b16 %v1525
      %v1654 = vunpack.c.h.b16 %v1525
      %v1655 = vunpack.c.l.b16 %v1526
      %v1656 = vunpack.c.h.b16 %v1526
      %v1657 = vunpack.c.l.b16 %v1527
      %v1658 = vunpack.c.h.b16 %v1527
      %v1659 = vunpack.c.l.b16 %v1528
      %v1660 = vunpack.c.h.b16 %v1528
      %v1661 = vunpack.c.l.b16 %v1529
      %v1662 = vunpack.c.h.b16 %v1529
      %v1663 = vunpack.c.l.b16 %v1530
      %v1664 = vunpack.c.h.b16 %v1530
      %v1665 = vunpack.c.l.b16 %v1531
      %v1666 = vunpack.c.h.b16 %v1531
      %v1667 = vunpack.c.l.b16 %v1532
      %v1668 = vunpack.c.h.b16 %v1532
      %v1669 = vunpack.c.l.b16 %v1533
      %v1670 = vunpack.c.h.b16 %v1533
      %v1671 = vunpack.c.l.b16 %v1534
      %v1672 = vunpack.c.h.b16 %v1534
      %v1673 = vunpack.c.l.b16 %v1535
      %v1674 = vunpack.c.h.b16 %v1535
      %v1675 = vunpack.c.l.b16 %v1536
      %v1676 = vunpack.c.h.b16 %v1536
      %v1677 = vunpack.c.l.b16 %v1537
      %v1678 = vunpack.c.h.b16 %v1537
      %v1679 = vunpack.c.l.b16 %v1538
      %v1680 = vunpack.c.h.b16 %v1538
      %v1681 = vunpack.c.l.b16 %v1539
      %v1682 = vunpack.c.h.b16 %v1539
      %v1683 = vunpack.c.l.b16 %v1540
      %v1684 = vunpack.c.h.b16 %v1540
      %v1685 = vunpack.c.l.b16 %v1541
      %v1686 = vunpack.c.h.b16 %v1541
      %v1687 = vunpack.c.l.b16 %v1542
      %v1688 = vunpack.c.h.b16 %v1542
      %v1689 = vunpack.c.l.b16 %v1543
      %v1690 = vunpack.c.h.b16 %v1543
      %v1691 = vunpack.c.l.b16 %v1544
      %v1692 = vunpack.c.h.b16 %v1544
      %v1693 = vunpack.c.l.b16 %v1545
      %v1694 = vunpack.c.h.b16 %v1545
      %v1695 = vunpack.c.l.b16 %v1546
      %v1696 = vunpack.c.h.b16 %v1546
      %v1697 = vunpack.c.l.b16 %v1547
      %v1698 = vunpack.c.h.b16 %v1547
      %v1699 = vunpack.c.l.b16 %v1548
      %v1700 = vunpack.c.h.b16 %v1548
      %v1701 = vunpack.c.l.b16 %v1549
      %v1702 = vunpack.c.h.b16 %v1549
      %v1703 = vunpack.c.l.b16 %v1550
      %v1704 = vunpack.c.h.b16 %v1550
      %v1705 = vunpack.c.l.b16 %v1551
      %v1706 = vunpack.c.h.b16 %v1551
      %v1707 = vunpack.c.l.b16 %v1552
      %v1708 = vunpack.c.h.b16 %v1552
      %v1709 = vunpack.c.l.b16 %v1553
      %v1710 = vunpack.c.h.b16 %v1553
      %v1711 = vunpack.c.l.b16 %v1554
      %v1712 = vunpack.c.h.b16 %v1554
      %v1713 = vunpack.c.l.b16 %v1555
      %v1714 = vunpack.c.h.b16 %v1555
      %v1715 = vunpack.c.l.b16 %v1556
      %v1716 = vunpack.c.h.b16 %v1556
      %v1717 = vunpack.c.l.b16 %v1557
      %v1718 = vunpack.c.h.b16 %v1557
      %v1719 = vunpack.c.l.b16 %v1558
      %v1720 = vunpack.c.h.b16 %v1558
      %v1721 = vunpack.c.l.b16 %v1559
      %v1722 = vunpack.c.h.b16 %v1559
      %v1723 = vunpack.c.l.b16 %v1560
      %v1724 = vunpack.c.h.b16 %v1560
      %v1725 = vunpack.c.l.b16 %v1561
      %v1726 = vunpack.c.h.b16 %v1561
      %v1727 = vunpack.c.l.b16 %v1562
      %v1728 = vunpack.c.h.b16 %v1562
      %v1729 = vunpack.c.l.b16 %v1563
      %v1730 = vunpack.c.h.b16 %v1563
      %v1731 = vunpack.c.l.b16 %v1564
      %v1732 = vunpack.c.h.b16 %v1564
      %v1733 = vunpack.c.l.b16 %v1565
      %v1734 = vunpack.c.h.b16 %v1565
      %v1735 = vunpack.c.l.b16 %v1566
      %v1736 = vunpack.c.h.b16 %v1566
      %v1737 = vunpack.c.l.b16 %v1567
      %v1738 = vunpack.c.h.b16 %v1567
      %v1739 = vunpack.c.l.b16 %v1568
      %v1740 = vunpack.c.h.b16 %v1568
      %v1741 = vunpack.c.l.b16 %v1569
      %v1742 = vunpack.c.h.b16 %v1569
      %v1743 = vunpack.c.l.b16 %v1570
      %v1744 = vunpack.c.h.b16 %v1570
      %v1745 = vunpack.c.l.b16 %v1571
      %v1746 = vunpack.c.h.b16 %v1571
      %v1747 = vunpack.c.l.b16 %v1572
      %v1748 = vunpack.c.h.b16 %v1572
      %v1749 = vunpack.c.l.b16 %v1573
      %v1750 = vunpack.c.h.b16 %v1573
      %v1751 = vunpack.c.l.b16 %v1574
      %v1752 = vunpack.c.h.b16 %v1574
      %v1753 = vunpack.c.l.b16 %v1575
      %v1754 = vunpack.c.h.b16 %v1575
      %v1755 = vunpack.c.l.b16 %v1576
      %v1756 = vunpack.c.h.b16 %v1576
      %v1757 = vunpack.c.l.b16 %v1577
      %v1758 = vunpack.c.h.b16 %v1577
      %v1759 = vunpack.c.l.b16 %v1578
      %v1760 = vunpack.c.h.b16 %v1578
      %v1761 = vunpack.c.l.b16 %v1579
      %v1762 = vunpack.c.h.b16 %v1579
      %v1763 = vunpack.c.l.b16 %v1580
      %v1764 = vunpack.c.h.b16 %v1580
      %v1765 = vunpack.c.l.b16 %v1581
      %v1766 = vunpack.c.h.b16 %v1581
      %v1767 = vunpack.c.l.b16 %v1582
      %v1768 = vunpack.c.h.b16 %v1582
      %v1769 = vunpack.c.l.b16 %v1583
      %v1770 = vunpack.c.h.b16 %v1583
      %v1771 = vunpack.c.l.b16 %v1584
      %v1772 = vunpack.c.h.b16 %v1584
      %v1773 = vunpack.c.l.b16 %v1585
      %v1774 = vunpack.c.h.b16 %v1585
      %v1775 = vunpack.c.l.b16 %v1586
      %v1776 = vunpack.c.h.b16 %v1586
      %v1777 = vunpack.c.l.b16 %v1587
      %v1778 = vunpack.c.h.b16 %v1587
      %v1779 = vunpack.c.l.b16 %v1588
      %v1780 = vunpack.c.h.b16 %v1588
      %v1781 = vpack.c.b16 %v1653, %v1653
      %v1782 = vpack.c.b16 %v1654, %v1654
      %v1783 = vpack.c.b16 %v1655, %v1655
      %v1784 = vpack.c.b16 %v1656, %v1656
      %v1785 = vpack.c.b16 %v1657, %v1657
      %v1786 = vpack.c.b16 %v1658, %v1658
      %v1787 = vpack.c.b16 %v1659, %v1659
      %v1788 = vpack.c.b16 %v1660, %v1660
      %v1789 = vpack.c.b16 %v1661, %v1661
      %v1790 = vpack.c.b16 %v1662, %v1662
      %v1791 = vpack.c.b16 %v1663, %v1663
      %v1792 = vpack.c.b16 %v1664, %v1664
      %v1793 = vpack.c.b16 %v1665, %v1665
      %v1794 = vpack.c.b16 %v1666, %v1666
      %v1795 = vpack.c.b16 %v1667, %v1667
      %v1796 = vpack.c.b16 %v1668, %v1668
      %v1797 = vpack.c.b16 %v1669, %v1669
      %v1798 = vpack.c.b16 %v1670, %v1670
      %v1799 = vpack.c.b16 %v1671, %v1671
      %v1800 = vpack.c.b16 %v1672, %v1672
      %v1801 = vpack.c.b16 %v1673, %v1673
      %v1802 = vpack.c.b16 %v1674, %v1674
      %v1803 = vpack.c.b16 %v1675, %v1675
      %v1804 = vpack.c.b16 %v1676, %v1676
      %v1805 = vpack.c.b16 %v1677, %v1677
      %v1806 = vpack.c.b16 %v1678, %v1678
      %v1807 = vpack.c.b16 %v1679, %v1679
      %v1808 = vpack.c.b16 %v1680, %v1680
      %v1809 = vpack.c.b16 %v1681, %v1681
      %v1810 = vpack.c.b16 %v1682, %v1682
      %v1811 = vpack.c.b16 %v1683, %v1683
      %v1812 = vpack.c.b16 %v1684, %v1684
      %v1813 = vpack.c.b16 %v1685, %v1685
      %v1814 = vpack.c.b16 %v1686, %v1686
      %v1815 = vpack.c.b16 %v1687, %v1687
      %v1816 = vpack.c.b16 %v1688, %v1688
      %v1817 = vpack.c.b16 %v1689, %v1689
      %v1818 = vpack.c.b16 %v1690, %v1690
      %v1819 = vpack.c.b16 %v1691, %v1691
      %v1820 = vpack.c.b16 %v1692, %v1692
      %v1821 = vpack.c.b16 %v1693, %v1693
      %v1822 = vpack.c.b16 %v1694, %v1694
      %v1823 = vpack.c.b16 %v1695, %v1695
      %v1824 = vpack.c.b16 %v1696, %v1696
      %v1825 = vpack.c.b16 %v1697, %v1697
      %v1826 = vpack.c.b16 %v1698, %v1698
      %v1827 = vpack.c.b16 %v1699, %v1699
      %v1828 = vpack.c.b16 %v1700, %v1700
      %v1829 = vpack.c.b16 %v1701, %v1701
      %v1830 = vpack.c.b16 %v1702, %v1702
      %v1831 = vpack.c.b16 %v1703, %v1703
      %v1832 = vpack.c.b16 %v1704, %v1704
      %v1833 = vpack.c.b16 %v1705, %v1705
      %v1834 = vpack.c.b16 %v1706, %v1706
      %v1835 = vpack.c.b16 %v1707, %v1707
      %v1836 = vpack.c.b16 %v1708, %v1708
      %v1837 = vpack.c.b16 %v1709, %v1709
      %v1838 = vpack.c.b16 %v1710, %v1710
      %v1839 = vpack.c.b16 %v1711, %v1711
      %v1840 = vpack.c.b16 %v1712, %v1712
      %v1841 = vpack.c.b16 %v1713, %v1713
      %v1842 = vpack.c.b16 %v1714, %v1714
      %v1843 = vpack.c.b16 %v1715, %v1715
      %v1844 = vpack.c.b16 %v1716, %v1716
      %v1845 = vpack.c.b16 %v1717, %v1717
      %v1846 = vpack.c.b16 %v1718, %v1718
      %v1847 = vpack.c.b16 %v1719, %v1719
      %v1848 = vpack.c.b16 %v1720, %v1720
      %v1849 = vpack.c.b16 %v1721, %v1721
      %v1850 = vpack.c.b16 %v1722, %v1722
      %v1851 = vpack.c.b16 %v1723, %v1723
      %v1852 = vpack.c.b16 %v1724, %v1724
      %v1853 = vpack.c.b16 %v1725, %v1725
      %v1854 = vpack.c.b16 %v1726, %v1726
      %v1855 = vpack.c.b16 %v1727, %v1727
      %v1856 = vpack.c.b16 %v1728, %v1728
      %v1857 = vpack.c.b16 %v1729, %v1729
      %v1858 = vpack.c.b16 %v1730, %v1730
      %v1859 = vpack.c.b16 %v1731, %v1731
      %v1860 = vpack.c.b16 %v1732, %v1732
      %v1861 = vpack.c.b16 %v1733, %v1733
      %v1862 = vpack.c.b16 %v1734, %v1734
      %v1863 = vpack.c.b16 %v1735, %v1735
      %v1864 = vpack.c.b16 %v1736, %v1736
      %v1865 = vpack.c.b16 %v1737, %v1737
      %v1866 = vpack.c.b16 %v1738, %v1738
      %v1867 = vpack.c.b16 %v1739, %v1739
      %v1868 = vpack.c.b16 %v1740, %v1740
      %v1869 = vpack.c.b16 %v1741, %v1741
      %v1870 = vpack.c.b16 %v1742, %v1742
      %v1871 = vpack.c.b16 %v1743, %v1743
      %v1872 = vpack.c.b16 %v1744, %v1744
      %v1873 = vpack.c.b16 %v1745, %v1745
      %v1874 = vpack.c.b16 %v1746, %v1746
      %v1875 = vpack.c.b16 %v1747, %v1747
      %v1876 = vpack.c.b16 %v1748, %v1748
      %v1877 = vpack.c.b16 %v1749, %v1749
      %v1878 = vpack.c.b16 %v1750, %v1750
      %v1879 = vpack.c.b16 %v1751, %v1751
      %v1880 = vpack.c.b16 %v1752, %v1752
      %v1881 = vpack.c.b16 %v1753, %v1753
      %v1882 = vpack.c.b16 %v1754, %v1754
      %v1883 = vpack.c.b16 %v1755, %v1755
      %v1884 = vpack.c.b16 %v1756, %v1756
      %v1885 = vpack.c.b16 %v1757, %v1757
      %v1886 = vpack.c.b16 %v1758, %v1758
      %v1887 = vpack.c.b16 %v1759, %v1759
      %v1888 = vpack.c.b16 %v1760, %v1760
      %v1889 = vpack.c.b16 %v1761, %v1761
      %v1890 = vpack.c.b16 %v1762, %v1762
      %v1891 = vpack.c.b16 %v1763, %v1763
      %v1892 = vpack.c.b16 %v1764, %v1764
      %v1893 = vpack.c.b16 %v1765, %v1765
      %v1894 = vpack.c.b16 %v1766, %v1766
      %v1895 = vpack.c.b16 %v1767, %v1767
      %v1896 = vpack.c.b16 %v1768, %v1768
      %v1897 = vpack.c.b16 %v1769, %v1769
      %v1898 = vpack.c.b16 %v1770, %v1770
      %v1899 = vpack.c.b16 %v1771, %v1771
      %v1900 = vpack.c.b16 %v1772, %v1772
      %v1901 = vpack.c.b16 %v1773, %v1773
      %v1902 = vpack.c.b16 %v1774, %v1774
      %v1903 = vpack.c.b16 %v1775, %v1775
      %v1904 = vpack.c.b16 %v1776, %v1776
      %v1905 = vpack.c.b16 %v1777, %v1777
      %v1906 = vpack.c.b16 %v1778, %v1778
      %v1907 = vpack.c.b16 %v1779, %v1779
      %v1908 = vpack.c.b16 %v1780, %v1780
      %2037 = vst [vmem:[%s145] sm:$0xf] %v1781
      %2038 = vst [vmem:[%s145 + $0x4] sm:$0xf] %v1782
      %2039 = vst [vmem:[%s145 + $0x8] sm:$0xf] %v1783
      %2040 = vst [vmem:[%s145 + $0xc] sm:$0xf] %v1784
      %2041 = vst [vmem:[%s145 + $0x10] sm:$0xf] %v1785
      %2042 = vst [vmem:[%s145 + $0x14] sm:$0xf] %v1786
      %2043 = vst [vmem:[%s145 + $0x18] sm:$0xf] %v1787
      %2044 = vst [vmem:[%s145 + $0x1c] sm:$0xf] %v1788
      %2045 = vst [vmem:[%s145 + $0x20] sm:$0xf] %v1789
      %2046 = vst [vmem:[%s145 + $0x24] sm:$0xf] %v1790
      %2047 = vst [vmem:[%s145 + $0x28] sm:$0xf] %v1791
      %2048 = vst [vmem:[%s145 + $0x2c] sm:$0xf] %v1792
      %2049 = vst [vmem:[%s145 + $0x30] sm:$0xf] %v1793
      %2050 = vst [vmem:[%s145 + $0x34] sm:$0xf] %v1794
      %2051 = vst [vmem:[%s145 + $0x38] sm:$0xf] %v1795
      %2052 = vst [vmem:[%s145 + $0x3c] sm:$0xf] %v1796
      %2053 = vst [vmem:[%s145 + $0x40] sm:$0xf] %v1797
      %2054 = vst [vmem:[%s145 + $0x44] sm:$0xf] %v1798
      %2055 = vst [vmem:[%s145 + $0x48] sm:$0xf] %v1799
      %2056 = vst [vmem:[%s145 + $0x4c] sm:$0xf] %v1800
      %2057 = vst [vmem:[%s145 + $0x50] sm:$0xf] %v1801
      %2058 = vst [vmem:[%s145 + $0x54] sm:$0xf] %v1802
      %2059 = vst [vmem:[%s145 + $0x58] sm:$0xf] %v1803
      %2060 = vst [vmem:[%s145 + $0x5c] sm:$0xf] %v1804
      %2061 = vst [vmem:[%s145 + $0x60] sm:$0xf] %v1805
      %2062 = vst [vmem:[%s145 + $0x64] sm:$0xf] %v1806
      %2063 = vst [vmem:[%s145 + $0x68] sm:$0xf] %v1807
      %2064 = vst [vmem:[%s145 + $0x6c] sm:$0xf] %v1808
      %2065 = vst [vmem:[%s145 + $0x70] sm:$0xf] %v1809
      %2066 = vst [vmem:[%s145 + $0x74] sm:$0xf] %v1810
      %2067 = vst [vmem:[%s145 + $0x78] sm:$0xf] %v1811
      %2068 = vst [vmem:[%s145 + $0x7c] sm:$0xf] %v1812
      %2069 = vst [vmem:[%s145 + $0x80] sm:$0xf] %v1813
      %2070 = vst [vmem:[%s145 + $0x84] sm:$0xf] %v1814
      %2071 = vst [vmem:[%s145 + $0x88] sm:$0xf] %v1815
      %2072 = vst [vmem:[%s145 + $0x8c] sm:$0xf] %v1816
      %2073 = vst [vmem:[%s145 + $0x90] sm:$0xf] %v1817
      %2074 = vst [vmem:[%s145 + $0x94] sm:$0xf] %v1818
      %2075 = vst [vmem:[%s145 + $0x98] sm:$0xf] %v1819
      %2076 = vst [vmem:[%s145 + $0x9c] sm:$0xf] %v1820
      %2077 = vst [vmem:[%s145 + $0xa0] sm:$0xf] %v1821
      %2078 = vst [vmem:[%s145 + $0xa4] sm:$0xf] %v1822
      %2079 = vst [vmem:[%s145 + $0xa8] sm:$0xf] %v1823
      %2080 = vst [vmem:[%s145 + $0xac] sm:$0xf] %v1824
      %2081 = vst [vmem:[%s145 + $0xb0] sm:$0xf] %v1825
      %2082 = vst [vmem:[%s145 + $0xb4] sm:$0xf] %v1826
      %2083 = vst [vmem:[%s145 + $0xb8] sm:$0xf] %v1827
      %2084 = vst [vmem:[%s145 + $0xbc] sm:$0xf] %v1828
      %2085 = vst [vmem:[%s145 + $0xc0] sm:$0xf] %v1829
      %2086 = vst [vmem:[%s145 + $0xc4] sm:$0xf] %v1830
      %2087 = vst [vmem:[%s145 + $0xc8] sm:$0xf] %v1831
      %2088 = vst [vmem:[%s145 + $0xcc] sm:$0xf] %v1832
      %2089 = vst [vmem:[%s145 + $0xd0] sm:$0xf] %v1833
      %2090 = vst [vmem:[%s145 + $0xd4] sm:$0xf] %v1834
      %2091 = vst [vmem:[%s145 + $0xd8] sm:$0xf] %v1835
      %2092 = vst [vmem:[%s145 + $0xdc] sm:$0xf] %v1836
      %2093 = vst [vmem:[%s145 + $0xe0] sm:$0xf] %v1837
      %2094 = vst [vmem:[%s145 + $0xe4] sm:$0xf] %v1838
      %2095 = vst [vmem:[%s145 + $0xe8] sm:$0xf] %v1839
      %2096 = vst [vmem:[%s145 + $0xec] sm:$0xf] %v1840
      %2097 = vst [vmem:[%s145 + $0xf0] sm:$0xf] %v1841
      %2098 = vst [vmem:[%s145 + $0xf4] sm:$0xf] %v1842
      %2099 = vst [vmem:[%s145 + $0xf8] sm:$0xf] %v1843
      %2100 = vst [vmem:[%s145 + $0xfc] sm:$0xf] %v1844
      %2101 = vst [vmem:[%s145 + $0x100] sm:$0xf] %v1845
      %2102 = vst [vmem:[%s145 + $0x104] sm:$0xf] %v1846
      %2103 = vst [vmem:[%s145 + $0x108] sm:$0xf] %v1847
      %2104 = vst [vmem:[%s145 + $0x10c] sm:$0xf] %v1848
      %2105 = vst [vmem:[%s145 + $0x110] sm:$0xf] %v1849
      %2106 = vst [vmem:[%s145 + $0x114] sm:$0xf] %v1850
      %2107 = vst [vmem:[%s145 + $0x118] sm:$0xf] %v1851
      %2108 = vst [vmem:[%s145 + $0x11c] sm:$0xf] %v1852
      %2109 = vst [vmem:[%s145 + $0x120] sm:$0xf] %v1853
      %2110 = vst [vmem:[%s145 + $0x124] sm:$0xf] %v1854
      %2111 = vst [vmem:[%s145 + $0x128] sm:$0xf] %v1855
      %2112 = vst [vmem:[%s145 + $0x12c] sm:$0xf] %v1856
      %2113 = vst [vmem:[%s145 + $0x130] sm:$0xf] %v1857
      %2114 = vst [vmem:[%s145 + $0x134] sm:$0xf] %v1858
      %2115 = vst [vmem:[%s145 + $0x138] sm:$0xf] %v1859
      %2116 = vst [vmem:[%s145 + $0x13c] sm:$0xf] %v1860
      %2117 = vst [vmem:[%s145 + $0x140] sm:$0xf] %v1861
      %2118 = vst [vmem:[%s145 + $0x144] sm:$0xf] %v1862
      %2119 = vst [vmem:[%s145 + $0x148] sm:$0xf] %v1863
      %2120 = vst [vmem:[%s145 + $0x14c] sm:$0xf] %v1864
      %2121 = vst [vmem:[%s145 + $0x150] sm:$0xf] %v1865
      %2122 = vst [vmem:[%s145 + $0x154] sm:$0xf] %v1866
      %2123 = vst [vmem:[%s145 + $0x158] sm:$0xf] %v1867
      %2124 = vst [vmem:[%s145 + $0x15c] sm:$0xf] %v1868
      %2125 = vst [vmem:[%s145 + $0x160] sm:$0xf] %v1869
      %2126 = vst [vmem:[%s145 + $0x164] sm:$0xf] %v1870
      %2127 = vst [vmem:[%s145 + $0x168] sm:$0xf] %v1871
      %2128 = vst [vmem:[%s145 + $0x16c] sm:$0xf] %v1872
      %2129 = vst [vmem:[%s145 + $0x170] sm:$0xf] %v1873
      %2130 = vst [vmem:[%s145 + $0x174] sm:$0xf] %v1874
      %2131 = vst [vmem:[%s145 + $0x178] sm:$0xf] %v1875
      %2132 = vst [vmem:[%s145 + $0x17c] sm:$0xf] %v1876
      %2133 = vst [vmem:[%s145 + $0x180] sm:$0xf] %v1877
      %2134 = vst [vmem:[%s145 + $0x184] sm:$0xf] %v1878
      %2135 = vst [vmem:[%s145 + $0x188] sm:$0xf] %v1879
      %2136 = vst [vmem:[%s145 + $0x18c] sm:$0xf] %v1880
      %2137 = vst [vmem:[%s145 + $0x190] sm:$0xf] %v1881
      %2138 = vst [vmem:[%s145 + $0x194] sm:$0xf] %v1882
      %2139 = vst [vmem:[%s145 + $0x198] sm:$0xf] %v1883
      %2140 = vst [vmem:[%s145 + $0x19c] sm:$0xf] %v1884
      %2141 = vst [vmem:[%s145 + $0x1a0] sm:$0xf] %v1885
      %2142 = vst [vmem:[%s145 + $0x1a4] sm:$0xf] %v1886
      %2143 = vst [vmem:[%s145 + $0x1a8] sm:$0xf] %v1887
      %2144 = vst [vmem:[%s145 + $0x1ac] sm:$0xf] %v1888
      %2145 = vst [vmem:[%s145 + $0x1b0] sm:$0xf] %v1889
      %2146 = vst [vmem:[%s145 + $0x1b4] sm:$0xf] %v1890
      %2147 = vst [vmem:[%s145 + $0x1b8] sm:$0xf] %v1891
      %2148 = vst [vmem:[%s145 + $0x1bc] sm:$0xf] %v1892
      %2149 = vst [vmem:[%s145 + $0x1c0] sm:$0xf] %v1893
      %2150 = vst [vmem:[%s145 + $0x1c4] sm:$0xf] %v1894
      %2151 = vst [vmem:[%s145 + $0x1c8] sm:$0xf] %v1895
      %2152 = vst [vmem:[%s145 + $0x1cc] sm:$0xf] %v1896
      %2153 = vst [vmem:[%s145 + $0x1d0] sm:$0xf] %v1897
      %2154 = vst [vmem:[%s145 + $0x1d4] sm:$0xf] %v1898
      %2155 = vst [vmem:[%s145 + $0x1d8] sm:$0xf] %v1899
      %2156 = vst [vmem:[%s145 + $0x1dc] sm:$0xf] %v1900
      %2157 = vst [vmem:[%s145 + $0x1e0] sm:$0xf] %v1901
      %2158 = vst [vmem:[%s145 + $0x1e4] sm:$0xf] %v1902
      %2159 = vst [vmem:[%s145 + $0x1e8] sm:$0xf] %v1903
      %2160 = vst [vmem:[%s145 + $0x1ec] sm:$0xf] %v1904
      %2161 = vst [vmem:[%s145 + $0x1f0] sm:$0xf] %v1905
      %2162 = vst [vmem:[%s145 + $0x1f4] sm:$0xf] %v1906
      %2163 = vst [vmem:[%s145 + $0x1f8] sm:$0xf] %v1907
      %2164 = vst [vmem:[%s145 + $0x1fc] sm:$0xf] %v1908
      %s2165 = smul.u32 128, %s13
      %p2166 = scmp.lt.s32.totalorder %s2165, 255
      %s2167 = scalar_select %p2166, %s2165, 255
      %s2168 = smul.addr %s2167, 4
      %s2169 = scalar_lea.vmem %s2, %s2168
      // Predicated region
      $region29: #{discriminator_forward.5} parent=27 // pred_check
        %p2170 = pneg %p78
      $region30: #{discriminator_forward.5} parent=27 // pred_check_branch
        %2172 = sbr.rel (%p2170) target = $region32
      $region31: #{discriminator_forward.5} parent=27 // pred_region
        %s2173 = smul.u32 128, %s13
      $region32: #{discriminator_forward.5} parent=27 // pred_fallthru
        _
    $region28: #{discriminator_forward.5} parent=5 // pred_fallthru
      _
    %p2174 = scmp.le.s32.totalorder 2, %s8
    // Predicated region
    $region33: #{discriminator_forward.5} parent=5 // pred_check
      %p2175 = pneg %p2174
    $region34: #{discriminator_forward.5} parent=5 // pred_check_branch
      %2177 = sbr.rel (%p2175) target = $region36
    $region35: #{discriminator_forward.5} parent=5 // pred_region
      %s2178 = ssub.s32 %s8, 2
      // Predicated region
      $region37: #{discriminator_forward.5} parent=35 // pred_check
        %p2179 = pneg %p84
      $region38: #{discriminator_forward.5} parent=35 // pred_check_branch
        %2181 = sbr.rel (%p2179) target = $region40
      $region39: #{discriminator_forward.5} parent=35 // pred_region
        %s2182 = smul.u32 128, %s14
        %p2183 = scmp.lt.s32.totalorder %s2182, 255
        %s2184 = scalar_select %p2183, %s2182, 255
        %s2185 = smul.addr %s2184, 4
        %s2186 = scalar_lea.vmem %s2, %s2185
      $region40: #{discriminator_forward.5} parent=35 // pred_fallthru
        _
    $region36: #{discriminator_forward.5} parent=5 // pred_fallthru
      _
  $region6: #{discriminator_forward.5} parent=0 // loop_footer
    %s12 = sadd.s32 1, %s8
  $region7: #{discriminator_forward.5} parent=0 // loop_footer_branch
    %7 = sbr.rel target = $region3
  $region8: #{discriminator_forward.5} parent=0 // loop_exit
    _

// kernel: discriminator_forward.6
$region0: #{discriminator_forward.6}
  #allocation0 [shape = 'u32[]', space=smem, size = 0x4, offset = 0x4, fixed_abs, tag = 'smem constant byte address 0x4 - core index']
  #allocation1 [shape = 'u32[144,128]{1,0:T(1,128)}', space=vmem, size = 0x12000, scoped, tag = 'internal scratch']
  %s0 = inlined_call_operand.vmem [shape: bf16[512,128], index: 0, kind: input, shape index: {}]
  %s1 = inlined_call_operand.vmem [shape: bf16[128,128], index: 1, kind: input, shape index: {}]
  %s2 = inlined_call_operand.vmem [shape: f32[1,128], index: 2, kind: input, shape index: {}]
  %s3 = inlined_call_operand.vmem [shape: f32[1,128], index: 3, kind: input, shape index: {}]
  %s4 = inlined_call_operand.vmem [shape: bf16[512,128], index: 4, kind: output, shape index: {}]
  %s5 = sld [smem:[#allocation0]]
  $region26: #{discriminator_forward.6} parent=0
    _
  %s7 = ssub.s32 1, %s5
  %s8 = scalar_select 0, %s7, %s5
  // Predicated region
  $region2: #{discriminator_forward.6} parent=0 // pred_check
    _
  $region3: #{discriminator_forward.6} parent=0 // pred_check_branch
    %10 = sbr.rel (0) target = $region5
  $region4: #{discriminator_forward.6} parent=0 // pred_region
    _
  $region5: #{discriminator_forward.6} parent=0 // pred_fallthru
    _
  // Predicated region
  $region6: #{discriminator_forward.6} parent=0 // pred_check
    _
  $region7: #{discriminator_forward.6} parent=0 // pred_check_branch
    %12 = sbr.rel (0) target = $region9
  $region8: #{discriminator_forward.6} parent=0 // pred_region
    _
  $region9: #{discriminator_forward.6} parent=0 // pred_fallthru
    _
  // Predicated region
  $region10: #{discriminator_forward.6} parent=0 // pred_check
    _
  $region11: #{discriminator_forward.6} parent=0 // pred_check_branch
    %14 = sbr.rel (0) target = $region13
  $region12: #{discriminator_forward.6} parent=0 // pred_region
    _
  $region13: #{discriminator_forward.6} parent=0 // pred_fallthru
    _
  // Predicated region
  $region14: #{discriminator_forward.6} parent=0 // pred_check
    _
  $region15: #{discriminator_forward.6} parent=0 // pred_check_branch
    %16 = sbr.rel (0) target = $region17
  $region16: #{discriminator_forward.6} parent=0 // pred_region
    _
  $region17: #{discriminator_forward.6} parent=0 // pred_fallthru
    _
  %v18 = vld [vmem:[%s0] sm:$0xf]
  %v19 = vld [vmem:[%s0 + $0x4] sm:$0xf]
  %v20 = vld [vmem:[%s0 + $0x8] sm:$0xf]
  %v21 = vld [vmem:[%s0 + $0xc] sm:$0xf]
  %v22 = vld [vmem:[%s0 + $0x10] sm:$0xf]
  %v23 = vld [vmem:[%s0 + $0x14] sm:$0xf]
  %v24 = vld [vmem:[%s0 + $0x18] sm:$0xf]
  %v25 = vld [vmem:[%s0 + $0x1c] sm:$0xf]
  %v26 = vld [vmem:[%s0 + $0x20] sm:$0xf]
  %v27 = vld [vmem:[%s0 + $0x24] sm:$0xf]
  %v28 = vld [vmem:[%s0 + $0x28] sm:$0xf]
  %v29 = vld [vmem:[%s0 + $0x2c] sm:$0xf]
  %v30 = vld [vmem:[%s0 + $0x30] sm:$0xf]
  %v31 = vld [vmem:[%s0 + $0x34] sm:$0xf]
  %v32 = vld [vmem:[%s0 + $0x38] sm:$0xf]
  %v33 = vld [vmem:[%s0 + $0x3c] sm:$0xf]
  %v34 = vld [vmem:[%s0 + $0x40] sm:$0xf]
  %v35 = vld [vmem:[%s0 + $0x44] sm:$0xf]
  %v36 = vld [vmem:[%s0 + $0x48] sm:$0xf]
  %v37 = vld [vmem:[%s0 + $0x4c] sm:$0xf]
  %v38 = vld [vmem:[%s0 + $0x50] sm:$0xf]
  %v39 = vld [vmem:[%s0 + $0x54] sm:$0xf]
  %v40 = vld [vmem:[%s0 + $0x58] sm:$0xf]
  %v41 = vld [vmem:[%s0 + $0x5c] sm:$0xf]
  %v42 = vld [vmem:[%s0 + $0x60] sm:$0xf]
  %v43 = vld [vmem:[%s0 + $0x64] sm:$0xf]
  %v44 = vld [vmem:[%s0 + $0x68] sm:$0xf]
  %v45 = vld [vmem:[%s0 + $0x6c] sm:$0xf]
  %v46 = vld [vmem:[%s0 + $0x70] sm:$0xf]
  %v47 = vld [vmem:[%s0 + $0x74] sm:$0xf]
  %v48 = vld [vmem:[%s0 + $0x78] sm:$0xf]
  %v49 = vld [vmem:[%s0 + $0x7c] sm:$0xf]
  %v50 = vld [vmem:[%s0 + $0x80] sm:$0xf]
  %v51 = vld [vmem:[%s0 + $0x84] sm:$0xf]
  %v52 = vld [vmem:[%s0 + $0x88] sm:$0xf]
  %v53 = vld [vmem:[%s0 + $0x8c] sm:$0xf]
  %v54 = vld [vmem:[%s0 + $0x90] sm:$0xf]
  %v55 = vld [vmem:[%s0 + $0x94] sm:$0xf]
  %v56 = vld [vmem:[%s0 + $0x98] sm:$0xf]
  %v57 = vld [vmem:[%s0 + $0x9c] sm:$0xf]
  %v58 = vld [vmem:[%s0 + $0xa0] sm:$0xf]
  %v59 = vld [vmem:[%s0 + $0xa4] sm:$0xf]
  %v60 = vld [vmem:[%s0 + $0xa8] sm:$0xf]
  %v61 = vld [vmem:[%s0 + $0xac] sm:$0xf]
  %v62 = vld [vmem:[%s0 + $0xb0] sm:$0xf]
  %v63 = vld [vmem:[%s0 + $0xb4] sm:$0xf]
  %v64 = vld [vmem:[%s0 + $0xb8] sm:$0xf]
  %v65 = vld [vmem:[%s0 + $0xbc] sm:$0xf]
  %v66 = vld [vmem:[%s0 + $0xc0] sm:$0xf]
  %v67 = vld [vmem:[%s0 + $0xc4] sm:$0xf]
  %v68 = vld [vmem:[%s0 + $0xc8] sm:$0xf]
  %v69 = vld [vmem:[%s0 + $0xcc] sm:$0xf]
  %v70 = vld [vmem:[%s0 + $0xd0] sm:$0xf]
  %v71 = vld [vmem:[%s0 + $0xd4] sm:$0xf]
  %v72 = vld [vmem:[%s0 + $0xd8] sm:$0xf]
  %v73 = vld [vmem:[%s0 + $0xdc] sm:$0xf]
  %v74 = vld [vmem:[%s0 + $0xe0] sm:$0xf]
  %v75 = vld [vmem:[%s0 + $0xe4] sm:$0xf]
  %v76 = vld [vmem:[%s0 + $0xe8] sm:$0xf]
  %v77 = vld [vmem:[%s0 + $0xec] sm:$0xf]
  %v78 = vld [vmem:[%s0 + $0xf0] sm:$0xf]
  %v79 = vld [vmem:[%s0 + $0xf4] sm:$0xf]
  %v80 = vld [vmem:[%s0 + $0xf8] sm:$0xf]
  %v81 = vld [vmem:[%s0 + $0xfc] sm:$0xf]
  %v82 = vld [vmem:[%s1] sm:$0xf]
  %v83 = vld [vmem:[%s1 + $0x4] sm:$0xf]
  %v84 = vld [vmem:[%s1 + $0x8] sm:$0xf]
  %v85 = vld [vmem:[%s1 + $0xc] sm:$0xf]
  %v86 = vld [vmem:[%s1 + $0x10] sm:$0xf]
  %v87 = vld [vmem:[%s1 + $0x14] sm:$0xf]
  %v88 = vld [vmem:[%s1 + $0x18] sm:$0xf]
  %v89 = vld [vmem:[%s1 + $0x1c] sm:$0xf]
  %v90 = vld [vmem:[%s1 + $0x20] sm:$0xf]
  %v91 = vld [vmem:[%s1 + $0x24] sm:$0xf]
  %v92 = vld [vmem:[%s1 + $0x28] sm:$0xf]
  %v93 = vld [vmem:[%s1 + $0x2c] sm:$0xf]
  %v94 = vld [vmem:[%s1 + $0x30] sm:$0xf]
  %v95 = vld [vmem:[%s1 + $0x34] sm:$0xf]
  %v96 = vld [vmem:[%s1 + $0x38] sm:$0xf]
  %v97 = vld [vmem:[%s1 + $0x3c] sm:$0xf]
  %v162 = vunpack.c.l.b16 %v18
  %v163 = vunpack.c.l.b16 %v19
  %v164 = vunpack.c.l.b16 %v20
  %v165 = vunpack.c.l.b16 %v21
  %v166 = vunpack.c.l.b16 %v22
  %v167 = vunpack.c.l.b16 %v23
  %v168 = vunpack.c.l.b16 %v24
  %v169 = vunpack.c.l.b16 %v25
  %v170 = vunpack.c.l.b16 %v26
  %v171 = vunpack.c.l.b16 %v27
  %v172 = vunpack.c.l.b16 %v28
  %v173 = vunpack.c.l.b16 %v29
  %v174 = vunpack.c.l.b16 %v30
  %v175 = vunpack.c.l.b16 %v31
  %v176 = vunpack.c.l.b16 %v32
  %v177 = vunpack.c.l.b16 %v33
  %v178 = vunpack.c.l.b16 %v34
  %v179 = vunpack.c.l.b16 %v35
  %v180 = vunpack.c.l.b16 %v36
  %v181 = vunpack.c.l.b16 %v37
  %v182 = vunpack.c.l.b16 %v38
  %v183 = vunpack.c.l.b16 %v39
  %v184 = vunpack.c.l.b16 %v40
  %v185 = vunpack.c.l.b16 %v41
  %v186 = vunpack.c.l.b16 %v42
  %v187 = vunpack.c.l.b16 %v43
  %v188 = vunpack.c.l.b16 %v44
  %v189 = vunpack.c.l.b16 %v45
  %v190 = vunpack.c.l.b16 %v46
  %v191 = vunpack.c.l.b16 %v47
  %v192 = vunpack.c.l.b16 %v48
  %v193 = vunpack.c.l.b16 %v49
  %v194 = vunpack.c.l.b16 %v50
  %v195 = vunpack.c.l.b16 %v51
  %v196 = vunpack.c.l.b16 %v52
  %v197 = vunpack.c.l.b16 %v53
  %v198 = vunpack.c.l.b16 %v54
  %v199 = vunpack.c.l.b16 %v55
  %v200 = vunpack.c.l.b16 %v56
  %v201 = vunpack.c.l.b16 %v57
  %v202 = vunpack.c.l.b16 %v58
  %v203 = vunpack.c.l.b16 %v59
  %v204 = vunpack.c.l.b16 %v60
  %v205 = vunpack.c.l.b16 %v61
  %v206 = vunpack.c.l.b16 %v62
  %v207 = vunpack.c.l.b16 %v63
  %v208 = vunpack.c.l.b16 %v64
  %v209 = vunpack.c.l.b16 %v65
  %v210 = vunpack.c.l.b16 %v66
  %v211 = vunpack.c.l.b16 %v67
  %v212 = vunpack.c.l.b16 %v68
  %v213 = vunpack.c.l.b16 %v69
  %v214 = vunpack.c.l.b16 %v70
  %v215 = vunpack.c.l.b16 %v71
  %v216 = vunpack.c.l.b16 %v72
  %v217 = vunpack.c.l.b16 %v73
  %v218 = vunpack.c.l.b16 %v74
  %v219 = vunpack.c.l.b16 %v75
  %v220 = vunpack.c.l.b16 %v76
  %v221 = vunpack.c.l.b16 %v77
  %v222 = vunpack.c.l.b16 %v78
  %v223 = vunpack.c.l.b16 %v79
  %v224 = vunpack.c.l.b16 %v80
  %v225 = vunpack.c.l.b16 %v81
  %v226 = vpack.c.b16 %v163, %v162
  %v227 = vpack.c.b16 %v165, %v164
  %v228 = vpack.c.b16 %v167, %v166
  %v229 = vpack.c.b16 %v169, %v168
  %v230 = vpack.c.b16 %v171, %v170
  %v231 = vpack.c.b16 %v173, %v172
  %v232 = vpack.c.b16 %v175, %v174
  %v233 = vpack.c.b16 %v177, %v176
  %v234 = vpack.c.b16 %v179, %v178
  %v235 = vpack.c.b16 %v181, %v180
  %v236 = vpack.c.b16 %v183, %v182
  %v237 = vpack.c.b16 %v185, %v184
  %v238 = vpack.c.b16 %v187, %v186
  %v239 = vpack.c.b16 %v189, %v188
  %v240 = vpack.c.b16 %v191, %v190
  %v241 = vpack.c.b16 %v193, %v192
  %v242 = vpack.c.b16 %v195, %v194
  %v243 = vpack.c.b16 %v197, %v196
  %v244 = vpack.c.b16 %v199, %v198
  %v245 = vpack.c.b16 %v201, %v200
  %v246 = vpack.c.b16 %v203, %v202
  %v247 = vpack.c.b16 %v205, %v204
  %v248 = vpack.c.b16 %v207, %v206
  %v249 = vpack.c.b16 %v209, %v208
  %v250 = vpack.c.b16 %v211, %v210
  %v251 = vpack.c.b16 %v213, %v212
  %v252 = vpack.c.b16 %v215, %v214
  %v253 = vpack.c.b16 %v217, %v216
  %v254 = vpack.c.b16 %v219, %v218
  %v255 = vpack.c.b16 %v221, %v220
  %v256 = vpack.c.b16 %v223, %v222
  %v257 = vpack.c.b16 %v225, %v224
  %v306 = vunpack.c.l.b16 %v82
  %v307 = vunpack.c.l.b16 %v83
  %v308 = vunpack.c.l.b16 %v84
  %v309 = vunpack.c.l.b16 %v85
  %v310 = vunpack.c.l.b16 %v86
  %v311 = vunpack.c.l.b16 %v87
  %v312 = vunpack.c.l.b16 %v88
  %v313 = vunpack.c.l.b16 %v89
  %v314 = vunpack.c.l.b16 %v90
  %v315 = vunpack.c.l.b16 %v91
  %v316 = vunpack.c.l.b16 %v92
  %v317 = vunpack.c.l.b16 %v93
  %v318 = vunpack.c.l.b16 %v94
  %v319 = vunpack.c.l.b16 %v95
  %v320 = vunpack.c.l.b16 %v96
  %v321 = vunpack.c.l.b16 %v97
  %v322 = vpack.c.b16 %v307, %v306
  %v323 = vpack.c.b16 %v309, %v308
  %v324 = vpack.c.b16 %v311, %v310
  %v325 = vpack.c.b16 %v313, %v312
  %v326 = vpack.c.b16 %v315, %v314
  %v327 = vpack.c.b16 %v317, %v316
  %v328 = vpack.c.b16 %v319, %v318
  %v329 = vpack.c.b16 %v321, %v320
  %338 = vmatprep.subr.bf16.mxu0 0
  %339 = vmatpush1.bf16.msra.mxu0 %v329
  %340 = vmatprep.subr.bf16.mxu0 0
  %341 = vmatpush1.bf16.msra.mxu0 %v328
  %342 = vmatprep.subr.bf16.mxu0 0
  %343 = vmatpush1.bf16.msra.mxu0 %v327
  %344 = vmatprep.subr.bf16.mxu0 0
  %345 = vmatpush1.bf16.msra.mxu0 %v326
  %346 = vmatprep.subr.bf16.mxu0 0
  %347 = vmatpush1.bf16.msra.mxu0 %v325
  %348 = vmatprep.subr.bf16.mxu0 0
  %349 = vmatpush1.bf16.msra.mxu0 %v324
  %350 = vmatprep.subr.bf16.mxu0 0
  %351 = vmatpush1.bf16.msra.mxu0 %v323
  %352 = vmatprep.subr.bf16.mxu0 0
  %353 = vmatpush1.bf16.msra.mxu0 %v322
  %354 = vmatprep.subr.bf16.mxu0 0
  %355 = vmatpush2.bf16.msra.mxu0 0
  %356 = vmatprep.subr.bf16.mxu0 0
  %357 = vmatpush2.bf16.msra.mxu0 0
  %358 = vmatprep.subr.bf16.mxu0 0
  %359 = vmatpush2.bf16.msra.mxu0 0
  %360 = vmatprep.subr.bf16.mxu0 0
  %361 = vmatpush2.bf16.msra.mxu0 0
  %362 = vmatprep.subr.bf16.mxu0 0
  %363 = vmatpush2.bf16.msra.mxu0 0
  %364 = vmatprep.subr.bf16.mxu0 0
  %365 = vmatpush2.bf16.msra.mxu0 0
  %366 = vmatprep.subr.bf16.mxu0 0
  %367 = vmatpush2.bf16.msra.mxu0 0
  %368 = vmatprep.subr.bf16.mxu0 0
  %369 = vmatpush2.bf16.msra.mxu0 0
  %370 = vmatprep.mubr.bf16.mxu0 0
  %371 = vmatmul.mubr.bf16.gmra.mxu0 %v226
  %v372 = vpop.f32.mrf.mxu0
  %v373 = vadd.f32 0.0, %v372
  %v374 = vpop.f32.mrf.mxu0
  %v375 = vpop.f32.mrf.mxu0
  %v376 = vadd.f32 0.0, %v375
  %v377 = vpop.f32.mrf.mxu0
  %378 = vmatprep.mubr.bf16.mxu0 0
  %379 = vmatmul.mubr.bf16.gmra.mxu0 %v227
  %v380 = vpop.f32.mrf.mxu0
  %v381 = vadd.f32 0.0, %v380
  %v382 = vpop.f32.mrf.mxu0
  %v383 = vpop.f32.mrf.mxu0
  %v384 = vadd.f32 0.0, %v383
  %v385 = vpop.f32.mrf.mxu0
  %386 = vmatprep.mubr.bf16.mxu0 0
  %387 = vmatmul.mubr.bf16.gmra.mxu0 %v228
  %v388 = vpop.f32.mrf.mxu0
  %v389 = vadd.f32 0.0, %v388
  %v390 = vpop.f32.mrf.mxu0
  %v391 = vpop.f32.mrf.mxu0
  %v392 = vadd.f32 0.0, %v391
  %v393 = vpop.f32.mrf.mxu0
  %394 = vmatprep.mubr.bf16.mxu0 0
  %395 = vmatmul.mubr.bf16.gmra.mxu0 %v229
  %v396 = vpop.f32.mrf.mxu0
  %v397 = vadd.f32 0.0, %v396
  %v398 = vpop.f32.mrf.mxu0
  %v399 = vpop.f32.mrf.mxu0
  %v400 = vadd.f32 0.0, %v399
  %v401 = vpop.f32.mrf.mxu0
  %402 = vmatprep.mubr.bf16.mxu0 0
  %403 = vmatmul.mubr.bf16.gmra.mxu0 %v230
  %v404 = vpop.f32.mrf.mxu0
  %v405 = vadd.f32 0.0, %v404
  %v406 = vpop.f32.mrf.mxu0
  %v407 = vpop.f32.mrf.mxu0
  %v408 = vadd.f32 0.0, %v407
  %v409 = vpop.f32.mrf.mxu0
  %410 = vmatprep.mubr.bf16.mxu0 0
  %411 = vmatmul.mubr.bf16.gmra.mxu0 %v231
  %v412 = vpop.f32.mrf.mxu0
  %v413 = vadd.f32 0.0, %v412
  %v414 = vpop.f32.mrf.mxu0
  %v415 = vpop.f32.mrf.mxu0
  %v416 = vadd.f32 0.0, %v415
  %v417 = vpop.f32.mrf.mxu0
  %418 = vmatprep.mubr.bf16.mxu0 0
  %419 = vmatmul.mubr.bf16.gmra.mxu0 %v232
  %v420 = vpop.f32.mrf.mxu0
  %v421 = vadd.f32 0.0, %v420
  %v422 = vpop.f32.mrf.mxu0
  %v423 = vpop.f32.mrf.mxu0
  %v424 = vadd.f32 0.0, %v423
  %v425 = vpop.f32.mrf.mxu0
  %426 = vmatprep.mubr.bf16.mxu0 0
  %427 = vmatmul.mubr.bf16.gmra.mxu0 %v233
  %v428 = vpop.f32.mrf.mxu0
  %v429 = vadd.f32 0.0, %v428
  %v430 = vpop.f32.mrf.mxu0
  %v431 = vpop.f32.mrf.mxu0
  %v432 = vadd.f32 0.0, %v431
  %v433 = vpop.f32.mrf.mxu0
  %434 = vmatprep.mubr.bf16.mxu0 0
  %435 = vmatmul.mubr.bf16.gmra.mxu0 %v234
  %v436 = vpop.f32.mrf.mxu0
  %v437 = vadd.f32 0.0, %v436
  %v438 = vpop.f32.mrf.mxu0
  %v439 = vpop.f32.mrf.mxu0
  %v440 = vadd.f32 0.0, %v439
  %v441 = vpop.f32.mrf.mxu0
  %442 = vmatprep.mubr.bf16.mxu0 0
  %443 = vmatmul.mubr.bf16.gmra.mxu0 %v235
  %v444 = vpop.f32.mrf.mxu0
  %v445 = vadd.f32 0.0, %v444
  %v446 = vpop.f32.mrf.mxu0
  %v447 = vpop.f32.mrf.mxu0
  %v448 = vadd.f32 0.0, %v447
  %v449 = vpop.f32.mrf.mxu0
  %450 = vmatprep.mubr.bf16.mxu0 0
  %451 = vmatmul.mubr.bf16.gmra.mxu0 %v236
  %v452 = vpop.f32.mrf.mxu0
  %v453 = vadd.f32 0.0, %v452
  %v454 = vpop.f32.mrf.mxu0
  %v455 = vpop.f32.mrf.mxu0
  %v456 = vadd.f32 0.0, %v455
  %v457 = vpop.f32.mrf.mxu0
  %458 = vmatprep.mubr.bf16.mxu0 0
  %459 = vmatmul.mubr.bf16.gmra.mxu0 %v237
  %v460 = vpop.f32.mrf.mxu0
  %v461 = vadd.f32 0.0, %v460
  %v462 = vpop.f32.mrf.mxu0
  %v463 = vpop.f32.mrf.mxu0
  %v464 = vadd.f32 0.0, %v463
  %v465 = vpop.f32.mrf.mxu0
  %466 = vmatprep.mubr.bf16.mxu0 0
  %467 = vmatmul.mubr.bf16.gmra.mxu0 %v238
  %v468 = vpop.f32.mrf.mxu0
  %v469 = vadd.f32 0.0, %v468
  %v470 = vpop.f32.mrf.mxu0
  %v471 = vpop.f32.mrf.mxu0
  %v472 = vadd.f32 0.0, %v471
  %v473 = vpop.f32.mrf.mxu0
  %474 = vmatprep.mubr.bf16.mxu0 0
  %475 = vmatmul.mubr.bf16.gmra.mxu0 %v239
  %v476 = vpop.f32.mrf.mxu0
  %v477 = vadd.f32 0.0, %v476
  %v478 = vpop.f32.mrf.mxu0
  %v479 = vpop.f32.mrf.mxu0
  %v480 = vadd.f32 0.0, %v479
  %v481 = vpop.f32.mrf.mxu0
  %482 = vmatprep.mubr.bf16.mxu0 0
  %483 = vmatmul.mubr.bf16.gmra.mxu0 %v240
  %v484 = vpop.f32.mrf.mxu0
  %v485 = vadd.f32 0.0, %v484
  %v486 = vpop.f32.mrf.mxu0
  %v487 = vpop.f32.mrf.mxu0
  %v488 = vadd.f32 0.0, %v487
  %v489 = vpop.f32.mrf.mxu0
  %490 = vmatprep.mubr.bf16.mxu0 0
  %491 = vmatmul.mubr.bf16.gmra.mxu0 %v241
  %v492 = vpop.f32.mrf.mxu0
  %v493 = vadd.f32 0.0, %v492
  %v494 = vpop.f32.mrf.mxu0
  %v495 = vpop.f32.mrf.mxu0
  %v496 = vadd.f32 0.0, %v495
  %v497 = vpop.f32.mrf.mxu0
  %498 = vmatprep.mubr.bf16.mxu0 0
  %499 = vmatmul.mubr.bf16.gmra.mxu0 %v242
  %v500 = vpop.f32.mrf.mxu0
  %v501 = vadd.f32 0.0, %v500
  %v502 = vpop.f32.mrf.mxu0
  %v503 = vpop.f32.mrf.mxu0
  %v504 = vadd.f32 0.0, %v503
  %v505 = vpop.f32.mrf.mxu0
  %506 = vmatprep.mubr.bf16.mxu0 0
  %507 = vmatmul.mubr.bf16.gmra.mxu0 %v243
  %v508 = vpop.f32.mrf.mxu0
  %v509 = vadd.f32 0.0, %v508
  %v510 = vpop.f32.mrf.mxu0
  %v511 = vpop.f32.mrf.mxu0
  %v512 = vadd.f32 0.0, %v511
  %v513 = vpop.f32.mrf.mxu0
  %514 = vmatprep.mubr.bf16.mxu0 0
  %515 = vmatmul.mubr.bf16.gmra.mxu0 %v244
  %v516 = vpop.f32.mrf.mxu0
  %v517 = vadd.f32 0.0, %v516
  %v518 = vpop.f32.mrf.mxu0
  %v519 = vpop.f32.mrf.mxu0
  %v520 = vadd.f32 0.0, %v519
  %v521 = vpop.f32.mrf.mxu0
  %522 = vmatprep.mubr.bf16.mxu0 0
  %523 = vmatmul.mubr.bf16.gmra.mxu0 %v245
  %v524 = vpop.f32.mrf.mxu0
  %v525 = vadd.f32 0.0, %v524
  %v526 = vpop.f32.mrf.mxu0
  %v527 = vpop.f32.mrf.mxu0
  %v528 = vadd.f32 0.0, %v527
  %v529 = vpop.f32.mrf.mxu0
  %530 = vmatprep.mubr.bf16.mxu0 0
  %531 = vmatmul.mubr.bf16.gmra.mxu0 %v246
  %v532 = vpop.f32.mrf.mxu0
  %v533 = vadd.f32 0.0, %v532
  %v534 = vpop.f32.mrf.mxu0
  %v535 = vpop.f32.mrf.mxu0
  %v536 = vadd.f32 0.0, %v535
  %v537 = vpop.f32.mrf.mxu0
  %538 = vmatprep.mubr.bf16.mxu0 0
  %539 = vmatmul.mubr.bf16.gmra.mxu0 %v247
  %v540 = vpop.f32.mrf.mxu0
  %v541 = vadd.f32 0.0, %v540
  %v542 = vpop.f32.mrf.mxu0
  %v543 = vpop.f32.mrf.mxu0
  %v544 = vadd.f32 0.0, %v543
  %v545 = vpop.f32.mrf.mxu0
  %546 = vmatprep.mubr.bf16.mxu0 0
  %547 = vmatmul.mubr.bf16.gmra.mxu0 %v248
  %v548 = vpop.f32.mrf.mxu0
  %v549 = vadd.f32 0.0, %v548
  %v550 = vpop.f32.mrf.mxu0
  %v551 = vpop.f32.mrf.mxu0
  %v552 = vadd.f32 0.0, %v551
  %v553 = vpop.f32.mrf.mxu0
  %554 = vmatprep.mubr.bf16.mxu0 0
  %555 = vmatmul.mubr.bf16.gmra.mxu0 %v249
  %v556 = vpop.f32.mrf.mxu0
  %v557 = vadd.f32 0.0, %v556
  %v558 = vpop.f32.mrf.mxu0
  %v559 = vpop.f32.mrf.mxu0
  %v560 = vadd.f32 0.0, %v559
  %v561 = vpop.f32.mrf.mxu0
  %562 = vmatprep.mubr.bf16.mxu0 0
  %563 = vmatmul.mubr.bf16.gmra.mxu0 %v250
  %v564 = vpop.f32.mrf.mxu0
  %v565 = vadd.f32 0.0, %v564
  %v566 = vpop.f32.mrf.mxu0
  %v567 = vpop.f32.mrf.mxu0
  %v568 = vadd.f32 0.0, %v567
  %v569 = vpop.f32.mrf.mxu0
  %570 = vmatprep.mubr.bf16.mxu0 0
  %571 = vmatmul.mubr.bf16.gmra.mxu0 %v251
  %v572 = vpop.f32.mrf.mxu0
  %v573 = vadd.f32 0.0, %v572
  %v574 = vpop.f32.mrf.mxu0
  %v575 = vpop.f32.mrf.mxu0
  %v576 = vadd.f32 0.0, %v575
  %v577 = vpop.f32.mrf.mxu0
  %578 = vmatprep.mubr.bf16.mxu0 0
  %579 = vmatmul.mubr.bf16.gmra.mxu0 %v252
  %v580 = vpop.f32.mrf.mxu0
  %v581 = vadd.f32 0.0, %v580
  %v582 = vpop.f32.mrf.mxu0
  %v583 = vpop.f32.mrf.mxu0
  %v584 = vadd.f32 0.0, %v583
  %v585 = vpop.f32.mrf.mxu0
  %586 = vmatprep.mubr.bf16.mxu0 0
  %587 = vmatmul.mubr.bf16.gmra.mxu0 %v253
  %v588 = vpop.f32.mrf.mxu0
  %v589 = vadd.f32 0.0, %v588
  %v590 = vpop.f32.mrf.mxu0
  %v591 = vpop.f32.mrf.mxu0
  %v592 = vadd.f32 0.0, %v591
  %v593 = vpop.f32.mrf.mxu0
  %594 = vmatprep.mubr.bf16.mxu0 0
  %595 = vmatmul.mubr.bf16.gmra.mxu0 %v254
  %v596 = vpop.f32.mrf.mxu0
  %v597 = vadd.f32 0.0, %v596
  %v598 = vpop.f32.mrf.mxu0
  %v599 = vpop.f32.mrf.mxu0
  %v600 = vadd.f32 0.0, %v599
  %v601 = vpop.f32.mrf.mxu0
  %602 = vmatprep.mubr.bf16.mxu0 0
  %603 = vmatmul.mubr.bf16.gmra.mxu0 %v255
  %v604 = vpop.f32.mrf.mxu0
  %v605 = vadd.f32 0.0, %v604
  %v606 = vpop.f32.mrf.mxu0
  %v607 = vpop.f32.mrf.mxu0
  %v608 = vadd.f32 0.0, %v607
  %v609 = vpop.f32.mrf.mxu0
  %610 = vmatprep.mubr.bf16.mxu0 0
  %611 = vmatmul.mubr.bf16.gmra.mxu0 %v256
  %v612 = vpop.f32.mrf.mxu0
  %v613 = vadd.f32 0.0, %v612
  %v614 = vpop.f32.mrf.mxu0
  %v615 = vpop.f32.mrf.mxu0
  %v616 = vadd.f32 0.0, %v615
  %v617 = vpop.f32.mrf.mxu0
  %618 = vmatprep.mubr.bf16.mxu0 0
  %619 = vmatmul.mubr.bf16.gmra.mxu0 %v257
  %v620 = vpop.f32.mrf.mxu0
  %v621 = vadd.f32 0.0, %v620
  %v622 = vpop.f32.mrf.mxu0
  %v623 = vpop.f32.mrf.mxu0
  %v624 = vadd.f32 0.0, %v623
  %v625 = vpop.f32.mrf.mxu0
  %626 = vdwg.mxu0
  %v627 = vadd.f32 %v373, %v376
  %v628 = vadd.f32 %v627, %v381
  %v629 = vadd.f32 %v628, %v384
  %v630 = vadd.f32 %v629, %v389
  %v631 = vadd.f32 %v630, %v392
  %v632 = vadd.f32 %v631, %v397
  %v633 = vadd.f32 %v632, %v400
  %v634 = vadd.f32 %v633, %v405
  %v635 = vadd.f32 %v634, %v408
  %v636 = vadd.f32 %v635, %v413
  %v637 = vadd.f32 %v636, %v416
  %v638 = vadd.f32 %v637, %v421
  %v639 = vadd.f32 %v638, %v424
  %v640 = vadd.f32 %v639, %v429
  %v641 = vadd.f32 %v640, %v432
  %v642 = vadd.f32 %v641, %v437
  %v643 = vadd.f32 %v642, %v440
  %v644 = vadd.f32 %v643, %v445
  %v645 = vadd.f32 %v644, %v448
  %v646 = vadd.f32 %v645, %v453
  %v647 = vadd.f32 %v646, %v456
  %v648 = vadd.f32 %v647, %v461
  %v649 = vadd.f32 %v648, %v464
  %v650 = vadd.f32 %v649, %v469
  %v651 = vadd.f32 %v650, %v472
  %v652 = vadd.f32 %v651, %v477
  %v653 = vadd.f32 %v652, %v480
  %v654 = vadd.f32 %v653, %v485
  %v655 = vadd.f32 %v654, %v488
  %v656 = vadd.f32 %v655, %v493
  %v657 = vadd.f32 %v656, %v496
  %v658 = vadd.f32 %v657, %v501
  %v659 = vadd.f32 %v658, %v504
  %v660 = vadd.f32 %v659, %v509
  %v661 = vadd.f32 %v660, %v512
  %v662 = vadd.f32 %v661, %v517
  %v663 = vadd.f32 %v662, %v520
  %v664 = vadd.f32 %v663, %v525
  %v665 = vadd.f32 %v664, %v528
  %v666 = vadd.f32 %v665, %v533
  %v667 = vadd.f32 %v666, %v536
  %v668 = vadd.f32 %v667, %v541
  %v669 = vadd.f32 %v668, %v544
  %v670 = vadd.f32 %v669, %v549
  %v671 = vadd.f32 %v670, %v552
  %v672 = vadd.f32 %v671, %v557
  %v673 = vadd.f32 %v672, %v560
  %v674 = vadd.f32 %v673, %v565
  %v675 = vadd.f32 %v674, %v568
  %v676 = vadd.f32 %v675, %v573
  %v677 = vadd.f32 %v676, %v576
  %v678 = vadd.f32 %v677, %v581
  %v679 = vadd.f32 %v678, %v584
  %v680 = vadd.f32 %v679, %v589
  %v681 = vadd.f32 %v680, %v592
  %v682 = vadd.f32 %v681, %v597
  %v683 = vadd.f32 %v682, %v600
  %v684 = vadd.f32 %v683, %v605
  %v685 = vadd.f32 %v684, %v608
  %v686 = vadd.f32 %v685, %v613
  %v687 = vadd.f32 %v686, %v616
  %v688 = vadd.f32 %v687, %v621
  %v689 = vadd.f32 %v688, %v624
  %v690 = vrot.slane %v689, 4
  %v691 = vadd.f32 %v689, %v690
  %v692 = vrot.slane %v691, 2
  %v693 = vadd.f32 %v691, %v692
  %v694 = vrot.slane %v693, 1
  %v695 = vadd.f32 %v693, %v694
  %v696 = vmul.f32 %v695, 0.001953125
  %v697 = vmul.f32 %v373, %v373
  %v698 = vmul.f32 %v376, %v376
  %v699 = vmul.f32 %v381, %v381
  %v700 = vmul.f32 %v384, %v384
  %v701 = vmul.f32 %v389, %v389
  %v702 = vmul.f32 %v392, %v392
  %v703 = vmul.f32 %v397, %v397
  %v704 = vmul.f32 %v400, %v400
  %v705 = vmul.f32 %v405, %v405
  %v706 = vmul.f32 %v408, %v408
  %v707 = vmul.f32 %v413, %v413
  %v708 = vmul.f32 %v416, %v416
  %v709 = vmul.f32 %v421, %v421
  %v710 = vmul.f32 %v424, %v424
  %v711 = vmul.f32 %v429, %v429
  %v712 = vmul.f32 %v432, %v432
  %v713 = vmul.f32 %v437, %v437
  %v714 = vmul.f32 %v440, %v440
  %v715 = vmul.f32 %v445, %v445
  %v716 = vmul.f32 %v448, %v448
  %v717 = vmul.f32 %v453, %v453
  %v718 = vmul.f32 %v456, %v456
  %v719 = vmul.f32 %v461, %v461
  %v720 = vmul.f32 %v464, %v464
  %v721 = vmul.f32 %v469, %v469
  %v722 = vmul.f32 %v472, %v472
  %v723 = vmul.f32 %v477, %v477
  %v724 = vmul.f32 %v480, %v480
  %v725 = vmul.f32 %v485, %v485
  %v726 = vmul.f32 %v488, %v488
  %v727 = vmul.f32 %v493, %v493
  %v728 = vmul.f32 %v496, %v496
  %v729 = vmul.f32 %v501, %v501
  %v730 = vmul.f32 %v504, %v504
  %v731 = vmul.f32 %v509, %v509
  %v732 = vmul.f32 %v512, %v512
  %v733 = vmul.f32 %v517, %v517
  %v734 = vmul.f32 %v520, %v520
  %v735 = vmul.f32 %v525, %v525
  %v736 = vmul.f32 %v528, %v528
  %v737 = vmul.f32 %v533, %v533
  %v738 = vmul.f32 %v536, %v536
  %v739 = vmul.f32 %v541, %v541
  %v740 = vmul.f32 %v544, %v544
  %v741 = vmul.f32 %v549, %v549
  %v742 = vmul.f32 %v552, %v552
  %v743 = vmul.f32 %v557, %v557
  %v744 = vmul.f32 %v560, %v560
  %v745 = vmul.f32 %v565, %v565
  %v746 = vmul.f32 %v568, %v568
  %v747 = vmul.f32 %v573, %v573
  %v748 = vmul.f32 %v576, %v576
  %v749 = vmul.f32 %v581, %v581
  %v750 = vmul.f32 %v584, %v584
  %v751 = vmul.f32 %v589, %v589
  %v752 = vmul.f32 %v592, %v592
  %v753 = vmul.f32 %v597, %v597
  %v754 = vmul.f32 %v600, %v600
  %v755 = vmul.f32 %v605, %v605
  %v756 = vmul.f32 %v608, %v608
  %v757 = vmul.f32 %v613, %v613
  %v758 = vmul.f32 %v616, %v616
  %v759 = vmul.f32 %v621, %v621
  %v760 = vmul.f32 %v624, %v624
  %v761 = vadd.f32 %v697, %v698
  %v762 = vadd.f32 %v761, %v699
  %v763 = vadd.f32 %v762, %v700
  %v764 = vadd.f32 %v763, %v701
  %v765 = vadd.f32 %v764, %v702
  %v766 = vadd.f32 %v765, %v703
  %v767 = vadd.f32 %v766, %v704
  %v768 = vadd.f32 %v767, %v705
  %v769 = vadd.f32 %v768, %v706
  %v770 = vadd.f32 %v769, %v707
  %v771 = vadd.f32 %v770, %v708
  %v772 = vadd.f32 %v771, %v709
  %v773 = vadd.f32 %v772, %v710
  %v774 = vadd.f32 %v773, %v711
  %v775 = vadd.f32 %v774, %v712
  %v776 = vadd.f32 %v775, %v713
  %v777 = vadd.f32 %v776, %v714
  %v778 = vadd.f32 %v777, %v715
  %v779 = vadd.f32 %v778, %v716
  %v780 = vadd.f32 %v779, %v717
  %v781 = vadd.f32 %v780, %v718
  %v782 = vadd.f32 %v781, %v719
  %v783 = vadd.f32 %v782, %v720
  %v784 = vadd.f32 %v783, %v721
  %v785 = vadd.f32 %v784, %v722
  %v786 = vadd.f32 %v785, %v723
  %v787 = vadd.f32 %v786, %v724
  %v788 = vadd.f32 %v787, %v725
  %v789 = vadd.f32 %v788, %v726
  %v790 = vadd.f32 %v789, %v727
  %v791 = vadd.f32 %v790, %v728
  %v792 = vadd.f32 %v791, %v729
  %v793 = vadd.f32 %v792, %v730
  %v794 = vadd.f32 %v793, %v731
  %v795 = vadd.f32 %v794, %v732
  %v796 = vadd.f32 %v795, %v733
  %v797 = vadd.f32 %v796, %v734
  %v798 = vadd.f32 %v797, %v735
  %v799 = vadd.f32 %v798, %v736
  %v800 = vadd.f32 %v799, %v737
  %v801 = vadd.f32 %v800, %v738
  %v802 = vadd.f32 %v801, %v739
  %v803 = vadd.f32 %v802, %v740
  %v804 = vadd.f32 %v803, %v741
  %v805 = vadd.f32 %v804, %v742
  %v806 = vadd.f32 %v805, %v743
  %v807 = vadd.f32 %v806, %v744
  %v808 = vadd.f32 %v807, %v745
  %v809 = vadd.f32 %v808, %v746
  %v810 = vadd.f32 %v809, %v747
  %v811 = vadd.f32 %v810, %v748
  %v812 = vadd.f32 %v811, %v749
  %v813 = vadd.f32 %v812, %v750
  %v814 = vadd.f32 %v813, %v751
  %v815 = vadd.f32 %v814, %v752
  %v816 = vadd.f32 %v815, %v753
  %v817 = vadd.f32 %v816, %v754
  %v818 = vadd.f32 %v817, %v755
  %v819 = vadd.f32 %v818, %v756
  %v820 = vadd.f32 %v819, %v757
  %v821 = vadd.f32 %v820, %v758
  %v822 = vadd.f32 %v821, %v759
  %v823 = vadd.f32 %v822, %v760
  %v824 = vrot.slane %v823, 4
  %v825 = vadd.f32 %v823, %v824
  %v826 = vrot.slane %v825, 2
  %v827 = vadd.f32 %v825, %v826
  %v828 = vrot.slane %v827, 1
  %v829 = vadd.f32 %v827, %v828
  %v830 = vmul.f32 %v829, 0.001953125
  %v831 = vmul.f32 %v696, %v696
  %v832 = vsub.f32 %v830, %v831
  %v833 = vmax.f32 %v832, 0.0
  %v834 = vld [vmem:[%s2] sm:$0x1]
  %v835 = vadd.f32 %v833, 1e-05
  %v836 = vrsqrt.pop %v835
  %v837 = vmul.f32 %v834, %v836
  %v838 = vld [vmem:[%s3] sm:$0x1]
  %v839 = vmul.f32 %v696, %v837
  %v840 = vsub.f32 %v838, %v839
  %v842 = vlaneseq
  %v843 = vshrl.u32 %v842, 7
  %v844 = vsub.s32 0, %v843
  %v845 = vrot.slane %v837, %v844
  %v847 = vmul.f32 %v373, %v845
  %v848 = vmul.f32 %v376, %v845
  %v849 = vmul.f32 %v381, %v845
  %v850 = vmul.f32 %v384, %v845
  %v851 = vmul.f32 %v389, %v845
  %v852 = vmul.f32 %v392, %v845
  %v853 = vmul.f32 %v397, %v845
  %v854 = vmul.f32 %v400, %v845
  %v855 = vmul.f32 %v405, %v845
  %v856 = vmul.f32 %v408, %v845
  %v857 = vmul.f32 %v413, %v845
  %v858 = vmul.f32 %v416, %v845
  %v859 = vmul.f32 %v421, %v845
  %v860 = vmul.f32 %v424, %v845
  %v861 = vmul.f32 %v429, %v845
  %v862 = vmul.f32 %v432, %v845
  %v863 = vmul.f32 %v437, %v845
  %v864 = vmul.f32 %v440, %v845
  %v865 = vmul.f32 %v445, %v845
  %v866 = vmul.f32 %v448, %v845
  %v867 = vmul.f32 %v453, %v845
  %v868 = vmul.f32 %v456, %v845
  %v869 = vmul.f32 %v461, %v845
  %v870 = vmul.f32 %v464, %v845
  %v871 = vmul.f32 %v469, %v845
  %v872 = vmul.f32 %v472, %v845
  %v873 = vmul.f32 %v477, %v845
  %v874 = vmul.f32 %v480, %v845
  %v875 = vmul.f32 %v485, %v845
  %v876 = vmul.f32 %v488, %v845
  %v877 = vmul.f32 %v493, %v845
  %v878 = vmul.f32 %v496, %v845
  %v879 = vmul.f32 %v501, %v845
  %v880 = vmul.f32 %v504, %v845
  %v881 = vmul.f32 %v509, %v845
  %v882 = vmul.f32 %v512, %v845
  %v883 = vmul.f32 %v517, %v845
  %v884 = vmul.f32 %v520, %v845
  %v885 = vmul.f32 %v525, %v845
  %v886 = vmul.f32 %v528, %v845
  %v887 = vmul.f32 %v533, %v845
  %v888 = vmul.f32 %v536, %v845
  %v889 = vmul.f32 %v541, %v845
  %v890 = vmul.f32 %v544, %v845
  %v891 = vmul.f32 %v549, %v845
  %v892 = vmul.f32 %v552, %v845
  %v893 = vmul.f32 %v557, %v845
  %v894 = vmul.f32 %v560, %v845
  %v895 = vmul.f32 %v565, %v845
  %v896 = vmul.f32 %v568, %v845
  %v897 = vmul.f32 %v573, %v845
  %v898 = vmul.f32 %v576, %v845
  %v899 = vmul.f32 %v581, %v845
  %v900 = vmul.f32 %v584, %v845
  %v901 = vmul.f32 %v589, %v845
  %v902 = vmul.f32 %v592, %v845
  %v903 = vmul.f32 %v597, %v845
  %v904 = vmul.f32 %v600, %v845
  %v905 = vmul.f32 %v605, %v845
  %v906 = vmul.f32 %v608, %v845
  %v907 = vmul.f32 %v613, %v845
  %v908 = vmul.f32 %v616, %v845
  %v909 = vmul.f32 %v621, %v845
  %v910 = vmul.f32 %v624, %v845
  %v912 = vlaneseq
  %v913 = vshrl.u32 %v912, 7
  %v914 = vsub.s32 0, %v913
  %v915 = vrot.slane %v840, %v914
  %v917 = vadd.f32 %v847, %v915
  %v918 = vadd.f32 %v848, %v915
  %v919 = vadd.f32 %v849, %v915
  %v920 = vadd.f32 %v850, %v915
  %v921 = vadd.f32 %v851, %v915
  %v922 = vadd.f32 %v852, %v915
  %v923 = vadd.f32 %v853, %v915
  %v924 = vadd.f32 %v854, %v915
  %v925 = vadd.f32 %v855, %v915
  %v926 = vadd.f32 %v856, %v915
  %v927 = vadd.f32 %v857, %v915
  %v928 = vadd.f32 %v858, %v915
  %v929 = vadd.f32 %v859, %v915
  %v930 = vadd.f32 %v860, %v915
  %v931 = vadd.f32 %v861, %v915
  %v932 = vadd.f32 %v862, %v915
  %v933 = vadd.f32 %v863, %v915
  %v934 = vadd.f32 %v864, %v915
  %v935 = vadd.f32 %v865, %v915
  %v936 = vadd.f32 %v866, %v915
  %v937 = vadd.f32 %v867, %v915
  %v938 = vadd.f32 %v868, %v915
  %v939 = vadd.f32 %v869, %v915
  %v940 = vadd.f32 %v870, %v915
  %v941 = vadd.f32 %v871, %v915
  %v942 = vadd.f32 %v872, %v915
  %v943 = vadd.f32 %v873, %v915
  %v944 = vadd.f32 %v874, %v915
  %v945 = vadd.f32 %v875, %v915
  %v946 = vadd.f32 %v876, %v915
  %v947 = vadd.f32 %v877, %v915
  %v948 = vadd.f32 %v878, %v915
  %v949 = vadd.f32 %v879, %v915
  %v950 = vadd.f32 %v880, %v915
  %v951 = vadd.f32 %v881, %v915
  %v952 = vadd.f32 %v882, %v915
  %v953 = vadd.f32 %v883, %v915
  %v954 = vadd.f32 %v884, %v915
  %v955 = vadd.f32 %v885, %v915
  %v956 = vadd.f32 %v886, %v915
  %v957 = vadd.f32 %v887, %v915
  %v958 = vadd.f32 %v888, %v915
  %v959 = vadd.f32 %v889, %v915
  %v960 = vadd.f32 %v890, %v915
  %v961 = vadd.f32 %v891, %v915
  %v962 = vadd.f32 %v892, %v915
  %v963 = vadd.f32 %v893, %v915
  %v964 = vadd.f32 %v894, %v915
  %v965 = vadd.f32 %v895, %v915
  %v966 = vadd.f32 %v896, %v915
  %v967 = vadd.f32 %v897, %v915
  %v968 = vadd.f32 %v898, %v915
  %v969 = vadd.f32 %v899, %v915
  %v970 = vadd.f32 %v900, %v915
  %v971 = vadd.f32 %v901, %v915
  %v972 = vadd.f32 %v902, %v915
  %v973 = vadd.f32 %v903, %v915
  %v974 = vadd.f32 %v904, %v915
  %v975 = vadd.f32 %v905, %v915
  %v976 = vadd.f32 %v906, %v915
  %v977 = vadd.f32 %v907, %v915
  %v978 = vadd.f32 %v908, %v915
  %v979 = vadd.f32 %v909, %v915
  %v980 = vadd.f32 %v910, %v915
  %v981 = vmul.f32 %v917, 0.2
  %v982 = vmul.f32 %v918, 0.2
  %v983 = vmul.f32 %v919, 0.2
  %v984 = vmul.f32 %v920, 0.2
  %v985 = vmul.f32 %v921, 0.2
  %v986 = vmul.f32 %v922, 0.2
  %v987 = vmul.f32 %v923, 0.2
  %v988 = vmul.f32 %v924, 0.2
  %v989 = vmul.f32 %v925, 0.2
  %v990 = vmul.f32 %v926, 0.2
  %v991 = vmul.f32 %v927, 0.2
  %v992 = vmul.f32 %v928, 0.2
  %v993 = vmul.f32 %v929, 0.2
  %v994 = vmul.f32 %v930, 0.2
  %v995 = vmul.f32 %v931, 0.2
  %v996 = vmul.f32 %v932, 0.2
  %v997 = vmul.f32 %v933, 0.2
  %v998 = vmul.f32 %v934, 0.2
  %v999 = vmul.f32 %v935, 0.2
  %v1000 = vmul.f32 %v936, 0.2
  %v1001 = vmul.f32 %v937, 0.2
  %v1002 = vmul.f32 %v938, 0.2
  %v1003 = vmul.f32 %v939, 0.2
  %v1004 = vmul.f32 %v940, 0.2
  %v1005 = vmul.f32 %v941, 0.2
  %v1006 = vmul.f32 %v942, 0.2
  %v1007 = vmul.f32 %v943, 0.2
  %v1008 = vmul.f32 %v944, 0.2
  %v1009 = vmul.f32 %v945, 0.2
  %v1010 = vmul.f32 %v946, 0.2
  %v1011 = vmul.f32 %v947, 0.2
  %v1012 = vmul.f32 %v948, 0.2
  %v1013 = vmul.f32 %v949, 0.2
  %v1014 = vmul.f32 %v950, 0.2
  %v1015 = vmul.f32 %v951, 0.2
  %v1016 = vmul.f32 %v952, 0.2
  %v1017 = vmul.f32 %v953, 0.2
  %v1018 = vmul.f32 %v954, 0.2
  %v1019 = vmul.f32 %v955, 0.2
  %v1020 = vmul.f32 %v956, 0.2
  %v1021 = vmul.f32 %v957, 0.2
  %v1022 = vmul.f32 %v958, 0.2
  %v1023 = vmul.f32 %v959, 0.2
  %v1024 = vmul.f32 %v960, 0.2
  %v1025 = vmul.f32 %v961, 0.2
  %v1026 = vmul.f32 %v962, 0.2
  %v1027 = vmul.f32 %v963, 0.2
  %v1028 = vmul.f32 %v964, 0.2
  %v1029 = vmul.f32 %v965, 0.2
  %v1030 = vmul.f32 %v966, 0.2
  %v1031 = vmul.f32 %v967, 0.2
  %v1032 = vmul.f32 %v968, 0.2
  %v1033 = vmul.f32 %v969, 0.2
  %v1034 = vmul.f32 %v970, 0.2
  %v1035 = vmul.f32 %v971, 0.2
  %v1036 = vmul.f32 %v972, 0.2
  %v1037 = vmul.f32 %v973, 0.2
  %v1038 = vmul.f32 %v974, 0.2
  %v1039 = vmul.f32 %v975, 0.2
  %v1040 = vmul.f32 %v976, 0.2
  %v1041 = vmul.f32 %v977, 0.2
  %v1042 = vmul.f32 %v978, 0.2
  %v1043 = vmul.f32 %v979, 0.2
  %v1044 = vmul.f32 %v980, 0.2
  %v1045 = vmax.f32 %v917, %v981
  %v1046 = vmax.f32 %v918, %v982
  %v1047 = vmax.f32 %v919, %v983
  %v1048 = vmax.f32 %v920, %v984
  %v1049 = vmax.f32 %v921, %v985
  %v1050 = vmax.f32 %v922, %v986
  %v1051 = vmax.f32 %v923, %v987
  %v1052 = vmax.f32 %v924, %v988
  %v1053 = vmax.f32 %v925, %v989
  %v1054 = vmax.f32 %v926, %v990
  %v1055 = vmax.f32 %v927, %v991
  %v1056 = vmax.f32 %v928, %v992
  %v1057 = vmax.f32 %v929, %v993
  %v1058 = vmax.f32 %v930, %v994
  %v1059 = vmax.f32 %v931, %v995
  %v1060 = vmax.f32 %v932, %v996
  %v1061 = vmax.f32 %v933, %v997
  %v1062 = vmax.f32 %v934, %v998
  %v1063 = vmax.f32 %v935, %v999
  %v1064 = vmax.f32 %v936, %v1000
  %v1065 = vmax.f32 %v937, %v1001
  %v1066 = vmax.f32 %v938, %v1002
  %v1067 = vmax.f32 %v939, %v1003
  %v1068 = vmax.f32 %v940, %v1004
  %v1069 = vmax.f32 %v941, %v1005
  %v1070 = vmax.f32 %v942, %v1006
  %v1071 = vmax.f32 %v943, %v1007
  %v1072 = vmax.f32 %v944, %v1008
  %v1073 = vmax.f32 %v945, %v1009
  %v1074 = vmax.f32 %v946, %v1010
  %v1075 = vmax.f32 %v947, %v1011
  %v1076 = vmax.f32 %v948, %v1012
  %v1077 = vmax.f32 %v949, %v1013
  %v1078 = vmax.f32 %v950, %v1014
  %v1079 = vmax.f32 %v951, %v1015
  %v1080 = vmax.f32 %v952, %v1016
  %v1081 = vmax.f32 %v953, %v1017
  %v1082 = vmax.f32 %v954, %v1018
  %v1083 = vmax.f32 %v955, %v1019
  %v1084 = vmax.f32 %v956, %v1020
  %v1085 = vmax.f32 %v957, %v1021
  %v1086 = vmax.f32 %v958, %v1022
  %v1087 = vmax.f32 %v959, %v1023
  %v1088 = vmax.f32 %v960, %v1024
  %v1089 = vmax.f32 %v961, %v1025
  %v1090 = vmax.f32 %v962, %v1026
  %v1091 = vmax.f32 %v963, %v1027
  %v1092 = vmax.f32 %v964, %v1028
  %v1093 = vmax.f32 %v965, %v1029
  %v1094 = vmax.f32 %v966, %v1030
  %v1095 = vmax.f32 %v967, %v1031
  %v1096 = vmax.f32 %v968, %v1032
  %v1097 = vmax.f32 %v969, %v1033
  %v1098 = vmax.f32 %v970, %v1034
  %v1099 = vmax.f32 %v971, %v1035
  %v1100 = vmax.f32 %v972, %v1036
  %v1101 = vmax.f32 %v973, %v1037
  %v1102 = vmax.f32 %v974, %v1038
  %v1103 = vmax.f32 %v975, %v1039
  %v1104 = vmax.f32 %v976, %v1040
  %v1105 = vmax.f32 %v977, %v1041
  %v1106 = vmax.f32 %v978, %v1042
  %v1107 = vmax.f32 %v979, %v1043
  %v1108 = vmax.f32 %v980, %v1044
  %v1109 = vpack.c.bf16 %v1046, %v1045
  %v1110 = vpack.c.bf16 %v1048, %v1047
  %v1111 = vpack.c.bf16 %v1050, %v1049
  %v1112 = vpack.c.bf16 %v1052, %v1051
  %v1113 = vpack.c.bf16 %v1054, %v1053
  %v1114 = vpack.c.bf16 %v1056, %v1055
  %v1115 = vpack.c.bf16 %v1058, %v1057
  %v1116 = vpack.c.bf16 %v1060, %v1059
  %v1117 = vpack.c.bf16 %v1062, %v1061
  %v1118 = vpack.c.bf16 %v1064, %v1063
  %v1119 = vpack.c.bf16 %v1066, %v1065
  %v1120 = vpack.c.bf16 %v1068, %v1067
  %v1121 = vpack.c.bf16 %v1070, %v1069
  %v1122 = vpack.c.bf16 %v1072, %v1071
  %v1123 = vpack.c.bf16 %v1074, %v1073
  %v1124 = vpack.c.bf16 %v1076, %v1075
  %v1125 = vpack.c.bf16 %v1078, %v1077
  %v1126 = vpack.c.bf16 %v1080, %v1079
  %v1127 = vpack.c.bf16 %v1082, %v1081
  %v1128 = vpack.c.bf16 %v1084, %v1083
  %v1129 = vpack.c.bf16 %v1086, %v1085
  %v1130 = vpack.c.bf16 %v1088, %v1087
  %v1131 = vpack.c.bf16 %v1090, %v1089
  %v1132 = vpack.c.bf16 %v1092, %v1091
  %v1133 = vpack.c.bf16 %v1094, %v1093
  %v1134 = vpack.c.bf16 %v1096, %v1095
  %v1135 = vpack.c.bf16 %v1098, %v1097
  %v1136 = vpack.c.bf16 %v1100, %v1099
  %v1137 = vpack.c.bf16 %v1102, %v1101
  %v1138 = vpack.c.bf16 %v1104, %v1103
  %v1139 = vpack.c.bf16 %v1106, %v1105
  %v1140 = vpack.c.bf16 %v1108, %v1107
  %v1173 = vunpack.c.l.b16 %v1109
  %v1174 = vunpack.c.h.b16 %v1109
  %v1175 = vunpack.c.l.b16 %v1110
  %v1176 = vunpack.c.h.b16 %v1110
  %v1177 = vunpack.c.l.b16 %v1111
  %v1178 = vunpack.c.h.b16 %v1111
  %v1179 = vunpack.c.l.b16 %v1112
  %v1180 = vunpack.c.h.b16 %v1112
  %v1181 = vunpack.c.l.b16 %v1113
  %v1182 = vunpack.c.h.b16 %v1113
  %v1183 = vunpack.c.l.b16 %v1114
  %v1184 = vunpack.c.h.b16 %v1114
  %v1185 = vunpack.c.l.b16 %v1115
  %v1186 = vunpack.c.h.b16 %v1115
  %v1187 = vunpack.c.l.b16 %v1116
  %v1188 = vunpack.c.h.b16 %v1116
  %v1189 = vunpack.c.l.b16 %v1117
  %v1190 = vunpack.c.h.b16 %v1117
  %v1191 = vunpack.c.l.b16 %v1118
  %v1192 = vunpack.c.h.b16 %v1118
  %v1193 = vunpack.c.l.b16 %v1119
  %v1194 = vunpack.c.h.b16 %v1119
  %v1195 = vunpack.c.l.b16 %v1120
  %v1196 = vunpack.c.h.b16 %v1120
  %v1197 = vunpack.c.l.b16 %v1121
  %v1198 = vunpack.c.h.b16 %v1121
  %v1199 = vunpack.c.l.b16 %v1122
  %v1200 = vunpack.c.h.b16 %v1122
  %v1201 = vunpack.c.l.b16 %v1123
  %v1202 = vunpack.c.h.b16 %v1123
  %v1203 = vunpack.c.l.b16 %v1124
  %v1204 = vunpack.c.h.b16 %v1124
  %v1205 = vunpack.c.l.b16 %v1125
  %v1206 = vunpack.c.h.b16 %v1125
  %v1207 = vunpack.c.l.b16 %v1126
  %v1208 = vunpack.c.h.b16 %v1126
  %v1209 = vunpack.c.l.b16 %v1127
  %v1210 = vunpack.c.h.b16 %v1127
  %v1211 = vunpack.c.l.b16 %v1128
  %v1212 = vunpack.c.h.b16 %v1128
  %v1213 = vunpack.c.l.b16 %v1129
  %v1214 = vunpack.c.h.b16 %v1129
  %v1215 = vunpack.c.l.b16 %v1130
  %v1216 = vunpack.c.h.b16 %v1130
  %v1217 = vunpack.c.l.b16 %v1131
  %v1218 = vunpack.c.h.b16 %v1131
  %v1219 = vunpack.c.l.b16 %v1132
  %v1220 = vunpack.c.h.b16 %v1132
  %v1221 = vunpack.c.l.b16 %v1133
  %v1222 = vunpack.c.h.b16 %v1133
  %v1223 = vunpack.c.l.b16 %v1134
  %v1224 = vunpack.c.h.b16 %v1134
  %v1225 = vunpack.c.l.b16 %v1135
  %v1226 = vunpack.c.h.b16 %v1135
  %v1227 = vunpack.c.l.b16 %v1136
  %v1228 = vunpack.c.h.b16 %v1136
  %v1229 = vunpack.c.l.b16 %v1137
  %v1230 = vunpack.c.h.b16 %v1137
  %v1231 = vunpack.c.l.b16 %v1138
  %v1232 = vunpack.c.h.b16 %v1138
  %v1233 = vunpack.c.l.b16 %v1139
  %v1234 = vunpack.c.h.b16 %v1139
  %v1235 = vunpack.c.l.b16 %v1140
  %v1236 = vunpack.c.h.b16 %v1140
  %v1237 = vpack.c.b16 %v1173, %v1173
  %v1238 = vpack.c.b16 %v1174, %v1174
  %v1239 = vpack.c.b16 %v1175, %v1175
  %v1240 = vpack.c.b16 %v1176, %v1176
  %v1241 = vpack.c.b16 %v1177, %v1177
  %v1242 = vpack.c.b16 %v1178, %v1178
  %v1243 = vpack.c.b16 %v1179, %v1179
  %v1244 = vpack.c.b16 %v1180, %v1180
  %v1245 = vpack.c.b16 %v1181, %v1181
  %v1246 = vpack.c.b16 %v1182, %v1182
  %v1247 = vpack.c.b16 %v1183, %v1183
  %v1248 = vpack.c.b16 %v1184, %v1184
  %v1249 = vpack.c.b16 %v1185, %v1185
  %v1250 = vpack.c.b16 %v1186, %v1186
  %v1251 = vpack.c.b16 %v1187, %v1187
  %v1252 = vpack.c.b16 %v1188, %v1188
  %v1253 = vpack.c.b16 %v1189, %v1189
  %v1254 = vpack.c.b16 %v1190, %v1190
  %v1255 = vpack.c.b16 %v1191, %v1191
  %v1256 = vpack.c.b16 %v1192, %v1192
  %v1257 = vpack.c.b16 %v1193, %v1193
  %v1258 = vpack.c.b16 %v1194, %v1194
  %v1259 = vpack.c.b16 %v1195, %v1195
  %v1260 = vpack.c.b16 %v1196, %v1196
  %v1261 = vpack.c.b16 %v1197, %v1197
  %v1262 = vpack.c.b16 %v1198, %v1198
  %v1263 = vpack.c.b16 %v1199, %v1199
  %v1264 = vpack.c.b16 %v1200, %v1200
  %v1265 = vpack.c.b16 %v1201, %v1201
  %v1266 = vpack.c.b16 %v1202, %v1202
  %v1267 = vpack.c.b16 %v1203, %v1203
  %v1268 = vpack.c.b16 %v1204, %v1204
  %v1269 = vpack.c.b16 %v1205, %v1205
  %v1270 = vpack.c.b16 %v1206, %v1206
  %v1271 = vpack.c.b16 %v1207, %v1207
  %v1272 = vpack.c.b16 %v1208, %v1208
  %v1273 = vpack.c.b16 %v1209, %v1209
  %v1274 = vpack.c.b16 %v1210, %v1210
  %v1275 = vpack.c.b16 %v1211, %v1211
  %v1276 = vpack.c.b16 %v1212, %v1212
  %v1277 = vpack.c.b16 %v1213, %v1213
  %v1278 = vpack.c.b16 %v1214, %v1214
  %v1279 = vpack.c.b16 %v1215, %v1215
  %v1280 = vpack.c.b16 %v1216, %v1216
  %v1281 = vpack.c.b16 %v1217, %v1217
  %v1282 = vpack.c.b16 %v1218, %v1218
  %v1283 = vpack.c.b16 %v1219, %v1219
  %v1284 = vpack.c.b16 %v1220, %v1220
  %v1285 = vpack.c.b16 %v1221, %v1221
  %v1286 = vpack.c.b16 %v1222, %v1222
  %v1287 = vpack.c.b16 %v1223, %v1223
  %v1288 = vpack.c.b16 %v1224, %v1224
  %v1289 = vpack.c.b16 %v1225, %v1225
  %v1290 = vpack.c.b16 %v1226, %v1226
  %v1291 = vpack.c.b16 %v1227, %v1227
  %v1292 = vpack.c.b16 %v1228, %v1228
  %v1293 = vpack.c.b16 %v1229, %v1229
  %v1294 = vpack.c.b16 %v1230, %v1230
  %v1295 = vpack.c.b16 %v1231, %v1231
  %v1296 = vpack.c.b16 %v1232, %v1232
  %v1297 = vpack.c.b16 %v1233, %v1233
  %v1298 = vpack.c.b16 %v1234, %v1234
  %v1299 = vpack.c.b16 %v1235, %v1235
  %v1300 = vpack.c.b16 %v1236, %v1236
  %1365 = vst [vmem:[%s4] sm:$0xf] %v1237
  %1366 = vst [vmem:[%s4 + $0x4] sm:$0xf] %v1238
  %1367 = vst [vmem:[%s4 + $0x8] sm:$0xf] %v1239
  %1368 = vst [vmem:[%s4 + $0xc] sm:$0xf] %v1240
  %1369 = vst [vmem:[%s4 + $0x10] sm:$0xf] %v1241
  %1370 = vst [vmem:[%s4 + $0x14] sm:$0xf] %v1242
  %1371 = vst [vmem:[%s4 + $0x18] sm:$0xf] %v1243
  %1372 = vst [vmem:[%s4 + $0x1c] sm:$0xf] %v1244
  %1373 = vst [vmem:[%s4 + $0x20] sm:$0xf] %v1245
  %1374 = vst [vmem:[%s4 + $0x24] sm:$0xf] %v1246
  %1375 = vst [vmem:[%s4 + $0x28] sm:$0xf] %v1247
  %1376 = vst [vmem:[%s4 + $0x2c] sm:$0xf] %v1248
  %1377 = vst [vmem:[%s4 + $0x30] sm:$0xf] %v1249
  %1378 = vst [vmem:[%s4 + $0x34] sm:$0xf] %v1250
  %1379 = vst [vmem:[%s4 + $0x38] sm:$0xf] %v1251
  %1380 = vst [vmem:[%s4 + $0x3c] sm:$0xf] %v1252
  %1381 = vst [vmem:[%s4 + $0x40] sm:$0xf] %v1253
  %1382 = vst [vmem:[%s4 + $0x44] sm:$0xf] %v1254
  %1383 = vst [vmem:[%s4 + $0x48] sm:$0xf] %v1255
  %1384 = vst [vmem:[%s4 + $0x4c] sm:$0xf] %v1256
  %1385 = vst [vmem:[%s4 + $0x50] sm:$0xf] %v1257
  %1386 = vst [vmem:[%s4 + $0x54] sm:$0xf] %v1258
  %1387 = vst [vmem:[%s4 + $0x58] sm:$0xf] %v1259
  %1388 = vst [vmem:[%s4 + $0x5c] sm:$0xf] %v1260
  %1389 = vst [vmem:[%s4 + $0x60] sm:$0xf] %v1261
  %1390 = vst [vmem:[%s4 + $0x64] sm:$0xf] %v1262
  %1391 = vst [vmem:[%s4 + $0x68] sm:$0xf] %v1263
  %1392 = vst [vmem:[%s4 + $0x6c] sm:$0xf] %v1264
  %1393 = vst [vmem:[%s4 + $0x70] sm:$0xf] %v1265
  %1394 = vst [vmem:[%s4 + $0x74] sm:$0xf] %v1266
  %1395 = vst [vmem:[%s4 + $0x78] sm:$0xf] %v1267
  %1396 = vst [vmem:[%s4 + $0x7c] sm:$0xf] %v1268
  %1397 = vst [vmem:[%s4 + $0x80] sm:$0xf] %v1269
  %1398 = vst [vmem:[%s4 + $0x84] sm:$0xf] %v1270
  %1399 = vst [vmem:[%s4 + $0x88] sm:$0xf] %v1271
  %1400 = vst [vmem:[%s4 + $0x8c] sm:$0xf] %v1272
  %1401 = vst [vmem:[%s4 + $0x90] sm:$0xf] %v1273
  %1402 = vst [vmem:[%s4 + $0x94] sm:$0xf] %v1274
  %1403 = vst [vmem:[%s4 + $0x98] sm:$0xf] %v1275
  %1404 = vst [vmem:[%s4 + $0x9c] sm:$0xf] %v1276
  %1405 = vst [vmem:[%s4 + $0xa0] sm:$0xf] %v1277
  %1406 = vst [vmem:[%s4 + $0xa4] sm:$0xf] %v1278
  %1407 = vst [vmem:[%s4 + $0xa8] sm:$0xf] %v1279
  %1408 = vst [vmem:[%s4 + $0xac] sm:$0xf] %v1280
  %1409 = vst [vmem:[%s4 + $0xb0] sm:$0xf] %v1281
  %1410 = vst [vmem:[%s4 + $0xb4] sm:$0xf] %v1282
  %1411 = vst [vmem:[%s4 + $0xb8] sm:$0xf] %v1283
  %1412 = vst [vmem:[%s4 + $0xbc] sm:$0xf] %v1284
  %1413 = vst [vmem:[%s4 + $0xc0] sm:$0xf] %v1285
  %1414 = vst [vmem:[%s4 + $0xc4] sm:$0xf] %v1286
  %1415 = vst [vmem:[%s4 + $0xc8] sm:$0xf] %v1287
  %1416 = vst [vmem:[%s4 + $0xcc] sm:$0xf] %v1288
  %1417 = vst [vmem:[%s4 + $0xd0] sm:$0xf] %v1289
  %1418 = vst [vmem:[%s4 + $0xd4] sm:$0xf] %v1290
  %1419 = vst [vmem:[%s4 + $0xd8] sm:$0xf] %v1291
  %1420 = vst [vmem:[%s4 + $0xdc] sm:$0xf] %v1292
  %1421 = vst [vmem:[%s4 + $0xe0] sm:$0xf] %v1293
  %1422 = vst [vmem:[%s4 + $0xe4] sm:$0xf] %v1294
  %1423 = vst [vmem:[%s4 + $0xe8] sm:$0xf] %v1295
  %1424 = vst [vmem:[%s4 + $0xec] sm:$0xf] %v1296
  %1425 = vst [vmem:[%s4 + $0xf0] sm:$0xf] %v1297
  %1426 = vst [vmem:[%s4 + $0xf4] sm:$0xf] %v1298
  %1427 = vst [vmem:[%s4 + $0xf8] sm:$0xf] %v1299
  %1428 = vst [vmem:[%s4 + $0xfc] sm:$0xf] %v1300
  // Predicated region
  $region18: #{discriminator_forward.6} parent=0 // pred_check
    _
  $region19: #{discriminator_forward.6} parent=0 // pred_check_branch
    %1430 = sbr.rel (0) target = $region21
  $region20: #{discriminator_forward.6} parent=0 // pred_region
    _
  $region21: #{discriminator_forward.6} parent=0 // pred_fallthru
    _
  // Predicated region
  $region22: #{discriminator_forward.6} parent=0 // pred_check
    _
  $region23: #{discriminator_forward.6} parent=0 // pred_check_branch
    %1432 = sbr.rel (0) target = $region25
  $region24: #{discriminator_forward.6} parent=0 // pred_region
    _
  $region25: #{discriminator_forward.6} parent=0 // pred_fallthru
    _

// kernel: discriminator_forward.7
$region0: #{discriminator_forward.7}
  #allocation0 [shape = 'u32[]', space=smem, size = 0x4, offset = 0x4, fixed_abs, tag = 'smem constant byte address 0x4 - core index']
  #allocation1 [shape = 'u32[144,128]{1,0:T(1,128)}', space=vmem, size = 0x12000, scoped, tag = 'internal scratch']
  %s0 = inlined_call_operand.vmem [shape: bf16[128,256], index: 0, kind: input, shape index: {}]
  %s1 = inlined_call_operand.vmem [shape: bf16[256,128], index: 1, kind: input, shape index: {}]
  %s2 = inlined_call_operand.vmem [shape: f32[1,128], index: 2, kind: input, shape index: {}]
  %s3 = inlined_call_operand.vmem [shape: f32[1,128], index: 3, kind: input, shape index: {}]
  %s4 = inlined_call_operand.vmem [shape: bf16[128,128], index: 4, kind: output, shape index: {}]
  %s5 = sld [smem:[#allocation0]]
  $region26: #{discriminator_forward.7} parent=0
    _
  %s7 = ssub.s32 1, %s5
  %s8 = scalar_select 0, %s7, %s5
  // Predicated region
  $region2: #{discriminator_forward.7} parent=0 // pred_check
    _
  $region3: #{discriminator_forward.7} parent=0 // pred_check_branch
    %10 = sbr.rel (0) target = $region5
  $region4: #{discriminator_forward.7} parent=0 // pred_region
    _
  $region5: #{discriminator_forward.7} parent=0 // pred_fallthru
    _
  // Predicated region
  $region6: #{discriminator_forward.7} parent=0 // pred_check
    _
  $region7: #{discriminator_forward.7} parent=0 // pred_check_branch
    %12 = sbr.rel (0) target = $region9
  $region8: #{discriminator_forward.7} parent=0 // pred_region
    _
  $region9: #{discriminator_forward.7} parent=0 // pred_fallthru
    _
  // Predicated region
  $region10: #{discriminator_forward.7} parent=0 // pred_check
    _
  $region11: #{discriminator_forward.7} parent=0 // pred_check_branch
    %14 = sbr.rel (0) target = $region13
  $region12: #{discriminator_forward.7} parent=0 // pred_region
    _
  $region13: #{discriminator_forward.7} parent=0 // pred_fallthru
    _
  // Predicated region
  $region14: #{discriminator_forward.7} parent=0 // pred_check
    _
  $region15: #{discriminator_forward.7} parent=0 // pred_check_branch
    %16 = sbr.rel (0) target = $region17
  $region16: #{discriminator_forward.7} parent=0 // pred_region
    _
  $region17: #{discriminator_forward.7} parent=0 // pred_fallthru
    _
  %v18 = vld [vmem:[%s0] sm:$0xff]
  %v19 = vld [vmem:[%s0 + $0x8] sm:$0xff]
  %v20 = vld [vmem:[%s0 + $0x10] sm:$0xff]
  %v21 = vld [vmem:[%s0 + $0x18] sm:$0xff]
  %v22 = vld [vmem:[%s0 + $0x20] sm:$0xff]
  %v23 = vld [vmem:[%s0 + $0x28] sm:$0xff]
  %v24 = vld [vmem:[%s0 + $0x30] sm:$0xff]
  %v25 = vld [vmem:[%s0 + $0x38] sm:$0xff]
  %v26 = vld [vmem:[%s0 + $0x40] sm:$0xff]
  %v27 = vld [vmem:[%s0 + $0x48] sm:$0xff]
  %v28 = vld [vmem:[%s0 + $0x50] sm:$0xff]
  %v29 = vld [vmem:[%s0 + $0x58] sm:$0xff]
  %v30 = vld [vmem:[%s0 + $0x60] sm:$0xff]
  %v31 = vld [vmem:[%s0 + $0x68] sm:$0xff]
  %v32 = vld [vmem:[%s0 + $0x70] sm:$0xff]
  %v33 = vld [vmem:[%s0 + $0x78] sm:$0xff]
  %v34 = vld [vmem:[%s1] sm:$0xf]
  %v35 = vld [vmem:[%s1 + $0x4] sm:$0xf]
  %v36 = vld [vmem:[%s1 + $0x8] sm:$0xf]
  %v37 = vld [vmem:[%s1 + $0xc] sm:$0xf]
  %v38 = vld [vmem:[%s1 + $0x10] sm:$0xf]
  %v39 = vld [vmem:[%s1 + $0x14] sm:$0xf]
  %v40 = vld [vmem:[%s1 + $0x18] sm:$0xf]
  %v41 = vld [vmem:[%s1 + $0x1c] sm:$0xf]
  %v42 = vld [vmem:[%s1 + $0x20] sm:$0xf]
  %v43 = vld [vmem:[%s1 + $0x24] sm:$0xf]
  %v44 = vld [vmem:[%s1 + $0x28] sm:$0xf]
  %v45 = vld [vmem:[%s1 + $0x2c] sm:$0xf]
  %v46 = vld [vmem:[%s1 + $0x30] sm:$0xf]
  %v47 = vld [vmem:[%s1 + $0x34] sm:$0xf]
  %v48 = vld [vmem:[%s1 + $0x38] sm:$0xf]
  %v49 = vld [vmem:[%s1 + $0x3c] sm:$0xf]
  %v50 = vld [vmem:[%s1 + $0x40] sm:$0xf]
  %v51 = vld [vmem:[%s1 + $0x44] sm:$0xf]
  %v52 = vld [vmem:[%s1 + $0x48] sm:$0xf]
  %v53 = vld [vmem:[%s1 + $0x4c] sm:$0xf]
  %v54 = vld [vmem:[%s1 + $0x50] sm:$0xf]
  %v55 = vld [vmem:[%s1 + $0x54] sm:$0xf]
  %v56 = vld [vmem:[%s1 + $0x58] sm:$0xf]
  %v57 = vld [vmem:[%s1 + $0x5c] sm:$0xf]
  %v58 = vld [vmem:[%s1 + $0x60] sm:$0xf]
  %v59 = vld [vmem:[%s1 + $0x64] sm:$0xf]
  %v60 = vld [vmem:[%s1 + $0x68] sm:$0xf]
  %v61 = vld [vmem:[%s1 + $0x6c] sm:$0xf]
  %v62 = vld [vmem:[%s1 + $0x70] sm:$0xf]
  %v63 = vld [vmem:[%s1 + $0x74] sm:$0xf]
  %v64 = vld [vmem:[%s1 + $0x78] sm:$0xf]
  %v65 = vld [vmem:[%s1 + $0x7c] sm:$0xf]
  %v82 = vunpack.c.l.b16 %v18
  %v83 = vunpack.c.h.b16 %v18
  %v84 = vunpack.c.l.b16 %v19
  %v85 = vunpack.c.h.b16 %v19
  %v86 = vunpack.c.l.b16 %v20
  %v87 = vunpack.c.h.b16 %v20
  %v88 = vunpack.c.l.b16 %v21
  %v89 = vunpack.c.h.b16 %v21
  %v90 = vunpack.c.l.b16 %v22
  %v91 = vunpack.c.h.b16 %v22
  %v92 = vunpack.c.l.b16 %v23
  %v93 = vunpack.c.h.b16 %v23
  %v94 = vunpack.c.l.b16 %v24
  %v95 = vunpack.c.h.b16 %v24
  %v96 = vunpack.c.l.b16 %v25
  %v97 = vunpack.c.h.b16 %v25
  %v98 = vunpack.c.l.b16 %v26
  %v99 = vunpack.c.h.b16 %v26
  %v100 = vunpack.c.l.b16 %v27
  %v101 = vunpack.c.h.b16 %v27
  %v102 = vunpack.c.l.b16 %v28
  %v103 = vunpack.c.h.b16 %v28
  %v104 = vunpack.c.l.b16 %v29
  %v105 = vunpack.c.h.b16 %v29
  %v106 = vunpack.c.l.b16 %v30
  %v107 = vunpack.c.h.b16 %v30
  %v108 = vunpack.c.l.b16 %v31
  %v109 = vunpack.c.h.b16 %v31
  %v110 = vunpack.c.l.b16 %v32
  %v111 = vunpack.c.h.b16 %v32
  %v112 = vunpack.c.l.b16 %v33
  %v113 = vunpack.c.h.b16 %v33
  %v114 = vpack.c.b16 %v84, %v82
  %v115 = vpack.c.b16 %v85, %v83
  %v116 = vpack.c.b16 %v88, %v86
  %v117 = vpack.c.b16 %v89, %v87
  %v118 = vpack.c.b16 %v92, %v90
  %v119 = vpack.c.b16 %v93, %v91
  %v120 = vpack.c.b16 %v96, %v94
  %v121 = vpack.c.b16 %v97, %v95
  %v122 = vpack.c.b16 %v100, %v98
  %v123 = vpack.c.b16 %v101, %v99
  %v124 = vpack.c.b16 %v104, %v102
  %v125 = vpack.c.b16 %v105, %v103
  %v126 = vpack.c.b16 %v108, %v106
  %v127 = vpack.c.b16 %v109, %v107
  %v128 = vpack.c.b16 %v112, %v110
  %v129 = vpack.c.b16 %v113, %v111
  %v178 = vunpack.c.l.b16 %v34
  %v179 = vunpack.c.l.b16 %v35
  %v180 = vunpack.c.l.b16 %v36
  %v181 = vunpack.c.l.b16 %v37
  %v182 = vunpack.c.l.b16 %v38
  %v183 = vunpack.c.l.b16 %v39
  %v184 = vunpack.c.l.b16 %v40
  %v185 = vunpack.c.l.b16 %v41
  %v186 = vunpack.c.l.b16 %v42
  %v187 = vunpack.c.l.b16 %v43
  %v188 = vunpack.c.l.b16 %v44
  %v189 = vunpack.c.l.b16 %v45
  %v190 = vunpack.c.l.b16 %v46
  %v191 = vunpack.c.l.b16 %v47
  %v192 = vunpack.c.l.b16 %v48
  %v193 = vunpack.c.l.b16 %v49
  %v194 = vunpack.c.l.b16 %v50
  %v195 = vunpack.c.l.b16 %v51
  %v196 = vunpack.c.l.b16 %v52
  %v197 = vunpack.c.l.b16 %v53
  %v198 = vunpack.c.l.b16 %v54
  %v199 = vunpack.c.l.b16 %v55
  %v200 = vunpack.c.l.b16 %v56
  %v201 = vunpack.c.l.b16 %v57
  %v202 = vunpack.c.l.b16 %v58
  %v203 = vunpack.c.l.b16 %v59
  %v204 = vunpack.c.l.b16 %v60
  %v205 = vunpack.c.l.b16 %v61
  %v206 = vunpack.c.l.b16 %v62
  %v207 = vunpack.c.l.b16 %v63
  %v208 = vunpack.c.l.b16 %v64
  %v209 = vunpack.c.l.b16 %v65
  %v210 = vpack.c.b16 %v179, %v178
  %v211 = vpack.c.b16 %v181, %v180
  %v212 = vpack.c.b16 %v183, %v182
  %v213 = vpack.c.b16 %v185, %v184
  %v214 = vpack.c.b16 %v187, %v186
  %v215 = vpack.c.b16 %v189, %v188
  %v216 = vpack.c.b16 %v191, %v190
  %v217 = vpack.c.b16 %v193, %v192
  %v218 = vpack.c.b16 %v195, %v194
  %v219 = vpack.c.b16 %v197, %v196
  %v220 = vpack.c.b16 %v199, %v198
  %v221 = vpack.c.b16 %v201, %v200
  %v222 = vpack.c.b16 %v203, %v202
  %v223 = vpack.c.b16 %v205, %v204
  %v224 = vpack.c.b16 %v207, %v206
  %v225 = vpack.c.b16 %v209, %v208
  %242 = vmatprep.subr.bf16.mxu0 0
  %243 = vmatpush1.bf16.msra.mxu0 %v217
  %244 = vmatprep.subr.bf16.mxu0 0
  %245 = vmatpush1.bf16.msra.mxu0 %v216
  %246 = vmatprep.subr.bf16.mxu0 0
  %247 = vmatpush1.bf16.msra.mxu0 %v215
  %248 = vmatprep.subr.bf16.mxu0 0
  %249 = vmatpush1.bf16.msra.mxu0 %v214
  %250 = vmatprep.subr.bf16.mxu0 0
  %251 = vmatpush1.bf16.msra.mxu0 %v213
  %252 = vmatprep.subr.bf16.mxu0 0
  %253 = vmatpush1.bf16.msra.mxu0 %v212
  %254 = vmatprep.subr.bf16.mxu0 0
  %255 = vmatpush1.bf16.msra.mxu0 %v211
  %256 = vmatprep.subr.bf16.mxu0 0
  %257 = vmatpush1.bf16.msra.mxu0 %v210
  %258 = vmatprep.subr.bf16.mxu0 0
  %259 = vmatpush2.bf16.msra.mxu0 %v225
  %260 = vmatprep.subr.bf16.mxu0 0
  %261 = vmatpush2.bf16.msra.mxu0 %v224
  %262 = vmatprep.subr.bf16.mxu0 0
  %263 = vmatpush2.bf16.msra.mxu0 %v223
  %264 = vmatprep.subr.bf16.mxu0 0
  %265 = vmatpush2.bf16.msra.mxu0 %v222
  %266 = vmatprep.subr.bf16.mxu0 0
  %267 = vmatpush2.bf16.msra.mxu0 %v221
  %268 = vmatprep.subr.bf16.mxu0 0
  %269 = vmatpush2.bf16.msra.mxu0 %v220
  %270 = vmatprep.subr.bf16.mxu0 0
  %271 = vmatpush2.bf16.msra.mxu0 %v219
  %272 = vmatprep.subr.bf16.mxu0 0
  %273 = vmatpush2.bf16.msra.mxu0 %v218
  %274 = vmatprep.mubr.bf16.mxu0 %v115
  %275 = vmatmul.mubr.bf16.gmra.mxu0 %v114
  %v276 = vpop.f32.mrf.mxu0
  %v277 = vadd.f32 0.0, %v276
  %v278 = vpop.f32.mrf.mxu0
  %v279 = vpop.f32.mrf.mxu0
  %v280 = vadd.f32 0.0, %v279
  %v281 = vpop.f32.mrf.mxu0
  %282 = vmatprep.mubr.bf16.mxu0 %v117
  %283 = vmatmul.mubr.bf16.gmra.mxu0 %v116
  %v284 = vpop.f32.mrf.mxu0
  %v285 = vadd.f32 0.0, %v284
  %v286 = vpop.f32.mrf.mxu0
  %v287 = vpop.f32.mrf.mxu0
  %v288 = vadd.f32 0.0, %v287
  %v289 = vpop.f32.mrf.mxu0
  %290 = vmatprep.mubr.bf16.mxu0 %v119
  %291 = vmatmul.mubr.bf16.gmra.mxu0 %v118
  %v292 = vpop.f32.mrf.mxu0
  %v293 = vadd.f32 0.0, %v292
  %v294 = vpop.f32.mrf.mxu0
  %v295 = vpop.f32.mrf.mxu0
  %v296 = vadd.f32 0.0, %v295
  %v297 = vpop.f32.mrf.mxu0
  %298 = vmatprep.mubr.bf16.mxu0 %v121
  %299 = vmatmul.mubr.bf16.gmra.mxu0 %v120
  %v300 = vpop.f32.mrf.mxu0
  %v301 = vadd.f32 0.0, %v300
  %v302 = vpop.f32.mrf.mxu0
  %v303 = vpop.f32.mrf.mxu0
  %v304 = vadd.f32 0.0, %v303
  %v305 = vpop.f32.mrf.mxu0
  %306 = vmatprep.mubr.bf16.mxu0 %v123
  %307 = vmatmul.mubr.bf16.gmra.mxu0 %v122
  %v308 = vpop.f32.mrf.mxu0
  %v309 = vadd.f32 0.0, %v308
  %v310 = vpop.f32.mrf.mxu0
  %v311 = vpop.f32.mrf.mxu0
  %v312 = vadd.f32 0.0, %v311
  %v313 = vpop.f32.mrf.mxu0
  %314 = vmatprep.mubr.bf16.mxu0 %v125
  %315 = vmatmul.mubr.bf16.gmra.mxu0 %v124
  %v316 = vpop.f32.mrf.mxu0
  %v317 = vadd.f32 0.0, %v316
  %v318 = vpop.f32.mrf.mxu0
  %v319 = vpop.f32.mrf.mxu0
  %v320 = vadd.f32 0.0, %v319
  %v321 = vpop.f32.mrf.mxu0
  %322 = vmatprep.mubr.bf16.mxu0 %v127
  %323 = vmatmul.mubr.bf16.gmra.mxu0 %v126
  %v324 = vpop.f32.mrf.mxu0
  %v325 = vadd.f32 0.0, %v324
  %v326 = vpop.f32.mrf.mxu0
  %v327 = vpop.f32.mrf.mxu0
  %v328 = vadd.f32 0.0, %v327
  %v329 = vpop.f32.mrf.mxu0
  %330 = vmatprep.mubr.bf16.mxu0 %v129
  %331 = vmatmul.mubr.bf16.gmra.mxu0 %v128
  %v332 = vpop.f32.mrf.mxu0
  %v333 = vadd.f32 0.0, %v332
  %v334 = vpop.f32.mrf.mxu0
  %v335 = vpop.f32.mrf.mxu0
  %v336 = vadd.f32 0.0, %v335
  %v337 = vpop.f32.mrf.mxu0
  %338 = vdwg.mxu0
  %v339 = vadd.f32 %v277, %v280
  %v340 = vadd.f32 %v339, %v285
  %v341 = vadd.f32 %v340, %v288
  %v342 = vadd.f32 %v341, %v293
  %v343 = vadd.f32 %v342, %v296
  %v344 = vadd.f32 %v343, %v301
  %v345 = vadd.f32 %v344, %v304
  %v346 = vadd.f32 %v345, %v309
  %v347 = vadd.f32 %v346, %v312
  %v348 = vadd.f32 %v347, %v317
  %v349 = vadd.f32 %v348, %v320
  %v350 = vadd.f32 %v349, %v325
  %v351 = vadd.f32 %v350, %v328
  %v352 = vadd.f32 %v351, %v333
  %v353 = vadd.f32 %v352, %v336
  %v354 = vrot.slane %v353, 4
  %v355 = vadd.f32 %v353, %v354
  %v356 = vrot.slane %v355, 2
  %v357 = vadd.f32 %v355, %v356
  %v358 = vrot.slane %v357, 1
  %v359 = vadd.f32 %v357, %v358
  %v360 = vmul.f32 %v359, 0.0078125
  %v361 = vmul.f32 %v277, %v277
  %v362 = vmul.f32 %v280, %v280
  %v363 = vmul.f32 %v285, %v285
  %v364 = vmul.f32 %v288, %v288
  %v365 = vmul.f32 %v293, %v293
  %v366 = vmul.f32 %v296, %v296
  %v367 = vmul.f32 %v301, %v301
  %v368 = vmul.f32 %v304, %v304
  %v369 = vmul.f32 %v309, %v309
  %v370 = vmul.f32 %v312, %v312
  %v371 = vmul.f32 %v317, %v317
  %v372 = vmul.f32 %v320, %v320
  %v373 = vmul.f32 %v325, %v325
  %v374 = vmul.f32 %v328, %v328
  %v375 = vmul.f32 %v333, %v333
  %v376 = vmul.f32 %v336, %v336
  %v377 = vadd.f32 %v361, %v362
  %v378 = vadd.f32 %v377, %v363
  %v379 = vadd.f32 %v378, %v364
  %v380 = vadd.f32 %v379, %v365
  %v381 = vadd.f32 %v380, %v366
  %v382 = vadd.f32 %v381, %v367
  %v383 = vadd.f32 %v382, %v368
  %v384 = vadd.f32 %v383, %v369
  %v385 = vadd.f32 %v384, %v370
  %v386 = vadd.f32 %v385, %v371
  %v387 = vadd.f32 %v386, %v372
  %v388 = vadd.f32 %v387, %v373
  %v389 = vadd.f32 %v388, %v374
  %v390 = vadd.f32 %v389, %v375
  %v391 = vadd.f32 %v390, %v376
  %v392 = vrot.slane %v391, 4
  %v393 = vadd.f32 %v391, %v392
  %v394 = vrot.slane %v393, 2
  %v395 = vadd.f32 %v393, %v394
  %v396 = vrot.slane %v395, 1
  %v397 = vadd.f32 %v395, %v396
  %v398 = vmul.f32 %v397, 0.0078125
  %v399 = vmul.f32 %v360, %v360
  %v400 = vsub.f32 %v398, %v399
  %v401 = vmax.f32 %v400, 0.0
  %v402 = vld [vmem:[%s2] sm:$0x1]
  %v403 = vadd.f32 %v401, 1e-05
  %v404 = vrsqrt.pop %v403
  %v405 = vmul.f32 %v402, %v404
  %v406 = vld [vmem:[%s3] sm:$0x1]
  %v407 = vmul.f32 %v360, %v405
  %v408 = vsub.f32 %v406, %v407
  %v410 = vlaneseq
  %v411 = vshrl.u32 %v410, 7
  %v412 = vsub.s32 0, %v411
  %v413 = vrot.slane %v405, %v412
  %v415 = vmul.f32 %v277, %v413
  %v416 = vmul.f32 %v280, %v413
  %v417 = vmul.f32 %v285, %v413
  %v418 = vmul.f32 %v288, %v413
  %v419 = vmul.f32 %v293, %v413
  %v420 = vmul.f32 %v296, %v413
  %v421 = vmul.f32 %v301, %v413
  %v422 = vmul.f32 %v304, %v413
  %v423 = vmul.f32 %v309, %v413
  %v424 = vmul.f32 %v312, %v413
  %v425 = vmul.f32 %v317, %v413
  %v426 = vmul.f32 %v320, %v413
  %v427 = vmul.f32 %v325, %v413
  %v428 = vmul.f32 %v328, %v413
  %v429 = vmul.f32 %v333, %v413
  %v430 = vmul.f32 %v336, %v413
  %v432 = vlaneseq
  %v433 = vshrl.u32 %v432, 7
  %v434 = vsub.s32 0, %v433
  %v435 = vrot.slane %v408, %v434
  %v437 = vadd.f32 %v415, %v435
  %v438 = vadd.f32 %v416, %v435
  %v439 = vadd.f32 %v417, %v435
  %v440 = vadd.f32 %v418, %v435
  %v441 = vadd.f32 %v419, %v435
  %v442 = vadd.f32 %v420, %v435
  %v443 = vadd.f32 %v421, %v435
  %v444 = vadd.f32 %v422, %v435
  %v445 = vadd.f32 %v423, %v435
  %v446 = vadd.f32 %v424, %v435
  %v447 = vadd.f32 %v425, %v435
  %v448 = vadd.f32 %v426, %v435
  %v449 = vadd.f32 %v427, %v435
  %v450 = vadd.f32 %v428, %v435
  %v451 = vadd.f32 %v429, %v435
  %v452 = vadd.f32 %v430, %v435
  %v453 = vmul.f32 %v437, 0.2
  %v454 = vmul.f32 %v438, 0.2
  %v455 = vmul.f32 %v439, 0.2
  %v456 = vmul.f32 %v440, 0.2
  %v457 = vmul.f32 %v441, 0.2
  %v458 = vmul.f32 %v442, 0.2
  %v459 = vmul.f32 %v443, 0.2
  %v460 = vmul.f32 %v444, 0.2
  %v461 = vmul.f32 %v445, 0.2
  %v462 = vmul.f32 %v446, 0.2
  %v463 = vmul.f32 %v447, 0.2
  %v464 = vmul.f32 %v448, 0.2
  %v465 = vmul.f32 %v449, 0.2
  %v466 = vmul.f32 %v450, 0.2
  %v467 = vmul.f32 %v451, 0.2
  %v468 = vmul.f32 %v452, 0.2
  %v469 = vmax.f32 %v437, %v453
  %v470 = vmax.f32 %v438, %v454
  %v471 = vmax.f32 %v439, %v455
  %v472 = vmax.f32 %v440, %v456
  %v473 = vmax.f32 %v441, %v457
  %v474 = vmax.f32 %v442, %v458
  %v475 = vmax.f32 %v443, %v459
  %v476 = vmax.f32 %v444, %v460
  %v477 = vmax.f32 %v445, %v461
  %v478 = vmax.f32 %v446, %v462
  %v479 = vmax.f32 %v447, %v463
  %v480 = vmax.f32 %v448, %v464
  %v481 = vmax.f32 %v449, %v465
  %v482 = vmax.f32 %v450, %v466
  %v483 = vmax.f32 %v451, %v467
  %v484 = vmax.f32 %v452, %v468
  %v485 = vpack.c.bf16 %v470, %v469
  %v486 = vpack.c.bf16 %v472, %v471
  %v487 = vpack.c.bf16 %v474, %v473
  %v488 = vpack.c.bf16 %v476, %v475
  %v489 = vpack.c.bf16 %v478, %v477
  %v490 = vpack.c.bf16 %v480, %v479
  %v491 = vpack.c.bf16 %v482, %v481
  %v492 = vpack.c.bf16 %v484, %v483
  %v501 = vunpack.c.l.b16 %v485
  %v502 = vunpack.c.h.b16 %v485
  %v503 = vunpack.c.l.b16 %v486
  %v504 = vunpack.c.h.b16 %v486
  %v505 = vunpack.c.l.b16 %v487
  %v506 = vunpack.c.h.b16 %v487
  %v507 = vunpack.c.l.b16 %v488
  %v508 = vunpack.c.h.b16 %v488
  %v509 = vunpack.c.l.b16 %v489
  %v510 = vunpack.c.h.b16 %v489
  %v511 = vunpack.c.l.b16 %v490
  %v512 = vunpack.c.h.b16 %v490
  %v513 = vunpack.c.l.b16 %v491
  %v514 = vunpack.c.h.b16 %v491
  %v515 = vunpack.c.l.b16 %v492
  %v516 = vunpack.c.h.b16 %v492
  %v517 = vpack.c.b16 %v501, %v501
  %v518 = vpack.c.b16 %v502, %v502
  %v519 = vpack.c.b16 %v503, %v503
  %v520 = vpack.c.b16 %v504, %v504
  %v521 = vpack.c.b16 %v505, %v505
  %v522 = vpack.c.b16 %v506, %v506
  %v523 = vpack.c.b16 %v507, %v507
  %v524 = vpack.c.b16 %v508, %v508
  %v525 = vpack.c.b16 %v509, %v509
  %v526 = vpack.c.b16 %v510, %v510
  %v527 = vpack.c.b16 %v511, %v511
  %v528 = vpack.c.b16 %v512, %v512
  %v529 = vpack.c.b16 %v513, %v513
  %v530 = vpack.c.b16 %v514, %v514
  %v531 = vpack.c.b16 %v515, %v515
  %v532 = vpack.c.b16 %v516, %v516
  %549 = vst [vmem:[%s4] sm:$0xf] %v517
  %550 = vst [vmem:[%s4 + $0x4] sm:$0xf] %v518
  %551 = vst [vmem:[%s4 + $0x8] sm:$0xf] %v519
  %552 = vst [vmem:[%s4 + $0xc] sm:$0xf] %v520
  %553 = vst [vmem:[%s4 + $0x10] sm:$0xf] %v521
  %554 = vst [vmem:[%s4 + $0x14] sm:$0xf] %v522
  %555 = vst [vmem:[%s4 + $0x18] sm:$0xf] %v523
  %556 = vst [vmem:[%s4 + $0x1c] sm:$0xf] %v524
  %557 = vst [vmem:[%s4 + $0x20] sm:$0xf] %v525
  %558 = vst [vmem:[%s4 + $0x24] sm:$0xf] %v526
  %559 = vst [vmem:[%s4 + $0x28] sm:$0xf] %v527
  %560 = vst [vmem:[%s4 + $0x2c] sm:$0xf] %v528
  %561 = vst [vmem:[%s4 + $0x30] sm:$0xf] %v529
  %562 = vst [vmem:[%s4 + $0x34] sm:$0xf] %v530
  %563 = vst [vmem:[%s4 + $0x38] sm:$0xf] %v531
  %564 = vst [vmem:[%s4 + $0x3c] sm:$0xf] %v532
  // Predicated region
  $region18: #{discriminator_forward.7} parent=0 // pred_check
    _
  $region19: #{discriminator_forward.7} parent=0 // pred_check_branch
    %566 = sbr.rel (0) target = $region21
  $region20: #{discriminator_forward.7} parent=0 // pred_region
    _
  $region21: #{discriminator_forward.7} parent=0 // pred_fallthru
    _
  // Predicated region
  $region22: #{discriminator_forward.7} parent=0 // pred_check
    _
  $region23: #{discriminator_forward.7} parent=0 // pred_check_branch
    %568 = sbr.rel (0) target = $region25
  $region24: #{discriminator_forward.7} parent=0 // pred_region
    _
  $region25: #{discriminator_forward.7} parent=0 // pred_fallthru
    _

// kernel: discriminator_forward.8
$region0: #{discriminator_forward.8}
  #allocation0 [shape = 'u32[]', space=smem, size = 0x4, offset = 0x4, fixed_abs, tag = 'smem constant byte address 0x4 - core index']
  #allocation1 [shape = 'u32[144,128]{1,0:T(1,128)}', space=vmem, size = 0x12000, scoped, tag = 'internal scratch']
  %s0 = inlined_call_operand.vmem [shape: bf16[32,512], index: 0, kind: input, shape index: {}]
  %s1 = inlined_call_operand.vmem [shape: bf16[512,128], index: 1, kind: input, shape index: {}]
  %s2 = inlined_call_operand.vmem [shape: f32[1,128], index: 2, kind: input, shape index: {}]
  %s3 = inlined_call_operand.vmem [shape: f32[1,128], index: 3, kind: input, shape index: {}]
  %s4 = inlined_call_operand.vmem [shape: bf16[32,128], index: 4, kind: output, shape index: {}]
  %s5 = sld [smem:[#allocation0]]
  $region26: #{discriminator_forward.8} parent=0
    _
  %s7 = ssub.s32 1, %s5
  %s8 = scalar_select 0, %s7, %s5
  // Predicated region
  $region2: #{discriminator_forward.8} parent=0 // pred_check
    _
  $region3: #{discriminator_forward.8} parent=0 // pred_check_branch
    %10 = sbr.rel (0) target = $region5
  $region4: #{discriminator_forward.8} parent=0 // pred_region
    _
  $region5: #{discriminator_forward.8} parent=0 // pred_fallthru
    _
  // Predicated region
  $region6: #{discriminator_forward.8} parent=0 // pred_check
    _
  $region7: #{discriminator_forward.8} parent=0 // pred_check_branch
    %12 = sbr.rel (0) target = $region9
  $region8: #{discriminator_forward.8} parent=0 // pred_region
    _
  $region9: #{discriminator_forward.8} parent=0 // pred_fallthru
    _
  // Predicated region
  $region10: #{discriminator_forward.8} parent=0 // pred_check
    _
  $region11: #{discriminator_forward.8} parent=0 // pred_check_branch
    %14 = sbr.rel (0) target = $region13
  $region12: #{discriminator_forward.8} parent=0 // pred_region
    _
  $region13: #{discriminator_forward.8} parent=0 // pred_fallthru
    _
  // Predicated region
  $region14: #{discriminator_forward.8} parent=0 // pred_check
    _
  $region15: #{discriminator_forward.8} parent=0 // pred_check_branch
    %16 = sbr.rel (0) target = $region17
  $region16: #{discriminator_forward.8} parent=0 // pred_region
    _
  $region17: #{discriminator_forward.8} parent=0 // pred_fallthru
    _
  %v18 = vld [vmem:[%s0] sm:$0xff]
  %v19 = vld [vmem:[%s0 + $0x8] sm:$0xff]
  %v20 = vld [vmem:[%s0 + $0x10] sm:$0xff]
  %v21 = vld [vmem:[%s0 + $0x18] sm:$0xff]
  %v22 = vld [vmem:[%s0 + $0x20] sm:$0xff]
  %v23 = vld [vmem:[%s0 + $0x28] sm:$0xff]
  %v24 = vld [vmem:[%s0 + $0x30] sm:$0xff]
  %v25 = vld [vmem:[%s0 + $0x38] sm:$0xff]
  %v26 = vld [vmem:[%s1] sm:$0xf]
  %v27 = vld [vmem:[%s1 + $0x4] sm:$0xf]
  %v28 = vld [vmem:[%s1 + $0x8] sm:$0xf]
  %v29 = vld [vmem:[%s1 + $0xc] sm:$0xf]
  %v30 = vld [vmem:[%s1 + $0x10] sm:$0xf]
  %v31 = vld [vmem:[%s1 + $0x14] sm:$0xf]
  %v32 = vld [vmem:[%s1 + $0x18] sm:$0xf]
  %v33 = vld [vmem:[%s1 + $0x1c] sm:$0xf]
  %v34 = vld [vmem:[%s1 + $0x20] sm:$0xf]
  %v35 = vld [vmem:[%s1 + $0x24] sm:$0xf]
  %v36 = vld [vmem:[%s1 + $0x28] sm:$0xf]
  %v37 = vld [vmem:[%s1 + $0x2c] sm:$0xf]
  %v38 = vld [vmem:[%s1 + $0x30] sm:$0xf]
  %v39 = vld [vmem:[%s1 + $0x34] sm:$0xf]
  %v40 = vld [vmem:[%s1 + $0x38] sm:$0xf]
  %v41 = vld [vmem:[%s1 + $0x3c] sm:$0xf]
  %v42 = vld [vmem:[%s1 + $0x40] sm:$0xf]
  %v43 = vld [vmem:[%s1 + $0x44] sm:$0xf]
  %v44 = vld [vmem:[%s1 + $0x48] sm:$0xf]
  %v45 = vld [vmem:[%s1 + $0x4c] sm:$0xf]
  %v46 = vld [vmem:[%s1 + $0x50] sm:$0xf]
  %v47 = vld [vmem:[%s1 + $0x54] sm:$0xf]
  %v48 = vld [vmem:[%s1 + $0x58] sm:$0xf]
  %v49 = vld [vmem:[%s1 + $0x5c] sm:$0xf]
  %v50 = vld [vmem:[%s1 + $0x60] sm:$0xf]
  %v51 = vld [vmem:[%s1 + $0x64] sm:$0xf]
  %v52 = vld [vmem:[%s1 + $0x68] sm:$0xf]
  %v53 = vld [vmem:[%s1 + $0x6c] sm:$0xf]
  %v54 = vld [vmem:[%s1 + $0x70] sm:$0xf]
  %v55 = vld [vmem:[%s1 + $0x74] sm:$0xf]
  %v56 = vld [vmem:[%s1 + $0x78] sm:$0xf]
  %v57 = vld [vmem:[%s1 + $0x7c] sm:$0xf]
  %v58 = vld [vmem:[%s1 + $0x80] sm:$0xf]
  %v59 = vld [vmem:[%s1 + $0x84] sm:$0xf]
  %v60 = vld [vmem:[%s1 + $0x88] sm:$0xf]
  %v61 = vld [vmem:[%s1 + $0x8c] sm:$0xf]
  %v62 = vld [vmem:[%s1 + $0x90] sm:$0xf]
  %v63 = vld [vmem:[%s1 + $0x94] sm:$0xf]
  %v64 = vld [vmem:[%s1 + $0x98] sm:$0xf]
  %v65 = vld [vmem:[%s1 + $0x9c] sm:$0xf]
  %v66 = vld [vmem:[%s1 + $0xa0] sm:$0xf]
  %v67 = vld [vmem:[%s1 + $0xa4] sm:$0xf]
  %v68 = vld [vmem:[%s1 + $0xa8] sm:$0xf]
  %v69 = vld [vmem:[%s1 + $0xac] sm:$0xf]
  %v70 = vld [vmem:[%s1 + $0xb0] sm:$0xf]
  %v71 = vld [vmem:[%s1 + $0xb4] sm:$0xf]
  %v72 = vld [vmem:[%s1 + $0xb8] sm:$0xf]
  %v73 = vld [vmem:[%s1 + $0xbc] sm:$0xf]
  %v74 = vld [vmem:[%s1 + $0xc0] sm:$0xf]
  %v75 = vld [vmem:[%s1 + $0xc4] sm:$0xf]
  %v76 = vld [vmem:[%s1 + $0xc8] sm:$0xf]
  %v77 = vld [vmem:[%s1 + $0xcc] sm:$0xf]
  %v78 = vld [vmem:[%s1 + $0xd0] sm:$0xf]
  %v79 = vld [vmem:[%s1 + $0xd4] sm:$0xf]
  %v80 = vld [vmem:[%s1 + $0xd8] sm:$0xf]
  %v81 = vld [vmem:[%s1 + $0xdc] sm:$0xf]
  %v82 = vld [vmem:[%s1 + $0xe0] sm:$0xf]
  %v83 = vld [vmem:[%s1 + $0xe4] sm:$0xf]
  %v84 = vld [vmem:[%s1 + $0xe8] sm:$0xf]
  %v85 = vld [vmem:[%s1 + $0xec] sm:$0xf]
  %v86 = vld [vmem:[%s1 + $0xf0] sm:$0xf]
  %v87 = vld [vmem:[%s1 + $0xf4] sm:$0xf]
  %v88 = vld [vmem:[%s1 + $0xf8] sm:$0xf]
  %v89 = vld [vmem:[%s1 + $0xfc] sm:$0xf]
  %v98 = vunpack.c.l.b16 %v18
  %v99 = vunpack.c.h.b16 %v18
  %v100 = vunpack.c.l.b16 %v19
  %v101 = vunpack.c.h.b16 %v19
  %v102 = vunpack.c.l.b16 %v20
  %v103 = vunpack.c.h.b16 %v20
  %v104 = vunpack.c.l.b16 %v21
  %v105 = vunpack.c.h.b16 %v21
  %v106 = vunpack.c.l.b16 %v22
  %v107 = vunpack.c.h.b16 %v22
  %v108 = vunpack.c.l.b16 %v23
  %v109 = vunpack.c.h.b16 %v23
  %v110 = vunpack.c.l.b16 %v24
  %v111 = vunpack.c.h.b16 %v24
  %v112 = vunpack.c.l.b16 %v25
  %v113 = vunpack.c.h.b16 %v25
  %v114 = vpack.c.b16 %v102, %v98
  %v115 = vpack.c.b16 %v103, %v99
  %v116 = vpack.c.b16 %v104, %v100
  %v117 = vpack.c.b16 %v105, %v101
  %v118 = vpack.c.b16 %v110, %v106
  %v119 = vpack.c.b16 %v111, %v107
  %v120 = vpack.c.b16 %v112, %v108
  %v121 = vpack.c.b16 %v113, %v109
  %v194 = vunpack.c.l.b16 %v26
  %v195 = vunpack.c.l.b16 %v27
  %v196 = vunpack.c.l.b16 %v28
  %v197 = vunpack.c.l.b16 %v29
  %v198 = vunpack.c.l.b16 %v30
  %v199 = vunpack.c.l.b16 %v31
  %v200 = vunpack.c.l.b16 %v32
  %v201 = vunpack.c.l.b16 %v33
  %v202 = vunpack.c.l.b16 %v34
  %v203 = vunpack.c.l.b16 %v35
  %v204 = vunpack.c.l.b16 %v36
  %v205 = vunpack.c.l.b16 %v37
  %v206 = vunpack.c.l.b16 %v38
  %v207 = vunpack.c.l.b16 %v39
  %v208 = vunpack.c.l.b16 %v40
  %v209 = vunpack.c.l.b16 %v41
  %v210 = vunpack.c.l.b16 %v42
  %v211 = vunpack.c.l.b16 %v43
  %v212 = vunpack.c.l.b16 %v44
  %v213 = vunpack.c.l.b16 %v45
  %v214 = vunpack.c.l.b16 %v46
  %v215 = vunpack.c.l.b16 %v47
  %v216 = vunpack.c.l.b16 %v48
  %v217 = vunpack.c.l.b16 %v49
  %v218 = vunpack.c.l.b16 %v50
  %v219 = vunpack.c.l.b16 %v51
  %v220 = vunpack.c.l.b16 %v52
  %v221 = vunpack.c.l.b16 %v53
  %v222 = vunpack.c.l.b16 %v54
  %v223 = vunpack.c.l.b16 %v55
  %v224 = vunpack.c.l.b16 %v56
  %v225 = vunpack.c.l.b16 %v57
  %v226 = vunpack.c.l.b16 %v58
  %v227 = vunpack.c.l.b16 %v59
  %v228 = vunpack.c.l.b16 %v60
  %v229 = vunpack.c.l.b16 %v61
  %v230 = vunpack.c.l.b16 %v62
  %v231 = vunpack.c.l.b16 %v63
  %v232 = vunpack.c.l.b16 %v64
  %v233 = vunpack.c.l.b16 %v65
  %v234 = vunpack.c.l.b16 %v66
  %v235 = vunpack.c.l.b16 %v67
  %v236 = vunpack.c.l.b16 %v68
  %v237 = vunpack.c.l.b16 %v69
  %v238 = vunpack.c.l.b16 %v70
  %v239 = vunpack.c.l.b16 %v71
  %v240 = vunpack.c.l.b16 %v72
  %v241 = vunpack.c.l.b16 %v73
  %v242 = vunpack.c.l.b16 %v74
  %v243 = vunpack.c.l.b16 %v75
  %v244 = vunpack.c.l.b16 %v76
  %v245 = vunpack.c.l.b16 %v77
  %v246 = vunpack.c.l.b16 %v78
  %v247 = vunpack.c.l.b16 %v79
  %v248 = vunpack.c.l.b16 %v80
  %v249 = vunpack.c.l.b16 %v81
  %v250 = vunpack.c.l.b16 %v82
  %v251 = vunpack.c.l.b16 %v83
  %v252 = vunpack.c.l.b16 %v84
  %v253 = vunpack.c.l.b16 %v85
  %v254 = vunpack.c.l.b16 %v86
  %v255 = vunpack.c.l.b16 %v87
  %v256 = vunpack.c.l.b16 %v88
  %v257 = vunpack.c.l.b16 %v89
  %v258 = vpack.c.b16 %v195, %v194
  %v259 = vpack.c.b16 %v197, %v196
  %v260 = vpack.c.b16 %v199, %v198
  %v261 = vpack.c.b16 %v201, %v200
  %v262 = vpack.c.b16 %v203, %v202
  %v263 = vpack.c.b16 %v205, %v204
  %v264 = vpack.c.b16 %v207, %v206
  %v265 = vpack.c.b16 %v209, %v208
  %v266 = vpack.c.b16 %v211, %v210
  %v267 = vpack.c.b16 %v213, %v212
  %v268 = vpack.c.b16 %v215, %v214
  %v269 = vpack.c.b16 %v217, %v216
  %v270 = vpack.c.b16 %v219, %v218
  %v271 = vpack.c.b16 %v221, %v220
  %v272 = vpack.c.b16 %v223, %v222
  %v273 = vpack.c.b16 %v225, %v224
  %v274 = vpack.c.b16 %v227, %v226
  %v275 = vpack.c.b16 %v229, %v228
  %v276 = vpack.c.b16 %v231, %v230
  %v277 = vpack.c.b16 %v233, %v232
  %v278 = vpack.c.b16 %v235, %v234
  %v279 = vpack.c.b16 %v237, %v236
  %v280 = vpack.c.b16 %v239, %v238
  %v281 = vpack.c.b16 %v241, %v240
  %v282 = vpack.c.b16 %v243, %v242
  %v283 = vpack.c.b16 %v245, %v244
  %v284 = vpack.c.b16 %v247, %v246
  %v285 = vpack.c.b16 %v249, %v248
  %v286 = vpack.c.b16 %v251, %v250
  %v287 = vpack.c.b16 %v253, %v252
  %v288 = vpack.c.b16 %v255, %v254
  %v289 = vpack.c.b16 %v257, %v256
  %322 = vmatprep.subr.bf16.mxu0 0
  %323 = vmatpush1.bf16.msra.mxu0 %v265
  %324 = vmatprep.subr.bf16.mxu0 0
  %325 = vmatpush1.bf16.msra.mxu0 %v264
  %326 = vmatprep.subr.bf16.mxu0 0
  %327 = vmatpush1.bf16.msra.mxu0 %v263
  %328 = vmatprep.subr.bf16.mxu0 0
  %329 = vmatpush1.bf16.msra.mxu0 %v262
  %330 = vmatprep.subr.bf16.mxu0 0
  %331 = vmatpush1.bf16.msra.mxu0 %v261
  %332 = vmatprep.subr.bf16.mxu0 0
  %333 = vmatpush1.bf16.msra.mxu0 %v260
  %334 = vmatprep.subr.bf16.mxu0 0
  %335 = vmatpush1.bf16.msra.mxu0 %v259
  %336 = vmatprep.subr.bf16.mxu0 0
  %337 = vmatpush1.bf16.msra.mxu0 %v258
  %338 = vmatprep.subr.bf16.mxu0 0
  %339 = vmatpush2.bf16.msra.mxu0 %v273
  %340 = vmatprep.subr.bf16.mxu0 0
  %341 = vmatpush2.bf16.msra.mxu0 %v272
  %342 = vmatprep.subr.bf16.mxu0 0
  %343 = vmatpush2.bf16.msra.mxu0 %v271
  %344 = vmatprep.subr.bf16.mxu0 0
  %345 = vmatpush2.bf16.msra.mxu0 %v270
  %346 = vmatprep.subr.bf16.mxu0 0
  %347 = vmatpush2.bf16.msra.mxu0 %v269
  %348 = vmatprep.subr.bf16.mxu0 0
  %349 = vmatpush2.bf16.msra.mxu0 %v268
  %350 = vmatprep.subr.bf16.mxu0 0
  %351 = vmatpush2.bf16.msra.mxu0 %v267
  %352 = vmatprep.subr.bf16.mxu0 0
  %353 = vmatpush2.bf16.msra.mxu0 %v266
  %354 = vmatprep.mubr.bf16.mxu0 %v115
  %355 = vmatmul.mubr.bf16.gmra.mxu0 %v114
  %v356 = vpop.f32.mrf.mxu0
  %v357 = vadd.f32 0.0, %v356
  %v358 = vpop.f32.mrf.mxu0
  %v359 = vpop.f32.mrf.mxu0
  %v360 = vadd.f32 0.0, %v359
  %v361 = vpop.f32.mrf.mxu0
  %362 = vmatprep.mubr.bf16.mxu0 %v119
  %363 = vmatmul.mubr.bf16.gmra.mxu0 %v118
  %v364 = vpop.f32.mrf.mxu0
  %v365 = vadd.f32 0.0, %v364
  %v366 = vpop.f32.mrf.mxu0
  %v367 = vpop.f32.mrf.mxu0
  %v368 = vadd.f32 0.0, %v367
  %v369 = vpop.f32.mrf.mxu0
  %370 = vdwg.mxu0
  %371 = vmatprep.subr.bf16.mxu0 0
  %372 = vmatpush1.bf16.msra.mxu0 %v281
  %373 = vmatprep.subr.bf16.mxu0 0
  %374 = vmatpush1.bf16.msra.mxu0 %v280
  %375 = vmatprep.subr.bf16.mxu0 0
  %376 = vmatpush1.bf16.msra.mxu0 %v279
  %377 = vmatprep.subr.bf16.mxu0 0
  %378 = vmatpush1.bf16.msra.mxu0 %v278
  %379 = vmatprep.subr.bf16.mxu0 0
  %380 = vmatpush1.bf16.msra.mxu0 %v277
  %381 = vmatprep.subr.bf16.mxu0 0
  %382 = vmatpush1.bf16.msra.mxu0 %v276
  %383 = vmatprep.subr.bf16.mxu0 0
  %384 = vmatpush1.bf16.msra.mxu0 %v275
  %385 = vmatprep.subr.bf16.mxu0 0
  %386 = vmatpush1.bf16.msra.mxu0 %v274
  %387 = vmatprep.subr.bf16.mxu0 0
  %388 = vmatpush2.bf16.msra.mxu0 %v289
  %389 = vmatprep.subr.bf16.mxu0 0
  %390 = vmatpush2.bf16.msra.mxu0 %v288
  %391 = vmatprep.subr.bf16.mxu0 0
  %392 = vmatpush2.bf16.msra.mxu0 %v287
  %393 = vmatprep.subr.bf16.mxu0 0
  %394 = vmatpush2.bf16.msra.mxu0 %v286
  %395 = vmatprep.subr.bf16.mxu0 0
  %396 = vmatpush2.bf16.msra.mxu0 %v285
  %397 = vmatprep.subr.bf16.mxu0 0
  %398 = vmatpush2.bf16.msra.mxu0 %v284
  %399 = vmatprep.subr.bf16.mxu0 0
  %400 = vmatpush2.bf16.msra.mxu0 %v283
  %401 = vmatprep.subr.bf16.mxu0 0
  %402 = vmatpush2.bf16.msra.mxu0 %v282
  %403 = vmatprep.mubr.bf16.mxu0 %v117
  %404 = vmatmul.mubr.bf16.gmra.mxu0 %v116
  %v405 = vpop.f32.mrf.mxu0
  %v406 = vadd.f32 %v357, %v405
  %v407 = vpop.f32.mrf.mxu0
  %v408 = vpop.f32.mrf.mxu0
  %v409 = vadd.f32 %v360, %v408
  %v410 = vpop.f32.mrf.mxu0
  %411 = vmatprep.mubr.bf16.mxu0 %v121
  %412 = vmatmul.mubr.bf16.gmra.mxu0 %v120
  %v413 = vpop.f32.mrf.mxu0
  %v414 = vadd.f32 %v365, %v413
  %v415 = vpop.f32.mrf.mxu0
  %v416 = vpop.f32.mrf.mxu0
  %v417 = vadd.f32 %v368, %v416
  %v418 = vpop.f32.mrf.mxu0
  %419 = vdwg.mxu0
  %v420 = vadd.f32 %v406, %v409
  %v421 = vadd.f32 %v420, %v414
  %v422 = vadd.f32 %v421, %v417
  %v423 = vrot.slane %v422, 4
  %v424 = vadd.f32 %v422, %v423
  %v425 = vrot.slane %v424, 2
  %v426 = vadd.f32 %v424, %v425
  %v427 = vrot.slane %v426, 1
  %v428 = vadd.f32 %v426, %v427
  %v429 = vmul.f32 %v428, 0.03125
  %v430 = vmul.f32 %v406, %v406
  %v431 = vmul.f32 %v409, %v409
  %v432 = vmul.f32 %v414, %v414
  %v433 = vmul.f32 %v417, %v417
  %v434 = vadd.f32 %v430, %v431
  %v435 = vadd.f32 %v434, %v432
  %v436 = vadd.f32 %v435, %v433
  %v437 = vrot.slane %v436, 4
  %v438 = vadd.f32 %v436, %v437
  %v439 = vrot.slane %v438, 2
  %v440 = vadd.f32 %v438, %v439
  %v441 = vrot.slane %v440, 1
  %v442 = vadd.f32 %v440, %v441
  %v443 = vmul.f32 %v442, 0.03125
  %v444 = vmul.f32 %v429, %v429
  %v445 = vsub.f32 %v443, %v444
  %v446 = vmax.f32 %v445, 0.0
  %v447 = vld [vmem:[%s2] sm:$0x1]
  %v448 = vadd.f32 %v446, 1e-05
  %v449 = vrsqrt.pop %v448
  %v450 = vmul.f32 %v447, %v449
  %v451 = vld [vmem:[%s3] sm:$0x1]
  %v452 = vmul.f32 %v429, %v450
  %v453 = vsub.f32 %v451, %v452
  %v455 = vlaneseq
  %v456 = vshrl.u32 %v455, 7
  %v457 = vsub.s32 0, %v456
  %v458 = vrot.slane %v450, %v457
  %v460 = vmul.f32 %v406, %v458
  %v461 = vmul.f32 %v409, %v458
  %v462 = vmul.f32 %v414, %v458
  %v463 = vmul.f32 %v417, %v458
  %v465 = vlaneseq
  %v466 = vshrl.u32 %v465, 7
  %v467 = vsub.s32 0, %v466
  %v468 = vrot.slane %v453, %v467
  %v470 = vadd.f32 %v460, %v468
  %v471 = vadd.f32 %v461, %v468
  %v472 = vadd.f32 %v462, %v468
  %v473 = vadd.f32 %v463, %v468
  %v474 = vmul.f32 %v470, 0.2
  %v475 = vmul.f32 %v471, 0.2
  %v476 = vmul.f32 %v472, 0.2
  %v477 = vmul.f32 %v473, 0.2
  %v478 = vmax.f32 %v470, %v474
  %v479 = vmax.f32 %v471, %v475
  %v480 = vmax.f32 %v472, %v476
  %v481 = vmax.f32 %v473, %v477
  %v482 = vpack.c.bf16 %v479, %v478
  %v483 = vpack.c.bf16 %v481, %v480
  %v486 = vunpack.c.l.b16 %v482
  %v487 = vunpack.c.h.b16 %v482
  %v488 = vunpack.c.l.b16 %v483
  %v489 = vunpack.c.h.b16 %v483
  %v490 = vpack.c.b16 %v486, %v486
  %v491 = vpack.c.b16 %v487, %v487
  %v492 = vpack.c.b16 %v488, %v488
  %v493 = vpack.c.b16 %v489, %v489
  %498 = vst [vmem:[%s4] sm:$0xf] %v490
  %499 = vst [vmem:[%s4 + $0x4] sm:$0xf] %v491
  %500 = vst [vmem:[%s4 + $0x8] sm:$0xf] %v492
  %501 = vst [vmem:[%s4 + $0xc] sm:$0xf] %v493
  // Predicated region
  $region18: #{discriminator_forward.8} parent=0 // pred_check
    _
  $region19: #{discriminator_forward.8} parent=0 // pred_check_branch
    %503 = sbr.rel (0) target = $region21
  $region20: #{discriminator_forward.8} parent=0 // pred_region
    _
  $region21: #{discriminator_forward.8} parent=0 // pred_fallthru
    _
  // Predicated region
  $region22: #{discriminator_forward.8} parent=0 // pred_check
    _
  $region23: #{discriminator_forward.8} parent=0 // pred_check_branch
    %505 = sbr.rel (0) target = $region25
  $region24: #{discriminator_forward.8} parent=0 // pred_region
    _
  $region25: #{discriminator_forward.8} parent=0 // pred_fallthru
    _

// kernel: discriminator_forward.9
$region0: #{discriminator_forward.9}
  #allocation0 [shape = 'u32[]', space=smem, size = 0x4, offset = 0x4, fixed_abs, tag = 'smem constant byte address 0x4 - core index']
  #allocation1 [shape = 'u32[144,128]{1,0:T(1,128)}', space=vmem, size = 0x12000, scoped, tag = 'internal scratch']
  %s0 = inlined_call_operand.vmem [shape: bf16[16,1024], index: 0, kind: input, shape index: {}]
  %s1 = inlined_call_operand.vmem [shape: bf16[1024,128], index: 1, kind: input, shape index: {}]
  %s2 = inlined_call_operand.vmem [shape: f32[16,128], index: 2, kind: output, shape index: {}]
  %s3 = sld [smem:[#allocation0]]
  $region18: #{discriminator_forward.9} parent=0
    _
  %s5 = ssub.s32 1, %s3
  %s6 = scalar_select 0, %s5, %s3
  // Predicated region
  $region2: #{discriminator_forward.9} parent=0 // pred_check
    _
  $region3: #{discriminator_forward.9} parent=0 // pred_check_branch
    %8 = sbr.rel (0) target = $region5
  $region4: #{discriminator_forward.9} parent=0 // pred_region
    _
  $region5: #{discriminator_forward.9} parent=0 // pred_fallthru
    _
  // Predicated region
  $region6: #{discriminator_forward.9} parent=0 // pred_check
    _
  $region7: #{discriminator_forward.9} parent=0 // pred_check_branch
    %10 = sbr.rel (0) target = $region9
  $region8: #{discriminator_forward.9} parent=0 // pred_region
    _
  $region9: #{discriminator_forward.9} parent=0 // pred_fallthru
    _
  %v12 = vld [vmem:[%s0] sm:$0xff]
  %v13 = vld [vmem:[%s0 + $0x8] sm:$0xff]
  %v14 = vld [vmem:[%s0 + $0x10] sm:$0xff]
  %v15 = vld [vmem:[%s0 + $0x18] sm:$0xff]
  %v16 = vld [vmem:[%s0 + $0x20] sm:$0xff]
  %v17 = vld [vmem:[%s0 + $0x28] sm:$0xff]
  %v18 = vld [vmem:[%s0 + $0x30] sm:$0xff]
  %v19 = vld [vmem:[%s0 + $0x38] sm:$0xff]
  %v20 = vld [vmem:[%s1] sm:$0xf]
  %v21 = vld [vmem:[%s1 + $0x4] sm:$0xf]
  %v22 = vld [vmem:[%s1 + $0x8] sm:$0xf]
  %v23 = vld [vmem:[%s1 + $0xc] sm:$0xf]
  %v24 = vld [vmem:[%s1 + $0x10] sm:$0xf]
  %v25 = vld [vmem:[%s1 + $0x14] sm:$0xf]
  %v26 = vld [vmem:[%s1 + $0x18] sm:$0xf]
  %v27 = vld [vmem:[%s1 + $0x1c] sm:$0xf]
  %v28 = vld [vmem:[%s1 + $0x20] sm:$0xf]
  %v29 = vld [vmem:[%s1 + $0x24] sm:$0xf]
  %v30 = vld [vmem:[%s1 + $0x28] sm:$0xf]
  %v31 = vld [vmem:[%s1 + $0x2c] sm:$0xf]
  %v32 = vld [vmem:[%s1 + $0x30] sm:$0xf]
  %v33 = vld [vmem:[%s1 + $0x34] sm:$0xf]
  %v34 = vld [vmem:[%s1 + $0x38] sm:$0xf]
  %v35 = vld [vmem:[%s1 + $0x3c] sm:$0xf]
  %v36 = vld [vmem:[%s1 + $0x40] sm:$0xf]
  %v37 = vld [vmem:[%s1 + $0x44] sm:$0xf]
  %v38 = vld [vmem:[%s1 + $0x48] sm:$0xf]
  %v39 = vld [vmem:[%s1 + $0x4c] sm:$0xf]
  %v40 = vld [vmem:[%s1 + $0x50] sm:$0xf]
  %v41 = vld [vmem:[%s1 + $0x54] sm:$0xf]
  %v42 = vld [vmem:[%s1 + $0x58] sm:$0xf]
  %v43 = vld [vmem:[%s1 + $0x5c] sm:$0xf]
  %v44 = vld [vmem:[%s1 + $0x60] sm:$0xf]
  %v45 = vld [vmem:[%s1 + $0x64] sm:$0xf]
  %v46 = vld [vmem:[%s1 + $0x68] sm:$0xf]
  %v47 = vld [vmem:[%s1 + $0x6c] sm:$0xf]
  %v48 = vld [vmem:[%s1 + $0x70] sm:$0xf]
  %v49 = vld [vmem:[%s1 + $0x74] sm:$0xf]
  %v50 = vld [vmem:[%s1 + $0x78] sm:$0xf]
  %v51 = vld [vmem:[%s1 + $0x7c] sm:$0xf]
  %v52 = vld [vmem:[%s1 + $0x80] sm:$0xf]
  %v53 = vld [vmem:[%s1 + $0x84] sm:$0xf]
  %v54 = vld [vmem:[%s1 + $0x88] sm:$0xf]
  %v55 = vld [vmem:[%s1 + $0x8c] sm:$0xf]
  %v56 = vld [vmem:[%s1 + $0x90] sm:$0xf]
  %v57 = vld [vmem:[%s1 + $0x94] sm:$0xf]
  %v58 = vld [vmem:[%s1 + $0x98] sm:$0xf]
  %v59 = vld [vmem:[%s1 + $0x9c] sm:$0xf]
  %v60 = vld [vmem:[%s1 + $0xa0] sm:$0xf]
  %v61 = vld [vmem:[%s1 + $0xa4] sm:$0xf]
  %v62 = vld [vmem:[%s1 + $0xa8] sm:$0xf]
  %v63 = vld [vmem:[%s1 + $0xac] sm:$0xf]
  %v64 = vld [vmem:[%s1 + $0xb0] sm:$0xf]
  %v65 = vld [vmem:[%s1 + $0xb4] sm:$0xf]
  %v66 = vld [vmem:[%s1 + $0xb8] sm:$0xf]
  %v67 = vld [vmem:[%s1 + $0xbc] sm:$0xf]
  %v68 = vld [vmem:[%s1 + $0xc0] sm:$0xf]
  %v69 = vld [vmem:[%s1 + $0xc4] sm:$0xf]
  %v70 = vld [vmem:[%s1 + $0xc8] sm:$0xf]
  %v71 = vld [vmem:[%s1 + $0xcc] sm:$0xf]
  %v72 = vld [vmem:[%s1 + $0xd0] sm:$0xf]
  %v73 = vld [vmem:[%s1 + $0xd4] sm:$0xf]
  %v74 = vld [vmem:[%s1 + $0xd8] sm:$0xf]
  %v75 = vld [vmem:[%s1 + $0xdc] sm:$0xf]
  %v76 = vld [vmem:[%s1 + $0xe0] sm:$0xf]
  %v77 = vld [vmem:[%s1 + $0xe4] sm:$0xf]
  %v78 = vld [vmem:[%s1 + $0xe8] sm:$0xf]
  %v79 = vld [vmem:[%s1 + $0xec] sm:$0xf]
  %v80 = vld [vmem:[%s1 + $0xf0] sm:$0xf]
  %v81 = vld [vmem:[%s1 + $0xf4] sm:$0xf]
  %v82 = vld [vmem:[%s1 + $0xf8] sm:$0xf]
  %v83 = vld [vmem:[%s1 + $0xfc] sm:$0xf]
  %v84 = vld [vmem:[%s1 + $0x100] sm:$0xf]
  %v85 = vld [vmem:[%s1 + $0x104] sm:$0xf]
  %v86 = vld [vmem:[%s1 + $0x108] sm:$0xf]
  %v87 = vld [vmem:[%s1 + $0x10c] sm:$0xf]
  %v88 = vld [vmem:[%s1 + $0x110] sm:$0xf]
  %v89 = vld [vmem:[%s1 + $0x114] sm:$0xf]
  %v90 = vld [vmem:[%s1 + $0x118] sm:$0xf]
  %v91 = vld [vmem:[%s1 + $0x11c] sm:$0xf]
  %v92 = vld [vmem:[%s1 + $0x120] sm:$0xf]
  %v93 = vld [vmem:[%s1 + $0x124] sm:$0xf]
  %v94 = vld [vmem:[%s1 + $0x128] sm:$0xf]
  %v95 = vld [vmem:[%s1 + $0x12c] sm:$0xf]
  %v96 = vld [vmem:[%s1 + $0x130] sm:$0xf]
  %v97 = vld [vmem:[%s1 + $0x134] sm:$0xf]
  %v98 = vld [vmem:[%s1 + $0x138] sm:$0xf]
  %v99 = vld [vmem:[%s1 + $0x13c] sm:$0xf]
  %v100 = vld [vmem:[%s1 + $0x140] sm:$0xf]
  %v101 = vld [vmem:[%s1 + $0x144] sm:$0xf]
  %v102 = vld [vmem:[%s1 + $0x148] sm:$0xf]
  %v103 = vld [vmem:[%s1 + $0x14c] sm:$0xf]
  %v104 = vld [vmem:[%s1 + $0x150] sm:$0xf]
  %v105 = vld [vmem:[%s1 + $0x154] sm:$0xf]
  %v106 = vld [vmem:[%s1 + $0x158] sm:$0xf]
  %v107 = vld [vmem:[%s1 + $0x15c] sm:$0xf]
  %v108 = vld [vmem:[%s1 + $0x160] sm:$0xf]
  %v109 = vld [vmem:[%s1 + $0x164] sm:$0xf]
  %v110 = vld [vmem:[%s1 + $0x168] sm:$0xf]
  %v111 = vld [vmem:[%s1 + $0x16c] sm:$0xf]
  %v112 = vld [vmem:[%s1 + $0x170] sm:$0xf]
  %v113 = vld [vmem:[%s1 + $0x174] sm:$0xf]
  %v114 = vld [vmem:[%s1 + $0x178] sm:$0xf]
  %v115 = vld [vmem:[%s1 + $0x17c] sm:$0xf]
  %v116 = vld [vmem:[%s1 + $0x180] sm:$0xf]
  %v117 = vld [vmem:[%s1 + $0x184] sm:$0xf]
  %v118 = vld [vmem:[%s1 + $0x188] sm:$0xf]
  %v119 = vld [vmem:[%s1 + $0x18c] sm:$0xf]
  %v120 = vld [vmem:[%s1 + $0x190] sm:$0xf]
  %v121 = vld [vmem:[%s1 + $0x194] sm:$0xf]
  %v122 = vld [vmem:[%s1 + $0x198] sm:$0xf]
  %v123 = vld [vmem:[%s1 + $0x19c] sm:$0xf]
  %v124 = vld [vmem:[%s1 + $0x1a0] sm:$0xf]
  %v125 = vld [vmem:[%s1 + $0x1a4] sm:$0xf]
  %v126 = vld [vmem:[%s1 + $0x1a8] sm:$0xf]
  %v127 = vld [vmem:[%s1 + $0x1ac] sm:$0xf]
  %v128 = vld [vmem:[%s1 + $0x1b0] sm:$0xf]
  %v129 = vld [vmem:[%s1 + $0x1b4] sm:$0xf]
  %v130 = vld [vmem:[%s1 + $0x1b8] sm:$0xf]
  %v131 = vld [vmem:[%s1 + $0x1bc] sm:$0xf]
  %v132 = vld [vmem:[%s1 + $0x1c0] sm:$0xf]
  %v133 = vld [vmem:[%s1 + $0x1c4] sm:$0xf]
  %v134 = vld [vmem:[%s1 + $0x1c8] sm:$0xf]
  %v135 = vld [vmem:[%s1 + $0x1cc] sm:$0xf]
  %v136 = vld [vmem:[%s1 + $0x1d0] sm:$0xf]
  %v137 = vld [vmem:[%s1 + $0x1d4] sm:$0xf]
  %v138 = vld [vmem:[%s1 + $0x1d8] sm:$0xf]
  %v139 = vld [vmem:[%s1 + $0x1dc] sm:$0xf]
  %v140 = vld [vmem:[%s1 + $0x1e0] sm:$0xf]
  %v141 = vld [vmem:[%s1 + $0x1e4] sm:$0xf]
  %v142 = vld [vmem:[%s1 + $0x1e8] sm:$0xf]
  %v143 = vld [vmem:[%s1 + $0x1ec] sm:$0xf]
  %v144 = vld [vmem:[%s1 + $0x1f0] sm:$0xf]
  %v145 = vld [vmem:[%s1 + $0x1f4] sm:$0xf]
  %v146 = vld [vmem:[%s1 + $0x1f8] sm:$0xf]
  %v147 = vld [vmem:[%s1 + $0x1fc] sm:$0xf]
  %v156 = vunpack.c.l.b16 %v12
  %v157 = vunpack.c.h.b16 %v12
  %v158 = vunpack.c.l.b16 %v13
  %v159 = vunpack.c.h.b16 %v13
  %v160 = vunpack.c.l.b16 %v14
  %v161 = vunpack.c.h.b16 %v14
  %v162 = vunpack.c.l.b16 %v15
  %v163 = vunpack.c.h.b16 %v15
  %v164 = vunpack.c.l.b16 %v16
  %v165 = vunpack.c.h.b16 %v16
  %v166 = vunpack.c.l.b16 %v17
  %v167 = vunpack.c.h.b16 %v17
  %v168 = vunpack.c.l.b16 %v18
  %v169 = vunpack.c.h.b16 %v18
  %v170 = vunpack.c.l.b16 %v19
  %v171 = vunpack.c.h.b16 %v19
  %v172 = vpack.c.b16 %v164, %v156
  %v173 = vpack.c.b16 %v165, %v157
  %v174 = vpack.c.b16 %v166, %v158
  %v175 = vpack.c.b16 %v167, %v159
  %v176 = vpack.c.b16 %v168, %v160
  %v177 = vpack.c.b16 %v169, %v161
  %v178 = vpack.c.b16 %v170, %v162
  %v179 = vpack.c.b16 %v171, %v163
  %v316 = vunpack.c.l.b16 %v20
  %v317 = vunpack.c.l.b16 %v21
  %v318 = vunpack.c.l.b16 %v22
  %v319 = vunpack.c.l.b16 %v23
  %v320 = vunpack.c.l.b16 %v24
  %v321 = vunpack.c.l.b16 %v25
  %v322 = vunpack.c.l.b16 %v26
  %v323 = vunpack.c.l.b16 %v27
  %v324 = vunpack.c.l.b16 %v28
  %v325 = vunpack.c.l.b16 %v29
  %v326 = vunpack.c.l.b16 %v30
  %v327 = vunpack.c.l.b16 %v31
  %v328 = vunpack.c.l.b16 %v32
  %v329 = vunpack.c.l.b16 %v33
  %v330 = vunpack.c.l.b16 %v34
  %v331 = vunpack.c.l.b16 %v35
  %v332 = vunpack.c.l.b16 %v36
  %v333 = vunpack.c.l.b16 %v37
  %v334 = vunpack.c.l.b16 %v38
  %v335 = vunpack.c.l.b16 %v39
  %v336 = vunpack.c.l.b16 %v40
  %v337 = vunpack.c.l.b16 %v41
  %v338 = vunpack.c.l.b16 %v42
  %v339 = vunpack.c.l.b16 %v43
  %v340 = vunpack.c.l.b16 %v44
  %v341 = vunpack.c.l.b16 %v45
  %v342 = vunpack.c.l.b16 %v46
  %v343 = vunpack.c.l.b16 %v47
  %v344 = vunpack.c.l.b16 %v48
  %v345 = vunpack.c.l.b16 %v49
  %v346 = vunpack.c.l.b16 %v50
  %v347 = vunpack.c.l.b16 %v51
  %v348 = vunpack.c.l.b16 %v52
  %v349 = vunpack.c.l.b16 %v53
  %v350 = vunpack.c.l.b16 %v54
  %v351 = vunpack.c.l.b16 %v55
  %v352 = vunpack.c.l.b16 %v56
  %v353 = vunpack.c.l.b16 %v57
  %v354 = vunpack.c.l.b16 %v58
  %v355 = vunpack.c.l.b16 %v59
  %v356 = vunpack.c.l.b16 %v60
  %v357 = vunpack.c.l.b16 %v61
  %v358 = vunpack.c.l.b16 %v62
  %v359 = vunpack.c.l.b16 %v63
  %v360 = vunpack.c.l.b16 %v64
  %v361 = vunpack.c.l.b16 %v65
  %v362 = vunpack.c.l.b16 %v66
  %v363 = vunpack.c.l.b16 %v67
  %v364 = vunpack.c.l.b16 %v68
  %v365 = vunpack.c.l.b16 %v69
  %v366 = vunpack.c.l.b16 %v70
  %v367 = vunpack.c.l.b16 %v71
  %v368 = vunpack.c.l.b16 %v72
  %v369 = vunpack.c.l.b16 %v73
  %v370 = vunpack.c.l.b16 %v74
  %v371 = vunpack.c.l.b16 %v75
  %v372 = vunpack.c.l.b16 %v76
  %v373 = vunpack.c.l.b16 %v77
  %v374 = vunpack.c.l.b16 %v78
  %v375 = vunpack.c.l.b16 %v79
  %v376 = vunpack.c.l.b16 %v80
  %v377 = vunpack.c.l.b16 %v81
  %v378 = vunpack.c.l.b16 %v82
  %v379 = vunpack.c.l.b16 %v83
  %v380 = vunpack.c.l.b16 %v84
  %v381 = vunpack.c.l.b16 %v85
  %v382 = vunpack.c.l.b16 %v86
  %v383 = vunpack.c.l.b16 %v87
  %v384 = vunpack.c.l.b16 %v88
  %v385 = vunpack.c.l.b16 %v89
  %v386 = vunpack.c.l.b16 %v90
  %v387 = vunpack.c.l.b16 %v91
  %v388 = vunpack.c.l.b16 %v92
  %v389 = vunpack.c.l.b16 %v93
  %v390 = vunpack.c.l.b16 %v94
  %v391 = vunpack.c.l.b16 %v95
  %v392 = vunpack.c.l.b16 %v96
  %v393 = vunpack.c.l.b16 %v97
  %v394 = vunpack.c.l.b16 %v98
  %v395 = vunpack.c.l.b16 %v99
  %v396 = vunpack.c.l.b16 %v100
  %v397 = vunpack.c.l.b16 %v101
  %v398 = vunpack.c.l.b16 %v102
  %v399 = vunpack.c.l.b16 %v103
  %v400 = vunpack.c.l.b16 %v104
  %v401 = vunpack.c.l.b16 %v105
  %v402 = vunpack.c.l.b16 %v106
  %v403 = vunpack.c.l.b16 %v107
  %v404 = vunpack.c.l.b16 %v108
  %v405 = vunpack.c.l.b16 %v109
  %v406 = vunpack.c.l.b16 %v110
  %v407 = vunpack.c.l.b16 %v111
  %v408 = vunpack.c.l.b16 %v112
  %v409 = vunpack.c.l.b16 %v113
  %v410 = vunpack.c.l.b16 %v114
  %v411 = vunpack.c.l.b16 %v115
  %v412 = vunpack.c.l.b16 %v116
  %v413 = vunpack.c.l.b16 %v117
  %v414 = vunpack.c.l.b16 %v118
  %v415 = vunpack.c.l.b16 %v119
  %v416 = vunpack.c.l.b16 %v120
  %v417 = vunpack.c.l.b16 %v121
  %v418 = vunpack.c.l.b16 %v122
  %v419 = vunpack.c.l.b16 %v123
  %v420 = vunpack.c.l.b16 %v124
  %v421 = vunpack.c.l.b16 %v125
  %v422 = vunpack.c.l.b16 %v126
  %v423 = vunpack.c.l.b16 %v127
  %v424 = vunpack.c.l.b16 %v128
  %v425 = vunpack.c.l.b16 %v129
  %v426 = vunpack.c.l.b16 %v130
  %v427 = vunpack.c.l.b16 %v131
  %v428 = vunpack.c.l.b16 %v132
  %v429 = vunpack.c.l.b16 %v133
  %v430 = vunpack.c.l.b16 %v134
  %v431 = vunpack.c.l.b16 %v135
  %v432 = vunpack.c.l.b16 %v136
  %v433 = vunpack.c.l.b16 %v137
  %v434 = vunpack.c.l.b16 %v138
  %v435 = vunpack.c.l.b16 %v139
  %v436 = vunpack.c.l.b16 %v140
  %v437 = vunpack.c.l.b16 %v141
  %v438 = vunpack.c.l.b16 %v142
  %v439 = vunpack.c.l.b16 %v143
  %v440 = vunpack.c.l.b16 %v144
  %v441 = vunpack.c.l.b16 %v145
  %v442 = vunpack.c.l.b16 %v146
  %v443 = vunpack.c.l.b16 %v147
  %v444 = vpack.c.b16 %v317, %v316
  %v445 = vpack.c.b16 %v319, %v318
  %v446 = vpack.c.b16 %v321, %v320
  %v447 = vpack.c.b16 %v323, %v322
  %v448 = vpack.c.b16 %v325, %v324
  %v449 = vpack.c.b16 %v327, %v326
  %v450 = vpack.c.b16 %v329, %v328
  %v451 = vpack.c.b16 %v331, %v330
  %v452 = vpack.c.b16 %v333, %v332
  %v453 = vpack.c.b16 %v335, %v334
  %v454 = vpack.c.b16 %v337, %v336
  %v455 = vpack.c.b16 %v339, %v338
  %v456 = vpack.c.b16 %v341, %v340
  %v457 = vpack.c.b16 %v343, %v342
  %v458 = vpack.c.b16 %v345, %v344
  %v459 = vpack.c.b16 %v347, %v346
  %v460 = vpack.c.b16 %v349, %v348
  %v461 = vpack.c.b16 %v351, %v350
  %v462 = vpack.c.b16 %v353, %v352
  %v463 = vpack.c.b16 %v355, %v354
  %v464 = vpack.c.b16 %v357, %v356
  %v465 = vpack.c.b16 %v359, %v358
  %v466 = vpack.c.b16 %v361, %v360
  %v467 = vpack.c.b16 %v363, %v362
  %v468 = vpack.c.b16 %v365, %v364
  %v469 = vpack.c.b16 %v367, %v366
  %v470 = vpack.c.b16 %v369, %v368
  %v471 = vpack.c.b16 %v371, %v370
  %v472 = vpack.c.b16 %v373, %v372
  %v473 = vpack.c.b16 %v375, %v374
  %v474 = vpack.c.b16 %v377, %v376
  %v475 = vpack.c.b16 %v379, %v378
  %v476 = vpack.c.b16 %v381, %v380
  %v477 = vpack.c.b16 %v383, %v382
  %v478 = vpack.c.b16 %v385, %v384
  %v479 = vpack.c.b16 %v387, %v386
  %v480 = vpack.c.b16 %v389, %v388
  %v481 = vpack.c.b16 %v391, %v390
  %v482 = vpack.c.b16 %v393, %v392
  %v483 = vpack.c.b16 %v395, %v394
  %v484 = vpack.c.b16 %v397, %v396
  %v485 = vpack.c.b16 %v399, %v398
  %v486 = vpack.c.b16 %v401, %v400
  %v487 = vpack.c.b16 %v403, %v402
  %v488 = vpack.c.b16 %v405, %v404
  %v489 = vpack.c.b16 %v407, %v406
  %v490 = vpack.c.b16 %v409, %v408
  %v491 = vpack.c.b16 %v411, %v410
  %v492 = vpack.c.b16 %v413, %v412
  %v493 = vpack.c.b16 %v415, %v414
  %v494 = vpack.c.b16 %v417, %v416
  %v495 = vpack.c.b16 %v419, %v418
  %v496 = vpack.c.b16 %v421, %v420
  %v497 = vpack.c.b16 %v423, %v422
  %v498 = vpack.c.b16 %v425, %v424
  %v499 = vpack.c.b16 %v427, %v426
  %v500 = vpack.c.b16 %v429, %v428
  %v501 = vpack.c.b16 %v431, %v430
  %v502 = vpack.c.b16 %v433, %v432
  %v503 = vpack.c.b16 %v435, %v434
  %v504 = vpack.c.b16 %v437, %v436
  %v505 = vpack.c.b16 %v439, %v438
  %v506 = vpack.c.b16 %v441, %v440
  %v507 = vpack.c.b16 %v443, %v442
  %572 = vmatprep.subr.bf16.mxu0 0
  %573 = vmatpush1.bf16.msra.mxu0 %v451
  %574 = vmatprep.subr.bf16.mxu0 0
  %575 = vmatpush1.bf16.msra.mxu0 %v450
  %576 = vmatprep.subr.bf16.mxu0 0
  %577 = vmatpush1.bf16.msra.mxu0 %v449
  %578 = vmatprep.subr.bf16.mxu0 0
  %579 = vmatpush1.bf16.msra.mxu0 %v448
  %580 = vmatprep.subr.bf16.mxu0 0
  %581 = vmatpush1.bf16.msra.mxu0 %v447
  %582 = vmatprep.subr.bf16.mxu0 0
  %583 = vmatpush1.bf16.msra.mxu0 %v446
  %584 = vmatprep.subr.bf16.mxu0 0
  %585 = vmatpush1.bf16.msra.mxu0 %v445
  %586 = vmatprep.subr.bf16.mxu0 0
  %587 = vmatpush1.bf16.msra.mxu0 %v444
  %588 = vmatprep.subr.bf16.mxu0 0
  %589 = vmatpush2.bf16.msra.mxu0 %v459
  %590 = vmatprep.subr.bf16.mxu0 0
  %591 = vmatpush2.bf16.msra.mxu0 %v458
  %592 = vmatprep.subr.bf16.mxu0 0
  %593 = vmatpush2.bf16.msra.mxu0 %v457
  %594 = vmatprep.subr.bf16.mxu0 0
  %595 = vmatpush2.bf16.msra.mxu0 %v456
  %596 = vmatprep.subr.bf16.mxu0 0
  %597 = vmatpush2.bf16.msra.mxu0 %v455
  %598 = vmatprep.subr.bf16.mxu0 0
  %599 = vmatpush2.bf16.msra.mxu0 %v454
  %600 = vmatprep.subr.bf16.mxu0 0
  %601 = vmatpush2.bf16.msra.mxu0 %v453
  %602 = vmatprep.subr.bf16.mxu0 0
  %603 = vmatpush2.bf16.msra.mxu0 %v452
  %604 = vmatprep.mubr.bf16.mxu0 %v173
  %605 = vmatmul.mubr.bf16.gmra.mxu0 %v172
  %v606 = vpop.f32.mrf.mxu0
  %v607 = vadd.f32 0.0, %v606
  %v608 = vpop.f32.mrf.mxu0
  %v609 = vpop.f32.mrf.mxu0
  %v610 = vadd.f32 0.0, %v609
  %v611 = vpop.f32.mrf.mxu0
  %612 = vdwg.mxu0
  %613 = vmatprep.subr.bf16.mxu0 0
  %614 = vmatpush1.bf16.msra.mxu0 %v467
  %615 = vmatprep.subr.bf16.mxu0 0
  %616 = vmatpush1.bf16.msra.mxu0 %v466
  %617 = vmatprep.subr.bf16.mxu0 0
  %618 = vmatpush1.bf16.msra.mxu0 %v465
  %619 = vmatprep.subr.bf16.mxu0 0
  %620 = vmatpush1.bf16.msra.mxu0 %v464
  %621 = vmatprep.subr.bf16.mxu0 0
  %622 = vmatpush1.bf16.msra.mxu0 %v463
  %623 = vmatprep.subr.bf16.mxu0 0
  %624 = vmatpush1.bf16.msra.mxu0 %v462
  %625 = vmatprep.subr.bf16.mxu0 0
  %626 = vmatpush1.bf16.msra.mxu0 %v461
  %627 = vmatprep.subr.bf16.mxu0 0
  %628 = vmatpush1.bf16.msra.mxu0 %v460
  %629 = vmatprep.subr.bf16.mxu0 0
  %630 = vmatpush2.bf16.msra.mxu0 %v475
  %631 = vmatprep.subr.bf16.mxu0 0
  %632 = vmatpush2.bf16.msra.mxu0 %v474
  %633 = vmatprep.subr.bf16.mxu0 0
  %634 = vmatpush2.bf16.msra.mxu0 %v473
  %635 = vmatprep.subr.bf16.mxu0 0
  %636 = vmatpush2.bf16.msra.mxu0 %v472
  %637 = vmatprep.subr.bf16.mxu0 0
  %638 = vmatpush2.bf16.msra.mxu0 %v471
  %639 = vmatprep.subr.bf16.mxu0 0
  %640 = vmatpush2.bf16.msra.mxu0 %v470
  %641 = vmatprep.subr.bf16.mxu0 0
  %642 = vmatpush2.bf16.msra.mxu0 %v469
  %643 = vmatprep.subr.bf16.mxu0 0
  %644 = vmatpush2.bf16.msra.mxu0 %v468
  %645 = vmatprep.mubr.bf16.mxu0 %v175
  %646 = vmatmul.mubr.bf16.gmra.mxu0 %v174
  %v647 = vpop.f32.mrf.mxu0
  %v648 = vadd.f32 %v607, %v647
  %v649 = vpop.f32.mrf.mxu0
  %v650 = vpop.f32.mrf.mxu0
  %v651 = vadd.f32 %v610, %v650
  %v652 = vpop.f32.mrf.mxu0
  %653 = vdwg.mxu0
  %654 = vmatprep.subr.bf16.mxu0 0
  %655 = vmatpush1.bf16.msra.mxu0 %v483
  %656 = vmatprep.subr.bf16.mxu0 0
  %657 = vmatpush1.bf16.msra.mxu0 %v482
  %658 = vmatprep.subr.bf16.mxu0 0
  %659 = vmatpush1.bf16.msra.mxu0 %v481
  %660 = vmatprep.subr.bf16.mxu0 0
  %661 = vmatpush1.bf16.msra.mxu0 %v480
  %662 = vmatprep.subr.bf16.mxu0 0
  %663 = vmatpush1.bf16.msra.mxu0 %v479
  %664 = vmatprep.subr.bf16.mxu0 0
  %665 = vmatpush1.bf16.msra.mxu0 %v478
  %666 = vmatprep.subr.bf16.mxu0 0
  %667 = vmatpush1.bf16.msra.mxu0 %v477
  %668 = vmatprep.subr.bf16.mxu0 0
  %669 = vmatpush1.bf16.msra.mxu0 %v476
  %670 = vmatprep.subr.bf16.mxu0 0
  %671 = vmatpush2.bf16.msra.mxu0 %v491
  %672 = vmatprep.subr.bf16.mxu0 0
  %673 = vmatpush2.bf16.msra.mxu0 %v490
  %674 = vmatprep.subr.bf16.mxu0 0
  %675 = vmatpush2.bf16.msra.mxu0 %v489
  %676 = vmatprep.subr.bf16.mxu0 0
  %677 = vmatpush2.bf16.msra.mxu0 %v488
  %678 = vmatprep.subr.bf16.mxu0 0
  %679 = vmatpush2.bf16.msra.mxu0 %v487
  %680 = vmatprep.subr.bf16.mxu0 0
  %681 = vmatpush2.bf16.msra.mxu0 %v486
  %682 = vmatprep.subr.bf16.mxu0 0
  %683 = vmatpush2.bf16.msra.mxu0 %v485
  %684 = vmatprep.subr.bf16.mxu0 0
  %685 = vmatpush2.bf16.msra.mxu0 %v484
  %686 = vmatprep.mubr.bf16.mxu0 %v177
  %687 = vmatmul.mubr.bf16.gmra.mxu0 %v176
  %v688 = vpop.f32.mrf.mxu0
  %v689 = vadd.f32 %v648, %v688
  %v690 = vpop.f32.mrf.mxu0
  %v691 = vpop.f32.mrf.mxu0
  %v692 = vadd.f32 %v651, %v691
  %v693 = vpop.f32.mrf.mxu0
  %694 = vdwg.mxu0
  %695 = vmatprep.subr.bf16.mxu0 0
  %696 = vmatpush1.bf16.msra.mxu0 %v499
  %697 = vmatprep.subr.bf16.mxu0 0
  %698 = vmatpush1.bf16.msra.mxu0 %v498
  %699 = vmatprep.subr.bf16.mxu0 0
  %700 = vmatpush1.bf16.msra.mxu0 %v497
  %701 = vmatprep.subr.bf16.mxu0 0
  %702 = vmatpush1.bf16.msra.mxu0 %v496
  %703 = vmatprep.subr.bf16.mxu0 0
  %704 = vmatpush1.bf16.msra.mxu0 %v495
  %705 = vmatprep.subr.bf16.mxu0 0
  %706 = vmatpush1.bf16.msra.mxu0 %v494
  %707 = vmatprep.subr.bf16.mxu0 0
  %708 = vmatpush1.bf16.msra.mxu0 %v493
  %709 = vmatprep.subr.bf16.mxu0 0
  %710 = vmatpush1.bf16.msra.mxu0 %v492
  %711 = vmatprep.subr.bf16.mxu0 0
  %712 = vmatpush2.bf16.msra.mxu0 %v507
  %713 = vmatprep.subr.bf16.mxu0 0
  %714 = vmatpush2.bf16.msra.mxu0 %v506
  %715 = vmatprep.subr.bf16.mxu0 0
  %716 = vmatpush2.bf16.msra.mxu0 %v505
  %717 = vmatprep.subr.bf16.mxu0 0
  %718 = vmatpush2.bf16.msra.mxu0 %v504
  %719 = vmatprep.subr.bf16.mxu0 0
  %720 = vmatpush2.bf16.msra.mxu0 %v503
  %721 = vmatprep.subr.bf16.mxu0 0
  %722 = vmatpush2.bf16.msra.mxu0 %v502
  %723 = vmatprep.subr.bf16.mxu0 0
  %724 = vmatpush2.bf16.msra.mxu0 %v501
  %725 = vmatprep.subr.bf16.mxu0 0
  %726 = vmatpush2.bf16.msra.mxu0 %v500
  %727 = vmatprep.mubr.bf16.mxu0 %v179
  %728 = vmatmul.mubr.bf16.gmra.mxu0 %v178
  %v729 = vpop.f32.mrf.mxu0
  %v730 = vadd.f32 %v689, %v729
  %v731 = vpop.f32.mrf.mxu0
  %v732 = vpop.f32.mrf.mxu0
  %v733 = vadd.f32 %v692, %v732
  %v734 = vpop.f32.mrf.mxu0
  %735 = vdwg.mxu0
  %v736 = vsub.f32 0.0, %v730
  %v737 = vsub.f32 0.0, %v733
  %v738 = vmul.f32 %v736, 1.442695
  %v739 = vpow.pop %v738
  %v740 = vmul.f32 %v737, 1.442695
  %v741 = vpow.pop %v740
  %v742 = vadd.f32 %v739, 1.0
  %v743 = vadd.f32 %v741, 1.0
  %v744 = vrcp.pop %v742
  %v745 = vmul.f32 1.0, %v744
  %v746 = vrcp.pop %v743
  %v747 = vmul.f32 1.0, %v746
  %748 = vst [vmem:[%s2] sm:$0xff] %v745
  %749 = vst [vmem:[%s2 + $0x8] sm:$0xff] %v747
  // Predicated region
  $region10: #{discriminator_forward.9} parent=0 // pred_check
    _
  $region11: #{discriminator_forward.9} parent=0 // pred_check_branch
    %751 = sbr.rel (0) target = $region13
  $region12: #{discriminator_forward.9} parent=0 // pred_region
    _
  $region13: #{discriminator_forward.9} parent=0 // pred_fallthru
    _
  // Predicated region
  $region14: #{discriminator_forward.9} parent=0 // pred_check
    _
  $region15: #{discriminator_forward.9} parent=0 // pred_check_branch
    %753 = sbr.rel (0) target = $region17
  $region16: #{discriminator_forward.9} parent=0 // pred_region
    _
  $region17: #{discriminator_forward.9} parent=0 // pred_fallthru
    _

</llo_original>
